<compile_context>
chip_gen: v6e
topology: v6e:2x2x1
jax: 0.10.0
libtpu: 0.0.40
codegen_flags: <defaults>
</compile_context>

<pallas_src>
import functools

import jax
import jax.numpy as jnp
from jax.experimental import pallas as pl
from jax.experimental.pallas import tpu as pltpu

HIDDEN = 256          # LSTM hidden size
INPUT_SIZE = 8        # sequence length fed to the net (state dim)
N_ACTIONS = 3


def actor_net_kernel(
    bf16_gates,            # python bool bound via functools.partial
    x_ref,                 # (TB, 8)    raw input block
    w1k0_ref, w1k1_ref,    # (1, 32)    conv1 taps (kernel_size=2, in_ch=1)
    b1_ref,                # (1, 32)    conv1 bias
    s1_ref, sh1_ref,       # (1, 32)    BN1 folded scale / shift (eval)
    w2_ref,                # (64, 64)   conv2 taps stacked [k0; k1], bf16
    b2_ref,                # (1, 64)    conv2 bias
    s2_ref, sh2_ref,       # (1, 64)    BN2 folded scale / shift (eval)
    wih_ref,               # (64, 4H)   LSTM input weights, bf16, gate-prescaled
    whh_ref,               # (H, 4H)    LSTM hidden weights, bf16, gate-prescaled
    bl_ref,                # (1, 4H)    LSTM bias (b_ih + b_hh), f32, gate-prescaled
    gps_ref, gsh_ref,      # (1, 4H)    gate post-scale / post-shift (sigmoid recovery)
    wfc1_ref, bfc1_ref,    # (H, 128) bf16, (1, 128) f32
    wfc2_ref, bfc2_ref,    # (128, 3) f32, (1, 3) f32
    out_ref,               # (TB, 3)
):
    f32 = jnp.float32
    bf16 = jnp.bfloat16
    gate_dt = bf16 if bf16_gates else f32   # bf16 EUP path on v6e/v7x only

    x = x_ref[...]                          # (TB, 8)
    TB = x.shape[0]
    H = whh_ref.shape[0]

    # ---- Conv1 (in=1, out=32, k=2, pad=1) -> ReLU -> BN1 (folded, eval) ----
    # Built time-major: one (TB, 32) slab per conv1 output position p = 0..8,
    # plus two all-zero slabs that are conv2's own zero padding.  This keeps
    # time on the leading/outer axis so every later time slice is an aligned
    # TB-row block view (no relayout copies).
    w1k0 = w1k0_ref[...]
    w1k1 = w1k1_ref[...]
    b1 = b1_ref[...]
    s1 = s1_ref[...]
    sh1 = sh1_ref[...]
    zero_slab = jnp.zeros((TB, 32), f32)
    slabs = [zero_slab]                     # conv2 left zero-pad row
    for p in range(9):                      # conv1 output positions 0..8
        v = b1
        if p >= 1:
            v = v + x[:, p - 1:p] * w1k0    # tap k=0 reads x_pad[p]   = x[p-1]
        if p <= 7:
            v = v + x[:, p:p + 1] * w1k1    # tap k=1 reads x_pad[p+1] = x[p]
        slabs.append(jnp.maximum(v, 0.0) * s1 + sh1)   # ReLU then BN1 (torch order)
    slabs.append(zero_slab)                 # conv2 right zero-pad row
    y1p = jnp.concatenate(slabs, axis=0)    # (11*TB, 32), time-major

    # ---- Conv2 (in=32, out=64, k=2, pad=1): single stacked-tap matmul ----
    # row t of the output uses taps (y1p[t], y1p[t+1]); both slices below are
    # sublane-aligned TB-multiples (free views), one lane concat builds K=64.
    z = jnp.concatenate([y1p[0:10 * TB, :], y1p[TB:11 * TB, :]], axis=1)  # (10*TB, 64)
    a = jnp.dot(z.astype(bf16), w2_ref[...],
                preferred_element_type=f32) + b2_ref[...]                 # (10*TB, 64)
    a = jnp.maximum(a, 0.0) * s2_ref[...] + sh2_ref[...]                  # ReLU then BN2

    # ---- MaxPool1d(2, 2) over time: aligned TB-row block maxima ----
    pooled = jnp.concatenate(
        [jnp.maximum(a[(2 * t) * TB:(2 * t + 1) * TB, :],
                     a[(2 * t + 1) * TB:(2 * t + 2) * TB, :])
         for t in range(5)],
        axis=0)                                                           # (5*TB, 64)

    # TODO(synk): Dropout(p=0.2) is identity here (inference); training-mode
    # dropout / batch-statistics BatchNorm are not reproduced.

    # ---- LSTM: input projection hoisted out of the recurrence ----
    xg = jnp.dot(pooled.astype(bf16), wih_ref[...],
                 preferred_element_type=f32) + bl_ref[...]                # (5*TB, 4H) time-major
    whh = whh_ref[...]
    gps = gps_ref[...]
    gsh = gsh_ref[...]

    h = None
    c = None
    for t in range(5):                      # torch gate order: i, f, g, o
        g_lin = xg[t * TB:(t + 1) * TB, :]  # aligned TB-row block view
        if t > 0:
            g_lin = g_lin + jnp.dot(h.astype(bf16), whh,
                                    preferred_element_type=f32)
        # One full-width tanh per step.  The 0.5 sigmoid pre-scale is folded
        # into wih/whh/bl on the host; sigmoid = 0.5*tanh(0.5 z) + 0.5 is
        # recovered by the (1,4H) post scale/shift.  tanh runs in bf16 on
        # v6e/v7x (gate_dt); all state math stays f32.
        act = jnp.tanh(g_lin.astype(gate_dt)).astype(f32) * gps + gsh     # (TB, 4H)
        i_g = act[:, 0:H]
        g_g = act[:, 2 * H:3 * H]
        o_g = act[:, 3 * H:4 * H]
        if t > 0:
            c = act[:, H:2 * H] * c + i_g * g_g
        else:
            c = i_g * g_g                   # h0 = c0 = 0: skip whh matmul; f-gate unused
        h = o_g * jnp.tanh(c.astype(gate_dt)).astype(f32)

    # ---- fc1 + ReLU, fc2, softmax(dim=1) ----
    z1 = jnp.maximum(
        jnp.dot(h.astype(bf16), wfc1_ref[...], preferred_element_type=f32)
        + bfc1_ref[...], 0.0)
    # fc2 kept f32 (3 output lanes, negligible cost; preserves output precision)
    z2 = jnp.dot(z1, wfc2_ref[...], preferred_element_type=f32) + bfc2_ref[...]
    z2 = z2 - jnp.max(z2, axis=1, keepdims=True)
    e = jnp.exp(z2)
    out_ref[...] = e / jnp.sum(e, axis=1, keepdims=True)


def _round_up(n, m):
    return ((n + m - 1) // m) * m


def _const_index_map(nd):
    def im(i):
        return (0,) * nd
    return im


def _chip_config():
    """(use_bf16_gates, two_tensorcores, bump_vmem_limit) from the device kind."""
    kind = ""
    try:
        kind = jax.devices()[0].device_kind.lower()
    except Exception:
        pass
    new_gen = ("v6" in kind) or ("v7" in kind) or ("7x" in kind)
    two_tc = ("v7" in kind) or ("7x" in kind)
    return new_gen, two_tc, (not new_gen)


def actor_net_forward(x, params):
    """x: (B, 8) float32. Returns (B, 3) softmax probabilities."""
    B = x.shape[0]
    bf16_gates, two_tc, bump_vmem = _chip_config()

    # Pad batch to a sublane multiple.  On v7x make sure grid >= 2 whenever
    # there is enough work (both TensorCores run); cap the tile at 256 rows so
    # the block's intermediates stay well inside scoped VMEM.
    Bp = _round_up(max(B, 8), 8)
    if two_tc and Bp >= 16:
        TB = min(256, _round_up((Bp + 1) // 2, 8))
    else:
        TB = min(256, Bp)
    Bp = _round_up(Bp, TB)
    xb = jnp.pad(x.astype(jnp.float32), ((0, Bp - B), (0, 0)))

    in_specs = [pl.BlockSpec((TB, INPUT_SIZE), lambda i: (i, 0))]
    # Weights: full-array blocks with constant index maps -> VMEM-resident.
    in_specs += [pl.BlockSpec(p.shape, _const_index_map(p.ndim)) for p in params]

    kernel = functools.partial(actor_net_kernel, bf16_gates)
    out = pl.pallas_call(
        kernel,
        out_shape=jax.ShapeDtypeStruct((Bp, N_ACTIONS), jnp.float32),
        grid=(Bp // TB,),
        in_specs=in_specs,
        out_specs=pl.BlockSpec((TB, N_ACTIONS), lambda i: (i, 0)),
        compiler_params=pltpu.CompilerParams(
            dimension_semantics=("parallel",),
            # v5e-and-older: default scoped VMEM is 16 MiB, raise it; v6e/v7x
            # defaults (32 MiB) are fine at TB <= 256.
            vmem_limit_bytes=(64 * 1024 * 1024) if bump_vmem else None),
    )(xb, *params)
    return out[:B]


def init_params(key):
    """Deterministic synthetic parameters matching ActorNet.__init__ shapes,
    pre-folded into the kernel's layout (BN eval stats folded, LSTM/FC weights
    transposed, heavy weights bf16, sigmoid 0.5 pre-scale folded into the LSTM
    weights/bias)."""
    ks = jax.random.split(key, 13)

    def u(k, shape, fan_in):
        bound = 1.0 / jnp.sqrt(jnp.float32(fan_in))
        return jax.random.uniform(k, shape, jnp.float32, -bound, bound)

    eps = 1e-5
    H = HIDDEN
    # conv1: torch weight (32, 1, 2) -> two (1, 32) taps; bias (32,) -> (1, 32)
    w1k0 = u(ks[0], (1, 32), 2)
    w1k1 = u(ks[1], (1, 32), 2)
    b1 = u(ks[2], (1, 32), 2)
    # BN (eval, default running stats): scale = gamma/sqrt(var+eps), shift = beta - mean*scale
    s1 = jnp.full((1, 32), 1.0 / jnp.sqrt(1.0 + eps), jnp.float32)
    sh1 = jnp.zeros((1, 32), jnp.float32)
    # conv2: torch weight (64, 32, 2) -> taps stacked on K: (64, 64) = [k0; k1], bf16
    w2k0 = u(ks[3], (32, 64), 32 * 2)
    w2k1 = u(ks[4], (32, 64), 32 * 2)
    w2 = jnp.concatenate([w2k0, w2k1], axis=0).astype(jnp.bfloat16)
    b2 = u(ks[5], (1, 64), 32 * 2)
    s2 = jnp.full((1, 64), 1.0 / jnp.sqrt(1.0 + eps), jnp.float32)
    sh2 = jnp.zeros((1, 64), jnp.float32)
    # LSTM: torch W_ih (4H, 64), W_hh (4H, H), b_ih + b_hh (4H,) -- stored
    # transposed.  The 0.5 pre-scale of the sigmoid gates (i, f, o columns;
    # torch gate order i,f,g,o) is folded in so the kernel runs a single
    # full-width tanh per step; gps/gsh recover sigmoid = 0.5*tanh + 0.5.
    wih = u(ks[6], (64, 4 * H), H)
    whh = u(ks[7], (H, 4 * H), H)
    bl = u(ks[8], (1, 4 * H), H)
    oh = jnp.ones((1, H), jnp.float32)
    pre = jnp.concatenate([0.5 * oh, 0.5 * oh, 1.0 * oh, 0.5 * oh], axis=1)   # i,f,g,o
    gps = jnp.concatenate([0.5 * oh, 0.5 * oh, 1.0 * oh, 0.5 * oh], axis=1)
    gsh = jnp.concatenate([0.5 * oh, 0.5 * oh, 0.0 * oh, 0.5 * oh], axis=1)
    wih = (wih * pre).astype(jnp.bfloat16)
    whh = (whh * pre).astype(jnp.bfloat16)
    bl = bl * pre
    # fc1: torch (128, 256) -> (256, 128) bf16; fc2: torch (3, 128) -> (128, 3) f32
    wfc1 = u(ks[9], (H, 128), H).astype(jnp.bfloat16)
    bfc1 = u(ks[10], (1, 128), H)
    wfc2 = u(ks[11], (128, 3), 128)
    bfc2 = u(ks[12], (1, 3), 128)

    return (w1k0, w1k1, b1, s1, sh1,
            w2, b2, s2, sh2,
            wih, whh, bl, gps, gsh,
            wfc1, bfc1, wfc2, bfc2)


if __name__ == "__main__":
    key = jax.random.PRNGKey(0)
    k_params, k_x = jax.random.split(key)
    params = init_params(k_params)

    B = 2
    x = jax.random.normal(k_x, (B, INPUT_SIZE), jnp.float32)

    out = actor_net_forward(x, params)
    out = jax.block_until_ready(out)

    assert out.shape == (B, N_ACTIONS)
    assert bool(jnp.all(jnp.isfinite(out)))
    # softmax rows sum to 1
    assert bool(jnp.all(jnp.abs(jnp.sum(out, axis=1) - 1.0) < 1e-3))
    print("KERNEL_OK")
</pallas_src>

<mosaic_0001>
module attributes {stable_mosaic.version = 11 : i64} {
  func.func @actor_net_kernel(%arg0: i32, %arg1: memref<8x8xf32, #tpu.memory_space<vmem>>, %arg2: memref<1x32xf32, #tpu.memory_space<vmem>>, %arg3: memref<1x32xf32, #tpu.memory_space<vmem>>, %arg4: memref<1x32xf32, #tpu.memory_space<vmem>>, %arg5: memref<1x32xf32, #tpu.memory_space<vmem>>, %arg6: memref<1x32xf32, #tpu.memory_space<vmem>>, %arg7: memref<64x64xbf16, #tpu.memory_space<vmem>>, %arg8: memref<1x64xf32, #tpu.memory_space<vmem>>, %arg9: memref<1x64xf32, #tpu.memory_space<vmem>>, %arg10: memref<1x64xf32, #tpu.memory_space<vmem>>, %arg11: memref<64x1024xbf16, #tpu.memory_space<vmem>>, %arg12: memref<256x1024xbf16, #tpu.memory_space<vmem>>, %arg13: memref<1x1024xf32, #tpu.memory_space<vmem>>, %arg14: memref<1x1024xf32, #tpu.memory_space<vmem>>, %arg15: memref<1x1024xf32, #tpu.memory_space<vmem>>, %arg16: memref<256x128xbf16, #tpu.memory_space<vmem>>, %arg17: memref<1x128xf32, #tpu.memory_space<vmem>>, %arg18: memref<128x3xf32, #tpu.memory_space<vmem>>, %arg19: memref<1x3xf32, #tpu.memory_space<vmem>>, %arg20: memref<8x3xf32, #tpu.memory_space<vmem>>) attributes {dimension_semantics = [#tpu.dimension_semantics<parallel>], iteration_bounds = array<i64: 1>, scalar_prefetch = 0 : i64, scratch_operands = 0 : i64, tpu.core_type = #tpu.core_type<tc>, window_params = [{transform_indices = @transform_0, window_bounds = array<i64: 8, 8>}, {pipeline_mode = #tpu.pipeline_mode<synchronous>, transform_indices = @transform_1, window_bounds = array<i64: 1, 32>}, {pipeline_mode = #tpu.pipeline_mode<synchronous>, transform_indices = @transform_2, window_bounds = array<i64: 1, 32>}, {pipeline_mode = #tpu.pipeline_mode<synchronous>, transform_indices = @transform_3, window_bounds = array<i64: 1, 32>}, {pipeline_mode = #tpu.pipeline_mode<synchronous>, transform_indices = @transform_4, window_bounds = array<i64: 1, 32>}, {pipeline_mode = #tpu.pipeline_mode<synchronous>, transform_indices = @transform_5, window_bounds = array<i64: 1, 32>}, {pipeline_mode = #tpu.pipeline_mode<synchronous>, transform_indices = @transform_6, window_bounds = array<i64: 64, 64>}, {pipeline_mode = #tpu.pipeline_mode<synchronous>, transform_indices = @transform_7, window_bounds = array<i64: 1, 64>}, {pipeline_mode = #tpu.pipeline_mode<synchronous>, transform_indices = @transform_8, window_bounds = array<i64: 1, 64>}, {pipeline_mode = #tpu.pipeline_mode<synchronous>, transform_indices = @transform_9, window_bounds = array<i64: 1, 64>}, {pipeline_mode = #tpu.pipeline_mode<synchronous>, transform_indices = @transform_10, window_bounds = array<i64: 64, 1024>}, {pipeline_mode = #tpu.pipeline_mode<synchronous>, transform_indices = @transform_11, window_bounds = array<i64: 256, 1024>}, {pipeline_mode = #tpu.pipeline_mode<synchronous>, transform_indices = @transform_12, window_bounds = array<i64: 1, 1024>}, {pipeline_mode = #tpu.pipeline_mode<synchronous>, transform_indices = @transform_13, window_bounds = array<i64: 1, 1024>}, {pipeline_mode = #tpu.pipeline_mode<synchronous>, transform_indices = @transform_14, window_bounds = array<i64: 1, 1024>}, {pipeline_mode = #tpu.pipeline_mode<synchronous>, transform_indices = @transform_15, window_bounds = array<i64: 256, 128>}, {pipeline_mode = #tpu.pipeline_mode<synchronous>, transform_indices = @transform_16, window_bounds = array<i64: 1, 128>}, {pipeline_mode = #tpu.pipeline_mode<synchronous>, transform_indices = @transform_17, window_bounds = array<i64: 128, 3>}, {pipeline_mode = #tpu.pipeline_mode<synchronous>, transform_indices = @transform_18, window_bounds = array<i64: 1, 3>}, {transform_indices = @transform_19, window_bounds = array<i64: 8, 3>}]} {
    %c0 = arith.constant 0 : index
    %c0_0 = arith.constant 0 : index
    %0 = vector.load %arg1[%c0, %c0_0] : memref<8x8xf32, #tpu.memory_space<vmem>>, vector<8x8xf32>
    %c0_1 = arith.constant 0 : index
    %c0_2 = arith.constant 0 : index
    %1 = vector.load %arg2[%c0_1, %c0_2] : memref<1x32xf32, #tpu.memory_space<vmem>>, vector<1x32xf32>
    %c0_3 = arith.constant 0 : index
    %c0_4 = arith.constant 0 : index
    %2 = vector.load %arg3[%c0_3, %c0_4] : memref<1x32xf32, #tpu.memory_space<vmem>>, vector<1x32xf32>
    %c0_5 = arith.constant 0 : index
    %c0_6 = arith.constant 0 : index
    %3 = vector.load %arg4[%c0_5, %c0_6] : memref<1x32xf32, #tpu.memory_space<vmem>>, vector<1x32xf32>
    %c0_7 = arith.constant 0 : index
    %c0_8 = arith.constant 0 : index
    %4 = vector.load %arg5[%c0_7, %c0_8] : memref<1x32xf32, #tpu.memory_space<vmem>>, vector<1x32xf32>
    %c0_9 = arith.constant 0 : index
    %c0_10 = arith.constant 0 : index
    %5 = vector.load %arg6[%c0_9, %c0_10] : memref<1x32xf32, #tpu.memory_space<vmem>>, vector<1x32xf32>
    %cst = arith.constant 0.000000e+00 : f32
    %6 = vector.broadcast %cst : f32 to vector<8x32xf32>
    %7 = vector.extract_strided_slice %0 {offsets = [0, 0], sizes = [8, 1], strides = [1, 1]} : vector<8x8xf32> to vector<8x1xf32>
    %8 = vector.broadcast %7 : vector<8x1xf32> to vector<8x32xf32>
    %9 = vector.broadcast %2 : vector<1x32xf32> to vector<8x32xf32>
    %10 = arith.mulf %8, %9 : vector<8x32xf32>
    %11 = vector.broadcast %3 : vector<1x32xf32> to vector<8x32xf32>
    %12 = arith.addf %11, %10 : vector<8x32xf32>
    %cst_11 = arith.constant 0.000000e+00 : f32
    %13 = vector.broadcast %cst_11 : f32 to vector<8x32xf32>
    %14 = arith.maximumf %12, %13 : vector<8x32xf32>
    %15 = vector.broadcast %4 : vector<1x32xf32> to vector<8x32xf32>
    %16 = arith.mulf %14, %15 : vector<8x32xf32>
    %17 = vector.broadcast %5 : vector<1x32xf32> to vector<8x32xf32>
    %18 = arith.addf %16, %17 : vector<8x32xf32>
    %19 = vector.extract_strided_slice %0 {offsets = [0, 0], sizes = [8, 1], strides = [1, 1]} : vector<8x8xf32> to vector<8x1xf32>
    %20 = vector.broadcast %19 : vector<8x1xf32> to vector<8x32xf32>
    %21 = vector.broadcast %1 : vector<1x32xf32> to vector<8x32xf32>
    %22 = arith.mulf %20, %21 : vector<8x32xf32>
    %23 = vector.broadcast %3 : vector<1x32xf32> to vector<8x32xf32>
    %24 = arith.addf %23, %22 : vector<8x32xf32>
    %25 = vector.extract_strided_slice %0 {offsets = [0, 1], sizes = [8, 1], strides = [1, 1]} : vector<8x8xf32> to vector<8x1xf32>
    %26 = vector.broadcast %25 : vector<8x1xf32> to vector<8x32xf32>
    %27 = vector.broadcast %2 : vector<1x32xf32> to vector<8x32xf32>
    %28 = arith.mulf %26, %27 : vector<8x32xf32>
    %29 = arith.addf %24, %28 : vector<8x32xf32>
    %cst_12 = arith.constant 0.000000e+00 : f32
    %30 = vector.broadcast %cst_12 : f32 to vector<8x32xf32>
    %31 = arith.maximumf %29, %30 : vector<8x32xf32>
    %32 = vector.broadcast %4 : vector<1x32xf32> to vector<8x32xf32>
    %33 = arith.mulf %31, %32 : vector<8x32xf32>
    %34 = vector.broadcast %5 : vector<1x32xf32> to vector<8x32xf32>
    %35 = arith.addf %33, %34 : vector<8x32xf32>
    %36 = vector.extract_strided_slice %0 {offsets = [0, 1], sizes = [8, 1], strides = [1, 1]} : vector<8x8xf32> to vector<8x1xf32>
    %37 = vector.broadcast %36 : vector<8x1xf32> to vector<8x32xf32>
    %38 = vector.broadcast %1 : vector<1x32xf32> to vector<8x32xf32>
    %39 = arith.mulf %37, %38 : vector<8x32xf32>
    %40 = vector.broadcast %3 : vector<1x32xf32> to vector<8x32xf32>
    %41 = arith.addf %40, %39 : vector<8x32xf32>
    %42 = vector.extract_strided_slice %0 {offsets = [0, 2], sizes = [8, 1], strides = [1, 1]} : vector<8x8xf32> to vector<8x1xf32>
    %43 = vector.broadcast %42 : vector<8x1xf32> to vector<8x32xf32>
    %44 = vector.broadcast %2 : vector<1x32xf32> to vector<8x32xf32>
    %45 = arith.mulf %43, %44 : vector<8x32xf32>
    %46 = arith.addf %41, %45 : vector<8x32xf32>
    %cst_13 = arith.constant 0.000000e+00 : f32
    %47 = vector.broadcast %cst_13 : f32 to vector<8x32xf32>
    %48 = arith.maximumf %46, %47 : vector<8x32xf32>
    %49 = vector.broadcast %4 : vector<1x32xf32> to vector<8x32xf32>
    %50 = arith.mulf %48, %49 : vector<8x32xf32>
    %51 = vector.broadcast %5 : vector<1x32xf32> to vector<8x32xf32>
    %52 = arith.addf %50, %51 : vector<8x32xf32>
    %53 = vector.extract_strided_slice %0 {offsets = [0, 2], sizes = [8, 1], strides = [1, 1]} : vector<8x8xf32> to vector<8x1xf32>
    %54 = vector.broadcast %53 : vector<8x1xf32> to vector<8x32xf32>
    %55 = vector.broadcast %1 : vector<1x32xf32> to vector<8x32xf32>
    %56 = arith.mulf %54, %55 : vector<8x32xf32>
    %57 = vector.broadcast %3 : vector<1x32xf32> to vector<8x32xf32>
    %58 = arith.addf %57, %56 : vector<8x32xf32>
    %59 = vector.extract_strided_slice %0 {offsets = [0, 3], sizes = [8, 1], strides = [1, 1]} : vector<8x8xf32> to vector<8x1xf32>
    %60 = vector.broadcast %59 : vector<8x1xf32> to vector<8x32xf32>
    %61 = vector.broadcast %2 : vector<1x32xf32> to vector<8x32xf32>
    %62 = arith.mulf %60, %61 : vector<8x32xf32>
    %63 = arith.addf %58, %62 : vector<8x32xf32>
    %cst_14 = arith.constant 0.000000e+00 : f32
    %64 = vector.broadcast %cst_14 : f32 to vector<8x32xf32>
    %65 = arith.maximumf %63, %64 : vector<8x32xf32>
    %66 = vector.broadcast %4 : vector<1x32xf32> to vector<8x32xf32>
    %67 = arith.mulf %65, %66 : vector<8x32xf32>
    %68 = vector.broadcast %5 : vector<1x32xf32> to vector<8x32xf32>
    %69 = arith.addf %67, %68 : vector<8x32xf32>
    %70 = vector.extract_strided_slice %0 {offsets = [0, 3], sizes = [8, 1], strides = [1, 1]} : vector<8x8xf32> to vector<8x1xf32>
    %71 = vector.broadcast %70 : vector<8x1xf32> to vector<8x32xf32>
    %72 = vector.broadcast %1 : vector<1x32xf32> to vector<8x32xf32>
    %73 = arith.mulf %71, %72 : vector<8x32xf32>
    %74 = vector.broadcast %3 : vector<1x32xf32> to vector<8x32xf32>
    %75 = arith.addf %74, %73 : vector<8x32xf32>
    %76 = vector.extract_strided_slice %0 {offsets = [0, 4], sizes = [8, 1], strides = [1, 1]} : vector<8x8xf32> to vector<8x1xf32>
    %77 = vector.broadcast %76 : vector<8x1xf32> to vector<8x32xf32>
    %78 = vector.broadcast %2 : vector<1x32xf32> to vector<8x32xf32>
    %79 = arith.mulf %77, %78 : vector<8x32xf32>
    %80 = arith.addf %75, %79 : vector<8x32xf32>
    %cst_15 = arith.constant 0.000000e+00 : f32
    %81 = vector.broadcast %cst_15 : f32 to vector<8x32xf32>
    %82 = arith.maximumf %80, %81 : vector<8x32xf32>
    %83 = vector.broadcast %4 : vector<1x32xf32> to vector<8x32xf32>
    %84 = arith.mulf %82, %83 : vector<8x32xf32>
    %85 = vector.broadcast %5 : vector<1x32xf32> to vector<8x32xf32>
    %86 = arith.addf %84, %85 : vector<8x32xf32>
    %87 = vector.extract_strided_slice %0 {offsets = [0, 4], sizes = [8, 1], strides = [1, 1]} : vector<8x8xf32> to vector<8x1xf32>
    %88 = vector.broadcast %87 : vector<8x1xf32> to vector<8x32xf32>
    %89 = vector.broadcast %1 : vector<1x32xf32> to vector<8x32xf32>
    %90 = arith.mulf %88, %89 : vector<8x32xf32>
    %91 = vector.broadcast %3 : vector<1x32xf32> to vector<8x32xf32>
    %92 = arith.addf %91, %90 : vector<8x32xf32>
    %93 = vector.extract_strided_slice %0 {offsets = [0, 5], sizes = [8, 1], strides = [1, 1]} : vector<8x8xf32> to vector<8x1xf32>
    %94 = vector.broadcast %93 : vector<8x1xf32> to vector<8x32xf32>
    %95 = vector.broadcast %2 : vector<1x32xf32> to vector<8x32xf32>
    %96 = arith.mulf %94, %95 : vector<8x32xf32>
    %97 = arith.addf %92, %96 : vector<8x32xf32>
    %cst_16 = arith.constant 0.000000e+00 : f32
    %98 = vector.broadcast %cst_16 : f32 to vector<8x32xf32>
    %99 = arith.maximumf %97, %98 : vector<8x32xf32>
    %100 = vector.broadcast %4 : vector<1x32xf32> to vector<8x32xf32>
    %101 = arith.mulf %99, %100 : vector<8x32xf32>
    %102 = vector.broadcast %5 : vector<1x32xf32> to vector<8x32xf32>
    %103 = arith.addf %101, %102 : vector<8x32xf32>
    %104 = vector.extract_strided_slice %0 {offsets = [0, 5], sizes = [8, 1], strides = [1, 1]} : vector<8x8xf32> to vector<8x1xf32>
    %105 = vector.broadcast %104 : vector<8x1xf32> to vector<8x32xf32>
    %106 = vector.broadcast %1 : vector<1x32xf32> to vector<8x32xf32>
    %107 = arith.mulf %105, %106 : vector<8x32xf32>
    %108 = vector.broadcast %3 : vector<1x32xf32> to vector<8x32xf32>
    %109 = arith.addf %108, %107 : vector<8x32xf32>
    %110 = vector.extract_strided_slice %0 {offsets = [0, 6], sizes = [8, 1], strides = [1, 1]} : vector<8x8xf32> to vector<8x1xf32>
    %111 = vector.broadcast %110 : vector<8x1xf32> to vector<8x32xf32>
    %112 = vector.broadcast %2 : vector<1x32xf32> to vector<8x32xf32>
    %113 = arith.mulf %111, %112 : vector<8x32xf32>
    %114 = arith.addf %109, %113 : vector<8x32xf32>
    %cst_17 = arith.constant 0.000000e+00 : f32
    %115 = vector.broadcast %cst_17 : f32 to vector<8x32xf32>
    %116 = arith.maximumf %114, %115 : vector<8x32xf32>
    %117 = vector.broadcast %4 : vector<1x32xf32> to vector<8x32xf32>
    %118 = arith.mulf %116, %117 : vector<8x32xf32>
    %119 = vector.broadcast %5 : vector<1x32xf32> to vector<8x32xf32>
    %120 = arith.addf %118, %119 : vector<8x32xf32>
    %121 = vector.extract_strided_slice %0 {offsets = [0, 6], sizes = [8, 1], strides = [1, 1]} : vector<8x8xf32> to vector<8x1xf32>
    %122 = vector.broadcast %121 : vector<8x1xf32> to vector<8x32xf32>
    %123 = vector.broadcast %1 : vector<1x32xf32> to vector<8x32xf32>
    %124 = arith.mulf %122, %123 : vector<8x32xf32>
    %125 = vector.broadcast %3 : vector<1x32xf32> to vector<8x32xf32>
    %126 = arith.addf %125, %124 : vector<8x32xf32>
    %127 = vector.extract_strided_slice %0 {offsets = [0, 7], sizes = [8, 1], strides = [1, 1]} : vector<8x8xf32> to vector<8x1xf32>
    %128 = vector.broadcast %127 : vector<8x1xf32> to vector<8x32xf32>
    %129 = vector.broadcast %2 : vector<1x32xf32> to vector<8x32xf32>
    %130 = arith.mulf %128, %129 : vector<8x32xf32>
    %131 = arith.addf %126, %130 : vector<8x32xf32>
    %cst_18 = arith.constant 0.000000e+00 : f32
    %132 = vector.broadcast %cst_18 : f32 to vector<8x32xf32>
    %133 = arith.maximumf %131, %132 : vector<8x32xf32>
    %134 = vector.broadcast %4 : vector<1x32xf32> to vector<8x32xf32>
    %135 = arith.mulf %133, %134 : vector<8x32xf32>
    %136 = vector.broadcast %5 : vector<1x32xf32> to vector<8x32xf32>
    %137 = arith.addf %135, %136 : vector<8x32xf32>
    %138 = vector.extract_strided_slice %0 {offsets = [0, 7], sizes = [8, 1], strides = [1, 1]} : vector<8x8xf32> to vector<8x1xf32>
    %139 = vector.broadcast %138 : vector<8x1xf32> to vector<8x32xf32>
    %140 = vector.broadcast %1 : vector<1x32xf32> to vector<8x32xf32>
    %141 = arith.mulf %139, %140 : vector<8x32xf32>
    %142 = vector.broadcast %3 : vector<1x32xf32> to vector<8x32xf32>
    %143 = arith.addf %142, %141 : vector<8x32xf32>
    %cst_19 = arith.constant 0.000000e+00 : f32
    %144 = vector.broadcast %cst_19 : f32 to vector<8x32xf32>
    %145 = arith.maximumf %143, %144 : vector<8x32xf32>
    %146 = vector.broadcast %4 : vector<1x32xf32> to vector<8x32xf32>
    %147 = arith.mulf %145, %146 : vector<8x32xf32>
    %148 = vector.broadcast %5 : vector<1x32xf32> to vector<8x32xf32>
    %149 = arith.addf %147, %148 : vector<8x32xf32>
    %150 = tpu.concatenate %6, %18, %35, %52, %69, %86, %103, %120, %137, %149, %6 in 0 : vector<8x32xf32>, vector<8x32xf32>, vector<8x32xf32>, vector<8x32xf32>, vector<8x32xf32>, vector<8x32xf32>, vector<8x32xf32>, vector<8x32xf32>, vector<8x32xf32>, vector<8x32xf32>, vector<8x32xf32> -> vector<88x32xf32>
    %151 = vector.extract_strided_slice %150 {offsets = [0, 0], sizes = [80, 32], strides = [1, 1]} : vector<88x32xf32> to vector<80x32xf32>
    %152 = vector.extract_strided_slice %150 {offsets = [8, 0], sizes = [80, 32], strides = [1, 1]} : vector<88x32xf32> to vector<80x32xf32>
    %153 = tpu.concatenate %151, %152 in 1 : vector<80x32xf32>, vector<80x32xf32> -> vector<80x64xf32>
    %154 = arith.truncf %153 : vector<80x64xf32> to vector<80x64xbf16>
    %c0_20 = arith.constant 0 : index
    %c0_21 = arith.constant 0 : index
    %155 = vector.load %arg7[%c0_20, %c0_21] : memref<64x64xbf16, #tpu.memory_space<vmem>>, vector<64x64xbf16>
    %cst_22 = arith.constant dense<0.000000e+00> : vector<80x64xf32>
    %156 = tpu.matmul %154, %155, %cst_22 {dimension_numbers = #tpu.dot_dimension_numbers<[1], [0], [0], [1], [0, 0, 1, 1], [], []>} : vector<80x64xbf16>, vector<64x64xbf16>, vector<80x64xf32> -> vector<80x64xf32>
    %c0_23 = arith.constant 0 : index
    %c0_24 = arith.constant 0 : index
    %157 = vector.load %arg8[%c0_23, %c0_24] : memref<1x64xf32, #tpu.memory_space<vmem>>, vector<1x64xf32>
    %158 = vector.broadcast %157 : vector<1x64xf32> to vector<80x64xf32>
    %159 = arith.addf %156, %158 : vector<80x64xf32>
    %cst_25 = arith.constant 0.000000e+00 : f32
    %160 = vector.broadcast %cst_25 : f32 to vector<80x64xf32>
    %161 = arith.maximumf %159, %160 : vector<80x64xf32>
    %c0_26 = arith.constant 0 : index
    %c0_27 = arith.constant 0 : index
    %162 = vector.load %arg9[%c0_26, %c0_27] : memref<1x64xf32, #tpu.memory_space<vmem>>, vector<1x64xf32>
    %163 = vector.broadcast %162 : vector<1x64xf32> to vector<80x64xf32>
    %164 = arith.mulf %161, %163 : vector<80x64xf32>
    %c0_28 = arith.constant 0 : index
    %c0_29 = arith.constant 0 : index
    %165 = vector.load %arg10[%c0_28, %c0_29] : memref<1x64xf32, #tpu.memory_space<vmem>>, vector<1x64xf32>
    %166 = vector.broadcast %165 : vector<1x64xf32> to vector<80x64xf32>
    %167 = arith.addf %164, %166 : vector<80x64xf32>
    %168 = vector.extract_strided_slice %167 {offsets = [0, 0], sizes = [8, 64], strides = [1, 1]} : vector<80x64xf32> to vector<8x64xf32>
    %169 = vector.extract_strided_slice %167 {offsets = [8, 0], sizes = [8, 64], strides = [1, 1]} : vector<80x64xf32> to vector<8x64xf32>
    %170 = arith.maximumf %168, %169 : vector<8x64xf32>
    %171 = vector.extract_strided_slice %167 {offsets = [16, 0], sizes = [8, 64], strides = [1, 1]} : vector<80x64xf32> to vector<8x64xf32>
    %172 = vector.extract_strided_slice %167 {offsets = [24, 0], sizes = [8, 64], strides = [1, 1]} : vector<80x64xf32> to vector<8x64xf32>
    %173 = arith.maximumf %171, %172 : vector<8x64xf32>
    %174 = vector.extract_strided_slice %167 {offsets = [32, 0], sizes = [8, 64], strides = [1, 1]} : vector<80x64xf32> to vector<8x64xf32>
    %175 = vector.extract_strided_slice %167 {offsets = [40, 0], sizes = [8, 64], strides = [1, 1]} : vector<80x64xf32> to vector<8x64xf32>
    %176 = arith.maximumf %174, %175 : vector<8x64xf32>
    %177 = vector.extract_strided_slice %167 {offsets = [48, 0], sizes = [8, 64], strides = [1, 1]} : vector<80x64xf32> to vector<8x64xf32>
    %178 = vector.extract_strided_slice %167 {offsets = [56, 0], sizes = [8, 64], strides = [1, 1]} : vector<80x64xf32> to vector<8x64xf32>
    %179 = arith.maximumf %177, %178 : vector<8x64xf32>
    %180 = vector.extract_strided_slice %167 {offsets = [64, 0], sizes = [8, 64], strides = [1, 1]} : vector<80x64xf32> to vector<8x64xf32>
    %181 = vector.extract_strided_slice %167 {offsets = [72, 0], sizes = [8, 64], strides = [1, 1]} : vector<80x64xf32> to vector<8x64xf32>
    %182 = arith.maximumf %180, %181 : vector<8x64xf32>
    %183 = tpu.concatenate %170, %173, %176, %179, %182 in 0 : vector<8x64xf32>, vector<8x64xf32>, vector<8x64xf32>, vector<8x64xf32>, vector<8x64xf32> -> vector<40x64xf32>
    %184 = arith.truncf %183 : vector<40x64xf32> to vector<40x64xbf16>
    %c0_30 = arith.constant 0 : index
    %c0_31 = arith.constant 0 : index
    %185 = vector.load %arg11[%c0_30, %c0_31] : memref<64x1024xbf16, #tpu.memory_space<vmem>>, vector<64x1024xbf16>
    %cst_32 = arith.constant dense<0.000000e+00> : vector<40x1024xf32>
    %186 = tpu.matmul %184, %185, %cst_32 {dimension_numbers = #tpu.dot_dimension_numbers<[1], [0], [0], [1], [0, 0, 1, 1], [], []>} : vector<40x64xbf16>, vector<64x1024xbf16>, vector<40x1024xf32> -> vector<40x1024xf32>
    %c0_33 = arith.constant 0 : index
    %c0_34 = arith.constant 0 : index
    %187 = vector.load %arg13[%c0_33, %c0_34] : memref<1x1024xf32, #tpu.memory_space<vmem>>, vector<1x1024xf32>
    %188 = vector.broadcast %187 : vector<1x1024xf32> to vector<40x1024xf32>
    %189 = arith.addf %186, %188 : vector<40x1024xf32>
    %c0_35 = arith.constant 0 : index
    %c0_36 = arith.constant 0 : index
    %190 = vector.load %arg12[%c0_35, %c0_36] : memref<256x1024xbf16, #tpu.memory_space<vmem>>, vector<256x1024xbf16>
    %c0_37 = arith.constant 0 : index
    %c0_38 = arith.constant 0 : index
    %191 = vector.load %arg14[%c0_37, %c0_38] : memref<1x1024xf32, #tpu.memory_space<vmem>>, vector<1x1024xf32>
    %c0_39 = arith.constant 0 : index
    %c0_40 = arith.constant 0 : index
    %192 = vector.load %arg15[%c0_39, %c0_40] : memref<1x1024xf32, #tpu.memory_space<vmem>>, vector<1x1024xf32>
    %193 = vector.extract_strided_slice %189 {offsets = [0, 0], sizes = [8, 1024], strides = [1, 1]} : vector<40x1024xf32> to vector<8x1024xf32>
    %194 = math.tanh %193 : vector<8x1024xf32>
    %195 = vector.broadcast %191 : vector<1x1024xf32> to vector<8x1024xf32>
    %196 = arith.mulf %194, %195 : vector<8x1024xf32>
    %197 = vector.broadcast %192 : vector<1x1024xf32> to vector<8x1024xf32>
    %198 = arith.addf %196, %197 : vector<8x1024xf32>
    %199 = vector.extract_strided_slice %198 {offsets = [0, 0], sizes = [8, 256], strides = [1, 1]} : vector<8x1024xf32> to vector<8x256xf32>
    %200 = vector.extract_strided_slice %198 {offsets = [0, 512], sizes = [8, 256], strides = [1, 1]} : vector<8x1024xf32> to vector<8x256xf32>
    %201 = vector.extract_strided_slice %198 {offsets = [0, 768], sizes = [8, 256], strides = [1, 1]} : vector<8x1024xf32> to vector<8x256xf32>
    %202 = arith.mulf %199, %200 : vector<8x256xf32>
    %203 = math.tanh %202 : vector<8x256xf32>
    %204 = arith.mulf %201, %203 : vector<8x256xf32>
    %205 = vector.extract_strided_slice %189 {offsets = [8, 0], sizes = [8, 1024], strides = [1, 1]} : vector<40x1024xf32> to vector<8x1024xf32>
    %206 = arith.truncf %204 : vector<8x256xf32> to vector<8x256xbf16>
    %cst_41 = arith.constant dense<0.000000e+00> : vector<8x1024xf32>
    %207 = tpu.matmul %206, %190, %cst_41 {dimension_numbers = #tpu.dot_dimension_numbers<[1], [0], [0], [1], [0, 0, 1, 1], [], []>} : vector<8x256xbf16>, vector<256x1024xbf16>, vector<8x1024xf32> -> vector<8x1024xf32>
    %208 = arith.addf %205, %207 : vector<8x1024xf32>
    %209 = math.tanh %208 : vector<8x1024xf32>
    %210 = vector.broadcast %191 : vector<1x1024xf32> to vector<8x1024xf32>
    %211 = arith.mulf %209, %210 : vector<8x1024xf32>
    %212 = vector.broadcast %192 : vector<1x1024xf32> to vector<8x1024xf32>
    %213 = arith.addf %211, %212 : vector<8x1024xf32>
    %214 = vector.extract_strided_slice %213 {offsets = [0, 0], sizes = [8, 256], strides = [1, 1]} : vector<8x1024xf32> to vector<8x256xf32>
    %215 = vector.extract_strided_slice %213 {offsets = [0, 512], sizes = [8, 256], strides = [1, 1]} : vector<8x1024xf32> to vector<8x256xf32>
    %216 = vector.extract_strided_slice %213 {offsets = [0, 768], sizes = [8, 256], strides = [1, 1]} : vector<8x1024xf32> to vector<8x256xf32>
    %217 = vector.extract_strided_slice %213 {offsets = [0, 256], sizes = [8, 256], strides = [1, 1]} : vector<8x1024xf32> to vector<8x256xf32>
    %218 = arith.mulf %217, %202 : vector<8x256xf32>
    %219 = arith.mulf %214, %215 : vector<8x256xf32>
    %220 = arith.addf %218, %219 : vector<8x256xf32>
    %221 = math.tanh %220 : vector<8x256xf32>
    %222 = arith.mulf %216, %221 : vector<8x256xf32>
    %223 = vector.extract_strided_slice %189 {offsets = [16, 0], sizes = [8, 1024], strides = [1, 1]} : vector<40x1024xf32> to vector<8x1024xf32>
    %224 = arith.truncf %222 : vector<8x256xf32> to vector<8x256xbf16>
    %cst_42 = arith.constant dense<0.000000e+00> : vector<8x1024xf32>
    %225 = tpu.matmul %224, %190, %cst_42 {dimension_numbers = #tpu.dot_dimension_numbers<[1], [0], [0], [1], [0, 0, 1, 1], [], []>} : vector<8x256xbf16>, vector<256x1024xbf16>, vector<8x1024xf32> -> vector<8x1024xf32>
    %226 = arith.addf %223, %225 : vector<8x1024xf32>
    %227 = math.tanh %226 : vector<8x1024xf32>
    %228 = vector.broadcast %191 : vector<1x1024xf32> to vector<8x1024xf32>
    %229 = arith.mulf %227, %228 : vector<8x1024xf32>
    %230 = vector.broadcast %192 : vector<1x1024xf32> to vector<8x1024xf32>
    %231 = arith.addf %229, %230 : vector<8x1024xf32>
    %232 = vector.extract_strided_slice %231 {offsets = [0, 0], sizes = [8, 256], strides = [1, 1]} : vector<8x1024xf32> to vector<8x256xf32>
    %233 = vector.extract_strided_slice %231 {offsets = [0, 512], sizes = [8, 256], strides = [1, 1]} : vector<8x1024xf32> to vector<8x256xf32>
    %234 = vector.extract_strided_slice %231 {offsets = [0, 768], sizes = [8, 256], strides = [1, 1]} : vector<8x1024xf32> to vector<8x256xf32>
    %235 = vector.extract_strided_slice %231 {offsets = [0, 256], sizes = [8, 256], strides = [1, 1]} : vector<8x1024xf32> to vector<8x256xf32>
    %236 = arith.mulf %235, %220 : vector<8x256xf32>
    %237 = arith.mulf %232, %233 : vector<8x256xf32>
    %238 = arith.addf %236, %237 : vector<8x256xf32>
    %239 = math.tanh %238 : vector<8x256xf32>
    %240 = arith.mulf %234, %239 : vector<8x256xf32>
    %241 = vector.extract_strided_slice %189 {offsets = [24, 0], sizes = [8, 1024], strides = [1, 1]} : vector<40x1024xf32> to vector<8x1024xf32>
    %242 = arith.truncf %240 : vector<8x256xf32> to vector<8x256xbf16>
    %cst_43 = arith.constant dense<0.000000e+00> : vector<8x1024xf32>
    %243 = tpu.matmul %242, %190, %cst_43 {dimension_numbers = #tpu.dot_dimension_numbers<[1], [0], [0], [1], [0, 0, 1, 1], [], []>} : vector<8x256xbf16>, vector<256x1024xbf16>, vector<8x1024xf32> -> vector<8x1024xf32>
    %244 = arith.addf %241, %243 : vector<8x1024xf32>
    %245 = math.tanh %244 : vector<8x1024xf32>
    %246 = vector.broadcast %191 : vector<1x1024xf32> to vector<8x1024xf32>
    %247 = arith.mulf %245, %246 : vector<8x1024xf32>
    %248 = vector.broadcast %192 : vector<1x1024xf32> to vector<8x1024xf32>
    %249 = arith.addf %247, %248 : vector<8x1024xf32>
    %250 = vector.extract_strided_slice %249 {offsets = [0, 0], sizes = [8, 256], strides = [1, 1]} : vector<8x1024xf32> to vector<8x256xf32>
    %251 = vector.extract_strided_slice %249 {offsets = [0, 512], sizes = [8, 256], strides = [1, 1]} : vector<8x1024xf32> to vector<8x256xf32>
    %252 = vector.extract_strided_slice %249 {offsets = [0, 768], sizes = [8, 256], strides = [1, 1]} : vector<8x1024xf32> to vector<8x256xf32>
    %253 = vector.extract_strided_slice %249 {offsets = [0, 256], sizes = [8, 256], strides = [1, 1]} : vector<8x1024xf32> to vector<8x256xf32>
    %254 = arith.mulf %253, %238 : vector<8x256xf32>
    %255 = arith.mulf %250, %251 : vector<8x256xf32>
    %256 = arith.addf %254, %255 : vector<8x256xf32>
    %257 = math.tanh %256 : vector<8x256xf32>
    %258 = arith.mulf %252, %257 : vector<8x256xf32>
    %259 = vector.extract_strided_slice %189 {offsets = [32, 0], sizes = [8, 1024], strides = [1, 1]} : vector<40x1024xf32> to vector<8x1024xf32>
    %260 = arith.truncf %258 : vector<8x256xf32> to vector<8x256xbf16>
    %cst_44 = arith.constant dense<0.000000e+00> : vector<8x1024xf32>
    %261 = tpu.matmul %260, %190, %cst_44 {dimension_numbers = #tpu.dot_dimension_numbers<[1], [0], [0], [1], [0, 0, 1, 1], [], []>} : vector<8x256xbf16>, vector<256x1024xbf16>, vector<8x1024xf32> -> vector<8x1024xf32>
    %262 = arith.addf %259, %261 : vector<8x1024xf32>
    %263 = math.tanh %262 : vector<8x1024xf32>
    %264 = vector.broadcast %191 : vector<1x1024xf32> to vector<8x1024xf32>
    %265 = arith.mulf %263, %264 : vector<8x1024xf32>
    %266 = vector.broadcast %192 : vector<1x1024xf32> to vector<8x1024xf32>
    %267 = arith.addf %265, %266 : vector<8x1024xf32>
    %268 = vector.extract_strided_slice %267 {offsets = [0, 0], sizes = [8, 256], strides = [1, 1]} : vector<8x1024xf32> to vector<8x256xf32>
    %269 = vector.extract_strided_slice %267 {offsets = [0, 512], sizes = [8, 256], strides = [1, 1]} : vector<8x1024xf32> to vector<8x256xf32>
    %270 = vector.extract_strided_slice %267 {offsets = [0, 768], sizes = [8, 256], strides = [1, 1]} : vector<8x1024xf32> to vector<8x256xf32>
    %271 = vector.extract_strided_slice %267 {offsets = [0, 256], sizes = [8, 256], strides = [1, 1]} : vector<8x1024xf32> to vector<8x256xf32>
    %272 = arith.mulf %271, %256 : vector<8x256xf32>
    %273 = arith.mulf %268, %269 : vector<8x256xf32>
    %274 = arith.addf %272, %273 : vector<8x256xf32>
    %275 = math.tanh %274 : vector<8x256xf32>
    %276 = arith.mulf %270, %275 : vector<8x256xf32>
    %277 = arith.truncf %276 : vector<8x256xf32> to vector<8x256xbf16>
    %c0_45 = arith.constant 0 : index
    %c0_46 = arith.constant 0 : index
    %278 = vector.load %arg16[%c0_45, %c0_46] : memref<256x128xbf16, #tpu.memory_space<vmem>>, vector<256x128xbf16>
    %cst_47 = arith.constant dense<0.000000e+00> : vector<8x128xf32>
    %279 = tpu.matmul %277, %278, %cst_47 {dimension_numbers = #tpu.dot_dimension_numbers<[1], [0], [0], [1], [0, 0, 1, 1], [], []>} : vector<8x256xbf16>, vector<256x128xbf16>, vector<8x128xf32> -> vector<8x128xf32>
    %c0_48 = arith.constant 0 : index
    %c0_49 = arith.constant 0 : index
    %280 = vector.load %arg17[%c0_48, %c0_49] : memref<1x128xf32, #tpu.memory_space<vmem>>, vector<1x128xf32>
    %281 = vector.broadcast %280 : vector<1x128xf32> to vector<8x128xf32>
    %282 = arith.addf %279, %281 : vector<8x128xf32>
    %cst_50 = arith.constant 0.000000e+00 : f32
    %283 = vector.broadcast %cst_50 : f32 to vector<8x128xf32>
    %284 = arith.maximumf %282, %283 : vector<8x128xf32>
    %c0_51 = arith.constant 0 : index
    %c0_52 = arith.constant 0 : index
    %285 = vector.load %arg18[%c0_51, %c0_52] : memref<128x3xf32, #tpu.memory_space<vmem>>, vector<128x3xf32>
    %cst_53 = arith.constant dense<0.000000e+00> : vector<8x3xf32>
    %286 = tpu.matmul %284, %285, %cst_53 {dimension_numbers = #tpu.dot_dimension_numbers<[1], [0], [0], [1], [0, 0, 1, 1], [], []>} : vector<8x128xf32>, vector<128x3xf32>, vector<8x3xf32> -> vector<8x3xf32>
    %c0_54 = arith.constant 0 : index
    %c0_55 = arith.constant 0 : index
    %287 = vector.load %arg19[%c0_54, %c0_55] : memref<1x3xf32, #tpu.memory_space<vmem>>, vector<1x3xf32>
    %288 = vector.broadcast %287 : vector<1x3xf32> to vector<8x3xf32>
    %289 = arith.addf %286, %288 : vector<8x3xf32>
    %cst_56 = arith.constant dense<0xFF800000> : vector<8xf32>
    %290 = vector.multi_reduction <maximumf>, %289, %cst_56 [1] : vector<8x3xf32> to vector<8xf32>
    %291 = vector.shape_cast %290 : vector<8xf32> to vector<8x1xf32>
    %292 = vector.broadcast %291 : vector<8x1xf32> to vector<8x3xf32>
    %293 = arith.subf %289, %292 : vector<8x3xf32>
    %294 = math.exp %293 : vector<8x3xf32>
    %cst_57 = arith.constant dense<0.000000e+00> : vector<8xf32>
    %295 = vector.multi_reduction <add>, %294, %cst_57 [1] : vector<8x3xf32> to vector<8xf32>
    %296 = vector.shape_cast %295 : vector<8xf32> to vector<8x1xf32>
    %297 = vector.broadcast %296 : vector<8x1xf32> to vector<8x3xf32>
    %298 = arith.divf %294, %297 : vector<8x3xf32>
    %c0_58 = arith.constant 0 : index
    %c0_59 = arith.constant 0 : index
    %299 = vector.load %arg20[%c0_58, %c0_59] : memref<8x3xf32, #tpu.memory_space<vmem>>, vector<8x3xf32>
    tpu.vector_store %arg20[%c0_58, %c0_59], %298 {strides = array<i32>} : memref<8x3xf32, #tpu.memory_space<vmem>>, vector<8x3xf32>,
    return
  }
  func.func @transform_0(%arg0: i32) -> (i32, i32) {
    %c0_i32 = arith.constant 0 : i32
    %c0_i32_0 = arith.constant 0 : i32
    return %arg0, %c0_i32 : i32, i32
  }
  func.func @transform_1(%arg0: i32) -> (i32, i32) {
    %c0_i32 = arith.constant 0 : i32
    %c0_i32_0 = arith.constant 0 : i32
    %c0_i32_1 = arith.constant 0 : i32
    return %c0_i32, %c0_i32_0 : i32, i32
  }
  func.func @transform_2(%arg0: i32) -> (i32, i32) {
    %c0_i32 = arith.constant 0 : i32
    %c0_i32_0 = arith.constant 0 : i32
    %c0_i32_1 = arith.constant 0 : i32
    return %c0_i32, %c0_i32_0 : i32, i32
  }
  func.func @transform_3(%arg0: i32) -> (i32, i32) {
    %c0_i32 = arith.constant 0 : i32
    %c0_i32_0 = arith.constant 0 : i32
    %c0_i32_1 = arith.constant 0 : i32
    return %c0_i32, %c0_i32_0 : i32, i32
  }
  func.func @transform_4(%arg0: i32) -> (i32, i32) {
    %c0_i32 = arith.constant 0 : i32
    %c0_i32_0 = arith.constant 0 : i32
    %c0_i32_1 = arith.constant 0 : i32
    return %c0_i32, %c0_i32_0 : i32, i32
  }
  func.func @transform_5(%arg0: i32) -> (i32, i32) {
    %c0_i32 = arith.constant 0 : i32
    %c0_i32_0 = arith.constant 0 : i32
    %c0_i32_1 = arith.constant 0 : i32
    return %c0_i32, %c0_i32_0 : i32, i32
  }
  func.func @transform_6(%arg0: i32) -> (i32, i32) {
    %c0_i32 = arith.constant 0 : i32
    %c0_i32_0 = arith.constant 0 : i32
    %c0_i32_1 = arith.constant 0 : i32
    return %c0_i32, %c0_i32_0 : i32, i32
  }
  func.func @transform_7(%arg0: i32) -> (i32, i32) {
    %c0_i32 = arith.constant 0 : i32
    %c0_i32_0 = arith.constant 0 : i32
    %c0_i32_1 = arith.constant 0 : i32
    return %c0_i32, %c0_i32_0 : i32, i32
  }
  func.func @transform_8(%arg0: i32) -> (i32, i32) {
    %c0_i32 = arith.constant 0 : i32
    %c0_i32_0 = arith.constant 0 : i32
    %c0_i32_1 = arith.constant 0 : i32
    return %c0_i32, %c0_i32_0 : i32, i32
  }
  func.func @transform_9(%arg0: i32) -> (i32, i32) {
    %c0_i32 = arith.constant 0 : i32
    %c0_i32_0 = arith.constant 0 : i32
    %c0_i32_1 = arith.constant 0 : i32
    return %c0_i32, %c0_i32_0 : i32, i32
  }
  func.func @transform_10(%arg0: i32) -> (i32, i32) {
    %c0_i32 = arith.constant 0 : i32
    %c0_i32_0 = arith.constant 0 : i32
    %c0_i32_1 = arith.constant 0 : i32
    return %c0_i32, %c0_i32_0 : i32, i32
  }
  func.func @transform_11(%arg0: i32) -> (i32, i32) {
    %c0_i32 = arith.constant 0 : i32
    %c0_i32_0 = arith.constant 0 : i32
    %c0_i32_1 = arith.constant 0 : i32
    return %c0_i32, %c0_i32_0 : i32, i32
  }
  func.func @transform_12(%arg0: i32) -> (i32, i32) {
    %c0_i32 = arith.constant 0 : i32
    %c0_i32_0 = arith.constant 0 : i32
    %c0_i32_1 = arith.constant 0 : i32
    return %c0_i32, %c0_i32_0 : i32, i32
  }
  func.func @transform_13(%arg0: i32) -> (i32, i32) {
    %c0_i32 = arith.constant 0 : i32
    %c0_i32_0 = arith.constant 0 : i32
    %c0_i32_1 = arith.constant 0 : i32
    return %c0_i32, %c0_i32_0 : i32, i32
  }
  func.func @transform_14(%arg0: i32) -> (i32, i32) {
    %c0_i32 = arith.constant 0 : i32
    %c0_i32_0 = arith.constant 0 : i32
    %c0_i32_1 = arith.constant 0 : i32
    return %c0_i32, %c0_i32_0 : i32, i32
  }
  func.func @transform_15(%arg0: i32) -> (i32, i32) {
    %c0_i32 = arith.constant 0 : i32
    %c0_i32_0 = arith.constant 0 : i32
    %c0_i32_1 = arith.constant 0 : i32
    return %c0_i32, %c0_i32_0 : i32, i32
  }
  func.func @transform_16(%arg0: i32) -> (i32, i32) {
    %c0_i32 = arith.constant 0 : i32
    %c0_i32_0 = arith.constant 0 : i32
    %c0_i32_1 = arith.constant 0 : i32
    return %c0_i32, %c0_i32_0 : i32, i32
  }
  func.func @transform_17(%arg0: i32) -> (i32, i32) {
    %c0_i32 = arith.constant 0 : i32
    %c0_i32_0 = arith.constant 0 : i32
    %c0_i32_1 = arith.constant 0 : i32
    return %c0_i32, %c0_i32_0 : i32, i32
  }
  func.func @transform_18(%arg0: i32) -> (i32, i32) {
    %c0_i32 = arith.constant 0 : i32
    %c0_i32_0 = arith.constant 0 : i32
    %c0_i32_1 = arith.constant 0 : i32
    return %c0_i32, %c0_i32_0 : i32, i32
  }
  func.func @transform_19(%arg0: i32) -> (i32, i32) {
    %c0_i32 = arith.constant 0 : i32
    %c0_i32_0 = arith.constant 0 : i32
    return %arg0, %c0_i32 : i32, i32
  }
}

</mosaic_0001>

<llo_original>
// kernel: tpu_custom_call.1
$region0: #{tpu_custom_call.1}
  #allocation0 [shape = 'u32[]', space=smem, size = 0x4, offset = 0x4, fixed_abs, tag = 'smem constant byte address 0x4 - core index']
  #allocation1 [shape = 'u32[144,128]{1,0:T(1,128)}', space=vmem, size = 0x12000, scoped, tag = 'internal scratch']
  %s0 = inlined_call_operand.vmem [shape: f32[8,8], index: 0, kind: input, shape index: {}]
  %s1 = inlined_call_operand.vmem [shape: f32[1,32], index: 1, kind: input, shape index: {}]
  %s2 = inlined_call_operand.vmem [shape: f32[1,32], index: 2, kind: input, shape index: {}]
  %s3 = inlined_call_operand.vmem [shape: f32[1,32], index: 3, kind: input, shape index: {}]
  %s4 = inlined_call_operand.vmem [shape: f32[1,32], index: 4, kind: input, shape index: {}]
  %s5 = inlined_call_operand.vmem [shape: f32[1,32], index: 5, kind: input, shape index: {}]
  %s6 = inlined_call_operand.hbm [shape: bf16[64,64], index: 6, kind: input, shape index: {}]
  %s7 = inlined_call_operand.hbm [shape: f32[1,64], index: 7, kind: input, shape index: {}]
  %s8 = inlined_call_operand.hbm [shape: f32[1,64], index: 8, kind: input, shape index: {}]
  %s9 = inlined_call_operand.hbm [shape: f32[1,64], index: 9, kind: input, shape index: {}]
  %s10 = inlined_call_operand.hbm [shape: bf16[64,1024], index: 10, kind: input, shape index: {}]
  %s11 = inlined_call_operand.hbm [shape: bf16[256,1024], index: 11, kind: input, shape index: {}]
  %s12 = inlined_call_operand.vmem [shape: f32[1,1024], index: 12, kind: input, shape index: {}]
  %s13 = inlined_call_operand.vmem [shape: f32[1,1024], index: 13, kind: input, shape index: {}]
  %s14 = inlined_call_operand.hbm [shape: f32[1,1024], index: 14, kind: input, shape index: {}]
  %s15 = inlined_call_operand.vmem [shape: bf16[256,128], index: 15, kind: input, shape index: {}]
  %s16 = inlined_call_operand.hbm [shape: f32[1,128], index: 16, kind: input, shape index: {}]
  %s17 = inlined_call_operand.vmem [shape: f32[128,3], index: 17, kind: input, shape index: {}]
  %s18 = inlined_call_operand.vmem [shape: f32[1,3], index: 18, kind: input, shape index: {}]
  %s19 = inlined_call_operand.vmem [shape: f32[8,3], index: 19, kind: output, shape index: {}]
  %s20 = sld [smem:[#allocation0]]
  $region118: #{tpu_custom_call.1} parent=0
    _
  %s22 = ssub.s32 1, %s20
  %s23 = scalar_select 0, %s22, %s20
  $region1: #{tpu_custom_call.1} parent=0
    #allocation2 [shape = 'u8[16384]{0}', space=vmem, size = 0x4000, scoped, tag = 'input window, operand 6, single buffered']
    #allocation3 [shape = 's32[1]{0}', space=sflag, size = 0x4, scoped, tag = 'scoped memory for tpu_custom_call.1']
    #allocation4 [shape = 'u8[512]{0}', space=vmem, size = 0x400, scoped, tag = 'input window, operand 7, single buffered']
    #allocation5 [shape = 's32[1]{0}', space=sflag, size = 0x4, scoped, tag = 'scoped memory for tpu_custom_call.1']
    #allocation6 [shape = 'u8[512]{0}', space=vmem, size = 0x400, scoped, tag = 'input window, operand 8, single buffered']
    #allocation7 [shape = 'u8[512]{0}', space=vmem, size = 0x400, scoped, tag = 'input window, operand 9, single buffered']
    #allocation8 [shape = 's32[1]{0}', space=sflag, size = 0x4, scoped, tag = 'scoped memory for tpu_custom_call.1']
    #allocation9 [shape = 'u8[131072]{0}', space=vmem, size = 0x20000, scoped, tag = 'input window, operand 10, single buffered']
    #allocation10 [shape = 'u8[524288]{0}', space=vmem, size = 0x80000, scoped, tag = 'input window, operand 11, single buffered']
    #allocation11 [shape = 's32[1]{0}', space=sflag, size = 0x4, scoped, tag = 'scoped memory for tpu_custom_call.1']
    #allocation12 [shape = 'u8[4096]{0}', space=vmem, size = 0x1000, scoped, tag = 'input window, operand 14, single buffered']
    #allocation13 [shape = 'u8[512]{0}', space=vmem, size = 0x400, scoped, tag = 'input window, operand 16, single buffered']
    #allocation14 [shape = 's32[1]{0}', space=sflag, size = 0x4, scoped, tag = 'scoped memory for tpu_custom_call.1']
    %24 = vsyncpa [#allocation3], 0
    %25 = vsyncpa [#allocation5], 0
    %26 = vsyncpa [#allocation8], 0
    %27 = vsyncpa [#allocation11], 0
    %28 = vsyncpa [#allocation14], 0
    // Predicated region
    $region2: #{tpu_custom_call.1} parent=1 // pred_check
      _
    $region3: #{tpu_custom_call.1} parent=1 // pred_check_branch
      %30 = sbr.rel (0) target = $region5
    $region4: #{tpu_custom_call.1} parent=1 // pred_region
      _
    $region5: #{tpu_custom_call.1} parent=1 // pred_fallthru
      _
    // Predicated region
    $region6: #{tpu_custom_call.1} parent=1 // pred_check
      _
    $region7: #{tpu_custom_call.1} parent=1 // pred_check_branch
      %32 = sbr.rel (0) target = $region9
    $region8: #{tpu_custom_call.1} parent=1 // pred_region
      _
    $region9: #{tpu_custom_call.1} parent=1 // pred_fallthru
      _
    // Predicated region
    $region10: #{tpu_custom_call.1} parent=1 // pred_check
      _
    $region11: #{tpu_custom_call.1} parent=1 // pred_check_branch
      %34 = sbr.rel (0) target = $region13
    $region12: #{tpu_custom_call.1} parent=1 // pred_region
      _
    $region13: #{tpu_custom_call.1} parent=1 // pred_fallthru
      _
    // Predicated region
    $region14: #{tpu_custom_call.1} parent=1 // pred_check
      _
    $region15: #{tpu_custom_call.1} parent=1 // pred_check_branch
      %36 = sbr.rel (0) target = $region17
    $region16: #{tpu_custom_call.1} parent=1 // pred_region
      _
    $region17: #{tpu_custom_call.1} parent=1 // pred_fallthru
      _
    // Predicated region
    $region18: #{tpu_custom_call.1} parent=1 // pred_check
      _
    $region19: #{tpu_custom_call.1} parent=1 // pred_check_branch
      %38 = sbr.rel (0) target = $region21
    $region20: #{tpu_custom_call.1} parent=1 // pred_region
      _
    $region21: #{tpu_custom_call.1} parent=1 // pred_fallthru
      _
    // Predicated region
    $region22: #{tpu_custom_call.1} parent=1 // pred_check
      _
    $region23: #{tpu_custom_call.1} parent=1 // pred_check_branch
      %40 = sbr.rel (0) target = $region25
    $region24: #{tpu_custom_call.1} parent=1 // pred_region
      _
    $region25: #{tpu_custom_call.1} parent=1 // pred_fallthru
      _
    // Predicated region
    $region26: #{tpu_custom_call.1} parent=1 // pred_check
      _
    $region27: #{tpu_custom_call.1} parent=1 // pred_check_branch
      %42 = sbr.rel (0) target = $region29
    $region28: #{tpu_custom_call.1} parent=1 // pred_region
      %s44 = ssub.s32 512, 512
      %45 = vsyncadd [#allocation3], %s44
      %s46 = sshll.u32 [#allocation2], 4
      %s47 = int_to_ptr.vmem [resolvable:$true] %s46
      %52 = dma.hbm_to_vmem [thread:$0]  %s6, 512, %s47, [#allocation3], 64, 64, 4
    $region29: #{tpu_custom_call.1} parent=1 // pred_fallthru
      _
    // Predicated region
    $region30: #{tpu_custom_call.1} parent=1 // pred_check
      _
    $region31: #{tpu_custom_call.1} parent=1 // pred_check_branch
      %54 = sbr.rel (0) target = $region33
    $region32: #{tpu_custom_call.1} parent=1 // pred_region
      %s56 = ssub.s32 16, 16
      %57 = vsyncadd [#allocation5], %s56
      %s59 = sshll.u32 [#allocation4], 4
      %s60 = int_to_ptr.vmem [resolvable:$true] %s59
      %62 = dma.hbm_to_vmem [thread:$0]  %s7, 16, %s60, [#allocation5]
    $region33: #{tpu_custom_call.1} parent=1 // pred_fallthru
      _
    // Predicated region
    $region34: #{tpu_custom_call.1} parent=1 // pred_check
      _
    $region35: #{tpu_custom_call.1} parent=1 // pred_check_branch
      %64 = sbr.rel (0) target = $region37
    $region36: #{tpu_custom_call.1} parent=1 // pred_region
      %s66 = ssub.s32 16, 16
      %67 = vsyncadd [#allocation5], %s66
      %s69 = sshll.u32 [#allocation6], 4
      %s70 = int_to_ptr.vmem [resolvable:$true] %s69
      %72 = dma.hbm_to_vmem [thread:$0]  %s8, 16, %s70, [#allocation5]
    $region37: #{tpu_custom_call.1} parent=1 // pred_fallthru
      _
    // Predicated region
    $region38: #{tpu_custom_call.1} parent=1 // pred_check
      _
    $region39: #{tpu_custom_call.1} parent=1 // pred_check_branch
      %74 = sbr.rel (0) target = $region41
    $region40: #{tpu_custom_call.1} parent=1 // pred_region
      %s76 = ssub.s32 16, 16
      %77 = vsyncadd [#allocation8], %s76
      %s79 = sshll.u32 [#allocation7], 4
      %s80 = int_to_ptr.vmem [resolvable:$true] %s79
      %82 = dma.hbm_to_vmem [thread:$0]  %s9, 16, %s80, [#allocation8]
    $region41: #{tpu_custom_call.1} parent=1 // pred_fallthru
      _
    // Predicated region
    $region42: #{tpu_custom_call.1} parent=1 // pred_check
      _
    $region43: #{tpu_custom_call.1} parent=1 // pred_check_branch
      %84 = sbr.rel (0) target = $region45
    $region44: #{tpu_custom_call.1} parent=1 // pred_region
      %s86 = ssub.s32 4096, 4096
      %87 = vsyncadd [#allocation8], %s86
      %s88 = sshll.u32 [#allocation9], 4
      %s89 = int_to_ptr.vmem [resolvable:$true] %s88
      %94 = dma.hbm_to_vmem [thread:$0]  %s10, 4096, %s89, [#allocation8], 512, 512, 32
    $region45: #{tpu_custom_call.1} parent=1 // pred_fallthru
      _
    // Predicated region
    $region46: #{tpu_custom_call.1} parent=1 // pred_check
      _
    $region47: #{tpu_custom_call.1} parent=1 // pred_check_branch
      %96 = sbr.rel (0) target = $region49
    $region48: #{tpu_custom_call.1} parent=1 // pred_region
      %s98 = ssub.s32 16384, 16384
      %99 = vsyncadd [#allocation11], %s98
      %s100 = sshll.u32 [#allocation10], 4
      %s101 = int_to_ptr.vmem [resolvable:$true] %s100
      %106 = dma.hbm_to_vmem [thread:$0]  %s11, 16384, %s101, [#allocation11], 512, 512, 32
    $region49: #{tpu_custom_call.1} parent=1 // pred_fallthru
      _
    // Predicated region
    $region50: #{tpu_custom_call.1} parent=1 // pred_check
      _
    $region51: #{tpu_custom_call.1} parent=1 // pred_check_branch
      %108 = sbr.rel (0) target = $region53
    $region52: #{tpu_custom_call.1} parent=1 // pred_region
      _
    $region53: #{tpu_custom_call.1} parent=1 // pred_fallthru
      _
    // Predicated region
    $region54: #{tpu_custom_call.1} parent=1 // pred_check
      _
    $region55: #{tpu_custom_call.1} parent=1 // pred_check_branch
      %110 = sbr.rel (0) target = $region57
    $region56: #{tpu_custom_call.1} parent=1 // pred_region
      _
    $region57: #{tpu_custom_call.1} parent=1 // pred_fallthru
      _
    // Predicated region
    $region58: #{tpu_custom_call.1} parent=1 // pred_check
      _
    $region59: #{tpu_custom_call.1} parent=1 // pred_check_branch
      %112 = sbr.rel (0) target = $region61
    $region60: #{tpu_custom_call.1} parent=1 // pred_region
      %s114 = ssub.s32 128, 128
      %115 = vsyncadd [#allocation11], %s114
      %s117 = sshll.u32 [#allocation12], 4
      %s118 = int_to_ptr.vmem [resolvable:$true] %s117
      %120 = dma.hbm_to_vmem [thread:$0]  %s14, 128, %s118, [#allocation11]
    $region61: #{tpu_custom_call.1} parent=1 // pred_fallthru
      _
    // Predicated region
    $region62: #{tpu_custom_call.1} parent=1 // pred_check
      _
    $region63: #{tpu_custom_call.1} parent=1 // pred_check_branch
      %122 = sbr.rel (0) target = $region65
    $region64: #{tpu_custom_call.1} parent=1 // pred_region
      _
    $region65: #{tpu_custom_call.1} parent=1 // pred_fallthru
      _
    // Predicated region
    $region66: #{tpu_custom_call.1} parent=1 // pred_check
      _
    $region67: #{tpu_custom_call.1} parent=1 // pred_check_branch
      %124 = sbr.rel (0) target = $region69
    $region68: #{tpu_custom_call.1} parent=1 // pred_region
      %s126 = ssub.s32 16, 16
      %127 = vsyncadd [#allocation14], %s126
      %s129 = sshll.u32 [#allocation13], 4
      %s130 = int_to_ptr.vmem [resolvable:$true] %s129
      %132 = dma.hbm_to_vmem [thread:$0]  %s16, 16, %s130, [#allocation14]
    $region69: #{tpu_custom_call.1} parent=1 // pred_fallthru
      _
    // Predicated region
    $region70: #{tpu_custom_call.1} parent=1 // pred_check
      _
    $region71: #{tpu_custom_call.1} parent=1 // pred_check_branch
      %134 = sbr.rel (0) target = $region73
    $region72: #{tpu_custom_call.1} parent=1 // pred_region
      _
    $region73: #{tpu_custom_call.1} parent=1 // pred_fallthru
      _
    // Predicated region
    $region74: #{tpu_custom_call.1} parent=1 // pred_check
      _
    $region75: #{tpu_custom_call.1} parent=1 // pred_check_branch
      %136 = sbr.rel (0) target = $region77
    $region76: #{tpu_custom_call.1} parent=1 // pred_region
      _
    $region77: #{tpu_custom_call.1} parent=1 // pred_fallthru
      _
    // Predicated region
    $region78: #{tpu_custom_call.1} parent=1 // pred_check
      _
    $region79: #{tpu_custom_call.1} parent=1 // pred_check_branch
      %138 = sbr.rel (0) target = $region81
    $region80: #{tpu_custom_call.1} parent=1 // pred_region
      %139 = dma.done [#allocation3], 512
    $region81: #{tpu_custom_call.1} parent=1 // pred_fallthru
      _
    // Predicated region
    $region82: #{tpu_custom_call.1} parent=1 // pred_check
      _
    $region83: #{tpu_custom_call.1} parent=1 // pred_check_branch
      %141 = sbr.rel (0) target = $region85
    $region84: #{tpu_custom_call.1} parent=1 // pred_region
      %142 = dma.done [#allocation5], 16
    $region85: #{tpu_custom_call.1} parent=1 // pred_fallthru
      _
    // Predicated region
    $region86: #{tpu_custom_call.1} parent=1 // pred_check
      _
    $region87: #{tpu_custom_call.1} parent=1 // pred_check_branch
      %144 = sbr.rel (0) target = $region89
    $region88: #{tpu_custom_call.1} parent=1 // pred_region
      %145 = dma.done [#allocation5], 16
    $region89: #{tpu_custom_call.1} parent=1 // pred_fallthru
      _
    // Predicated region
    $region90: #{tpu_custom_call.1} parent=1 // pred_check
      _
    $region91: #{tpu_custom_call.1} parent=1 // pred_check_branch
      %147 = sbr.rel (0) target = $region93
    $region92: #{tpu_custom_call.1} parent=1 // pred_region
      %148 = dma.done [#allocation8], 16
    $region93: #{tpu_custom_call.1} parent=1 // pred_fallthru
      _
    // Predicated region
    $region94: #{tpu_custom_call.1} parent=1 // pred_check
      _
    $region95: #{tpu_custom_call.1} parent=1 // pred_check_branch
      %150 = sbr.rel (0) target = $region97
    $region96: #{tpu_custom_call.1} parent=1 // pred_region
      %151 = dma.done [#allocation8], 4096
    $region97: #{tpu_custom_call.1} parent=1 // pred_fallthru
      _
    // Predicated region
    $region98: #{tpu_custom_call.1} parent=1 // pred_check
      _
    $region99: #{tpu_custom_call.1} parent=1 // pred_check_branch
      %153 = sbr.rel (0) target = $region101
    $region100: #{tpu_custom_call.1} parent=1 // pred_region
      %154 = dma.done [#allocation11], 16384
    $region101: #{tpu_custom_call.1} parent=1 // pred_fallthru
      _
    // Predicated region
    $region102: #{tpu_custom_call.1} parent=1 // pred_check
      _
    $region103: #{tpu_custom_call.1} parent=1 // pred_check_branch
      %156 = sbr.rel (0) target = $region105
    $region104: #{tpu_custom_call.1} parent=1 // pred_region
      %157 = dma.done [#allocation11], 128
    $region105: #{tpu_custom_call.1} parent=1 // pred_fallthru
      _
    // Predicated region
    $region106: #{tpu_custom_call.1} parent=1 // pred_check
      _
    $region107: #{tpu_custom_call.1} parent=1 // pred_check_branch
      %159 = sbr.rel (0) target = $region109
    $region108: #{tpu_custom_call.1} parent=1 // pred_region
      %160 = dma.done [#allocation14], 16
    $region109: #{tpu_custom_call.1} parent=1 // pred_fallthru
      _
    %v162 = vld [vmem:[%s0] sm:$0xff]
    %v163 = vld [vmem:[%s1] sm:$0x1]
    %v164 = vld [vmem:[%s2] sm:$0x1]
    %v165 = vld [vmem:[%s3] sm:$0x1]
    %v166 = vld [vmem:[%s4] sm:$0x1]
    %v167 = vld [vmem:[%s5] sm:$0x1]
    %169 = vset.pattern.permute.xlu0 0
    %170 = vperm.xlu0 %169, %v162
    %v171 = vpop.permute.xlu0 %170
    %v174 = vlaneseq
    %v175 = vshrl.u32 %v174, 7
    %v176 = vsub.s32 0, %v175
    %v177 = vrot.slane %v164, %v176
    %v179 = vmul.f32 %v171, %v177
    %v181 = vlaneseq
    %v182 = vshrl.u32 %v181, 7
    %v183 = vsub.s32 0, %v182
    %v184 = vrot.slane %v165, %v183
    %v186 = vadd.f32 %v184, %v179
    %v187 = vmax.f32 %v186, 0.0
    %v189 = vlaneseq
    %v190 = vshrl.u32 %v189, 7
    %v191 = vsub.s32 0, %v190
    %v192 = vrot.slane %v166, %v191
    %v194 = vmul.f32 %v187, %v192
    %v196 = vlaneseq
    %v197 = vshrl.u32 %v196, 7
    %v198 = vsub.s32 0, %v197
    %v199 = vrot.slane %v167, %v198
    %v201 = vadd.f32 %v194, %v199
    %v203 = vlaneseq
    %v204 = vshrl.u32 %v203, 7
    %v205 = vsub.s32 0, %v204
    %v206 = vrot.slane %v163, %v205
    %v208 = vmul.f32 %v171, %v206
    %v209 = vadd.f32 %v184, %v208
    %210 = vset.pattern.permute.xlu0 1
    %211 = vperm.xlu0 %210, %v162
    %v212 = vpop.permute.xlu0 %211
    %v214 = vmul.f32 %v212, %v177
    %v215 = vadd.f32 %v209, %v214
    %v216 = vmax.f32 %v215, 0.0
    %v217 = vmul.f32 %v216, %v192
    %v218 = vadd.f32 %v217, %v199
    %v219 = vmul.f32 %v212, %v206
    %v220 = vadd.f32 %v184, %v219
    %221 = vset.pattern.permute.xlu0 2
    %222 = vperm.xlu0 %221, %v162
    %v223 = vpop.permute.xlu0 %222
    %v225 = vmul.f32 %v223, %v177
    %v226 = vadd.f32 %v220, %v225
    %v227 = vmax.f32 %v226, 0.0
    %v228 = vmul.f32 %v227, %v192
    %v229 = vadd.f32 %v228, %v199
    %v230 = vmul.f32 %v223, %v206
    %v231 = vadd.f32 %v184, %v230
    %232 = vset.pattern.permute.xlu0 3
    %233 = vperm.xlu0 %232, %v162
    %v234 = vpop.permute.xlu0 %233
    %v236 = vmul.f32 %v234, %v177
    %v237 = vadd.f32 %v231, %v236
    %v238 = vmax.f32 %v237, 0.0
    %v239 = vmul.f32 %v238, %v192
    %v240 = vadd.f32 %v239, %v199
    %v241 = vmul.f32 %v234, %v206
    %v242 = vadd.f32 %v184, %v241
    %243 = vset.pattern.permute.xlu0 4
    %244 = vperm.xlu0 %243, %v162
    %v245 = vpop.permute.xlu0 %244
    %v247 = vmul.f32 %v245, %v177
    %v248 = vadd.f32 %v242, %v247
    %v249 = vmax.f32 %v248, 0.0
    %v250 = vmul.f32 %v249, %v192
    %v251 = vadd.f32 %v250, %v199
    %v252 = vmul.f32 %v245, %v206
    %v253 = vadd.f32 %v184, %v252
    %254 = vset.pattern.permute.xlu0 5
    %255 = vperm.xlu0 %254, %v162
    %v256 = vpop.permute.xlu0 %255
    %v258 = vmul.f32 %v256, %v177
    %v259 = vadd.f32 %v253, %v258
    %v260 = vmax.f32 %v259, 0.0
    %v261 = vmul.f32 %v260, %v192
    %v262 = vadd.f32 %v261, %v199
    %v263 = vmul.f32 %v256, %v206
    %v264 = vadd.f32 %v184, %v263
    %265 = vset.pattern.permute.xlu0 6
    %266 = vperm.xlu0 %265, %v162
    %v267 = vpop.permute.xlu0 %266
    %v269 = vmul.f32 %v267, %v177
    %v270 = vadd.f32 %v264, %v269
    %v271 = vmax.f32 %v270, 0.0
    %v272 = vmul.f32 %v271, %v192
    %v273 = vadd.f32 %v272, %v199
    %v274 = vmul.f32 %v267, %v206
    %v275 = vadd.f32 %v184, %v274
    %276 = vset.pattern.permute.xlu0 7
    %277 = vperm.xlu0 %276, %v162
    %v278 = vpop.permute.xlu0 %277
    %v280 = vmul.f32 %v278, %v177
    %v281 = vadd.f32 %v275, %v280
    %v282 = vmax.f32 %v281, 0.0
    %v283 = vmul.f32 %v282, %v192
    %v284 = vadd.f32 %v283, %v199
    %v285 = vmul.f32 %v278, %v206
    %v286 = vadd.f32 %v184, %v285
    %v287 = vmax.f32 %v286, 0.0
    %v288 = vmul.f32 %v287, %v192
    %v289 = vadd.f32 %v288, %v199
    %300 = vrot.lane.b32.xlu0 %v201, 32
    %v301 = vpop.permute.xlu0 %300
    %302 = vrot.lane.b32.xlu0 %v218, 32
    %v303 = vpop.permute.xlu0 %302
    %304 = vrot.lane.b32.xlu0 %v229, 32
    %v305 = vpop.permute.xlu0 %304
    %306 = vrot.lane.b32.xlu0 %v240, 32
    %v307 = vpop.permute.xlu0 %306
    %308 = vrot.lane.b32.xlu0 %v251, 32
    %v309 = vpop.permute.xlu0 %308
    %310 = vrot.lane.b32.xlu0 %v262, 32
    %v311 = vpop.permute.xlu0 %310
    %312 = vrot.lane.b32.xlu0 %v273, 32
    %v313 = vpop.permute.xlu0 %312
    %314 = vrot.lane.b32.xlu0 %v284, 32
    %v315 = vpop.permute.xlu0 %314
    %316 = vrot.lane.b32.xlu0 %v289, 32
    %v317 = vpop.permute.xlu0 %316
    %318 = vrot.lane.b32.xlu0 0.0, 32
    %v319 = vpop.permute.xlu0 %318
    %vm330 = vcmask 261120
    %v331 = vsel %vm330, 0.0, %v301
    %v332 = vsel %vm330, %v201, %v303
    %v333 = vsel %vm330, %v218, %v305
    %v334 = vsel %vm330, %v229, %v307
    %v335 = vsel %vm330, %v240, %v309
    %v336 = vsel %vm330, %v251, %v311
    %v337 = vsel %vm330, %v262, %v313
    %v338 = vsel %vm330, %v273, %v315
    %v339 = vsel %vm330, %v284, %v317
    %v340 = vsel %vm330, %v289, %v319
    %v341 = vpack.c.bf16 %v332, %v331
    %v342 = vpack.c.bf16 %v334, %v333
    %v343 = vpack.c.bf16 %v336, %v335
    %v344 = vpack.c.bf16 %v338, %v337
    %v345 = vpack.c.bf16 %v340, %v339
    %v346 = vld [vmem:[#allocation2] sm:$0xf]
    %v347 = vld [vmem:[#allocation2 + $0x4] sm:$0xf]
    %v348 = vld [vmem:[#allocation2 + $0x8] sm:$0xf]
    %v349 = vld [vmem:[#allocation2 + $0xc] sm:$0xf]
    %v350 = vld [vmem:[#allocation2 + $0x10] sm:$0xf]
    %v351 = vld [vmem:[#allocation2 + $0x14] sm:$0xf]
    %v352 = vld [vmem:[#allocation2 + $0x18] sm:$0xf]
    %v353 = vld [vmem:[#allocation2 + $0x1c] sm:$0xf]
    %v354 = vld [vmem:[#allocation4] sm:$0x1]
    %v356 = vlaneseq
    %v357 = vshrl.u32 %v356, 7
    %v358 = vsub.s32 0, %v357
    %v359 = vrot.slane %v354, %v358
    %v369 = vunpack.c.l.b16 %v346
    %v370 = vunpack.c.l.b16 %v347
    %v371 = vunpack.c.l.b16 %v348
    %v372 = vunpack.c.l.b16 %v349
    %v373 = vunpack.c.l.b16 %v350
    %v374 = vunpack.c.l.b16 %v351
    %v375 = vunpack.c.l.b16 %v352
    %v376 = vunpack.c.l.b16 %v353
    %v377 = vpack.c.b16 %v370, %v369
    %v378 = vpack.c.b16 %v372, %v371
    %v379 = vpack.c.b16 %v374, %v373
    %v380 = vpack.c.b16 %v376, %v375
    %vm385 = vcmask 523264
    %v387 = vsel %vm385, %v341, 0
    %v390 = vsel %vm385, %v342, 0
    %v393 = vsel %vm385, %v343, 0
    %v396 = vsel %vm385, %v344, 0
    %v399 = vsel %vm385, %v345, 0
    %401 = vmatprep.subr.bf16.mxu0 0
    %402 = vmatpush1.bf16.msra.mxu0 0
    %403 = vmatprep.subr.bf16.mxu0 0
    %404 = vmatpush1.bf16.msra.mxu0 0
    %405 = vmatprep.subr.bf16.mxu0 0
    %406 = vmatpush1.bf16.msra.mxu0 0
    %407 = vmatprep.subr.bf16.mxu0 0
    %408 = vmatpush1.bf16.msra.mxu0 0
    %409 = vmatprep.subr.bf16.mxu0 0
    %410 = vmatpush1.bf16.msra.mxu0 %v380
    %411 = vmatprep.subr.bf16.mxu0 0
    %412 = vmatpush1.bf16.msra.mxu0 %v379
    %413 = vmatprep.subr.bf16.mxu0 0
    %414 = vmatpush1.bf16.msra.mxu0 %v378
    %415 = vmatprep.subr.bf16.mxu0 0
    %416 = vmatpush1.bf16.msra.mxu0 %v377
    %417 = vmatprep.subr.bf16.mxu0 0
    %418 = vmatpush2.bf16.msra.mxu0 0
    %419 = vmatprep.subr.bf16.mxu0 0
    %420 = vmatpush2.bf16.msra.mxu0 0
    %421 = vmatprep.subr.bf16.mxu0 0
    %422 = vmatpush2.bf16.msra.mxu0 0
    %423 = vmatprep.subr.bf16.mxu0 0
    %424 = vmatpush2.bf16.msra.mxu0 0
    %425 = vmatprep.subr.bf16.mxu0 0
    %426 = vmatpush2.bf16.msra.mxu0 0
    %427 = vmatprep.subr.bf16.mxu0 0
    %428 = vmatpush2.bf16.msra.mxu0 0
    %429 = vmatprep.subr.bf16.mxu0 0
    %430 = vmatpush2.bf16.msra.mxu0 0
    %431 = vmatprep.subr.bf16.mxu0 0
    %432 = vmatpush2.bf16.msra.mxu0 0
    %433 = vmatprep.mubr.bf16.mxu0 0
    %434 = vmatmul.mubr.bf16.gmra.mxu0 %v387
    %v435 = vpop.f32.mrf.mxu0
    %v436 = vadd.f32 %v359, %v435
    %v437 = vpop.f32.mrf.mxu0
    %v438 = vpop.f32.mrf.mxu0
    %v439 = vadd.f32 %v359, %v438
    %v440 = vpop.f32.mrf.mxu0
    %441 = vmatprep.mubr.bf16.mxu0 0
    %442 = vmatmul.mubr.bf16.gmra.mxu0 %v390
    %v443 = vpop.f32.mrf.mxu0
    %v444 = vadd.f32 %v359, %v443
    %v445 = vpop.f32.mrf.mxu0
    %v446 = vpop.f32.mrf.mxu0
    %v447 = vadd.f32 %v359, %v446
    %v448 = vpop.f32.mrf.mxu0
    %449 = vmatprep.mubr.bf16.mxu0 0
    %450 = vmatmul.mubr.bf16.gmra.mxu0 %v393
    %v451 = vpop.f32.mrf.mxu0
    %v452 = vadd.f32 %v359, %v451
    %v453 = vpop.f32.mrf.mxu0
    %v454 = vpop.f32.mrf.mxu0
    %v455 = vadd.f32 %v359, %v454
    %v456 = vpop.f32.mrf.mxu0
    %457 = vmatprep.mubr.bf16.mxu0 0
    %458 = vmatmul.mubr.bf16.gmra.mxu0 %v396
    %v459 = vpop.f32.mrf.mxu0
    %v460 = vadd.f32 %v359, %v459
    %v461 = vpop.f32.mrf.mxu0
    %v462 = vpop.f32.mrf.mxu0
    %v463 = vadd.f32 %v359, %v462
    %v464 = vpop.f32.mrf.mxu0
    %465 = vmatprep.mubr.bf16.mxu0 0
    %466 = vmatmul.mubr.bf16.gmra.mxu0 %v399
    %v467 = vpop.f32.mrf.mxu0
    %v468 = vadd.f32 %v359, %v467
    %v469 = vpop.f32.mrf.mxu0
    %v470 = vpop.f32.mrf.mxu0
    %v471 = vadd.f32 %v359, %v470
    %v472 = vpop.f32.mrf.mxu0
    %473 = vdwg.mxu0
    %v474 = vmax.f32 %v436, 0.0
    %v475 = vmax.f32 %v439, 0.0
    %v476 = vmax.f32 %v444, 0.0
    %v477 = vmax.f32 %v447, 0.0
    %v478 = vmax.f32 %v452, 0.0
    %v479 = vmax.f32 %v455, 0.0
    %v480 = vmax.f32 %v460, 0.0
    %v481 = vmax.f32 %v463, 0.0
    %v482 = vmax.f32 %v468, 0.0
    %v483 = vmax.f32 %v471, 0.0
    %v484 = vld [vmem:[#allocation6] sm:$0x1]
    %v486 = vlaneseq
    %v487 = vshrl.u32 %v486, 7
    %v488 = vsub.s32 0, %v487
    %v489 = vrot.slane %v484, %v488
    %v491 = vmul.f32 %v474, %v489
    %v492 = vmul.f32 %v475, %v489
    %v493 = vmul.f32 %v476, %v489
    %v494 = vmul.f32 %v477, %v489
    %v495 = vmul.f32 %v478, %v489
    %v496 = vmul.f32 %v479, %v489
    %v497 = vmul.f32 %v480, %v489
    %v498 = vmul.f32 %v481, %v489
    %v499 = vmul.f32 %v482, %v489
    %v500 = vmul.f32 %v483, %v489
    %v501 = vld [vmem:[#allocation7] sm:$0x1]
    %v503 = vlaneseq
    %v504 = vshrl.u32 %v503, 7
    %v505 = vsub.s32 0, %v504
    %v506 = vrot.slane %v501, %v505
    %v508 = vadd.f32 %v491, %v506
    %v509 = vadd.f32 %v492, %v506
    %v510 = vadd.f32 %v493, %v506
    %v511 = vadd.f32 %v494, %v506
    %v512 = vadd.f32 %v495, %v506
    %v513 = vadd.f32 %v496, %v506
    %v514 = vadd.f32 %v497, %v506
    %v515 = vadd.f32 %v498, %v506
    %v516 = vadd.f32 %v499, %v506
    %v517 = vadd.f32 %v500, %v506
    %v518 = vmax.f32 %v508, %v509
    %v519 = vmax.f32 %v510, %v511
    %v520 = vmax.f32 %v512, %v513
    %v521 = vmax.f32 %v514, %v515
    %v522 = vmax.f32 %v516, %v517
    %v523 = vpack.c.bf16 %v519, %v518
    %v524 = vpack.c.bf16 %v521, %v520
    %v525 = vpack.c.bf16 %v522, %v522
    %v526 = vld [vmem:[#allocation9] sm:$0xff]
    %v527 = vld [vmem:[#allocation9 + $0x8] sm:$0xff]
    %v528 = vld [vmem:[#allocation9 + $0x10] sm:$0xff]
    %v529 = vld [vmem:[#allocation9 + $0x18] sm:$0xff]
    %v530 = vld [vmem:[#allocation9 + $0x20] sm:$0xff]
    %v531 = vld [vmem:[#allocation9 + $0x28] sm:$0xff]
    %v532 = vld [vmem:[#allocation9 + $0x30] sm:$0xff]
    %v533 = vld [vmem:[#allocation9 + $0x38] sm:$0xff]
    %v534 = vld [vmem:[#allocation9 + $0x40] sm:$0xff]
    %v535 = vld [vmem:[#allocation9 + $0x48] sm:$0xff]
    %v536 = vld [vmem:[#allocation9 + $0x50] sm:$0xff]
    %v537 = vld [vmem:[#allocation9 + $0x58] sm:$0xff]
    %v538 = vld [vmem:[#allocation9 + $0x60] sm:$0xff]
    %v539 = vld [vmem:[#allocation9 + $0x68] sm:$0xff]
    %v540 = vld [vmem:[#allocation9 + $0x70] sm:$0xff]
    %v541 = vld [vmem:[#allocation9 + $0x78] sm:$0xff]
    %v542 = vld [vmem:[#allocation9 + $0x80] sm:$0xff]
    %v543 = vld [vmem:[#allocation9 + $0x88] sm:$0xff]
    %v544 = vld [vmem:[#allocation9 + $0x90] sm:$0xff]
    %v545 = vld [vmem:[#allocation9 + $0x98] sm:$0xff]
    %v546 = vld [vmem:[#allocation9 + $0xa0] sm:$0xff]
    %v547 = vld [vmem:[#allocation9 + $0xa8] sm:$0xff]
    %v548 = vld [vmem:[#allocation9 + $0xb0] sm:$0xff]
    %v549 = vld [vmem:[#allocation9 + $0xb8] sm:$0xff]
    %v550 = vld [vmem:[#allocation9 + $0xc0] sm:$0xff]
    %v551 = vld [vmem:[#allocation9 + $0xc8] sm:$0xff]
    %v552 = vld [vmem:[#allocation9 + $0xd0] sm:$0xff]
    %v553 = vld [vmem:[#allocation9 + $0xd8] sm:$0xff]
    %v554 = vld [vmem:[#allocation9 + $0xe0] sm:$0xff]
    %v555 = vld [vmem:[#allocation9 + $0xe8] sm:$0xff]
    %v556 = vld [vmem:[#allocation9 + $0xf0] sm:$0xff]
    %v557 = vld [vmem:[#allocation9 + $0xf8] sm:$0xff]
    %v558 = vld [vmem:[%s12] sm:$0xff]
    %v560 = vlaneseq
    %v561 = vshrl.u32 %v560, 7
    %v562 = vsub.s32 0, %v561
    %v563 = vrot.slane %v558, %v562
    %v564 = vlaneseq
    %v565 = vshrl.u32 %v564, 7
    %v566 = vsub.s32 1, %v565
    %v567 = vrot.slane %v558, %v566
    %v568 = vlaneseq
    %v569 = vshrl.u32 %v568, 7
    %v570 = vsub.s32 2, %v569
    %v571 = vrot.slane %v558, %v570
    %v572 = vlaneseq
    %v573 = vshrl.u32 %v572, 7
    %v574 = vsub.s32 3, %v573
    %v575 = vrot.slane %v558, %v574
    %v576 = vlaneseq
    %v577 = vshrl.u32 %v576, 7
    %v578 = vsub.s32 4, %v577
    %v579 = vrot.slane %v558, %v578
    %v580 = vlaneseq
    %v581 = vshrl.u32 %v580, 7
    %v582 = vsub.s32 5, %v581
    %v583 = vrot.slane %v558, %v582
    %v584 = vlaneseq
    %v585 = vshrl.u32 %v584, 7
    %v586 = vsub.s32 6, %v585
    %v587 = vrot.slane %v558, %v586
    %v588 = vlaneseq
    %v589 = vshrl.u32 %v588, 7
    %v590 = vsub.s32 7, %v589
    %v591 = vrot.slane %v558, %v590
    %v632 = vunpack.c.l.b16 %v526
    %v633 = vunpack.c.h.b16 %v526
    %v634 = vunpack.c.l.b16 %v527
    %v635 = vunpack.c.h.b16 %v527
    %v636 = vunpack.c.l.b16 %v528
    %v637 = vunpack.c.h.b16 %v528
    %v638 = vunpack.c.l.b16 %v529
    %v639 = vunpack.c.h.b16 %v529
    %v640 = vunpack.c.l.b16 %v530
    %v641 = vunpack.c.h.b16 %v530
    %v642 = vunpack.c.l.b16 %v531
    %v643 = vunpack.c.h.b16 %v531
    %v644 = vunpack.c.l.b16 %v532
    %v645 = vunpack.c.h.b16 %v532
    %v646 = vunpack.c.l.b16 %v533
    %v647 = vunpack.c.h.b16 %v533
    %v648 = vunpack.c.l.b16 %v534
    %v649 = vunpack.c.h.b16 %v534
    %v650 = vunpack.c.l.b16 %v535
    %v651 = vunpack.c.h.b16 %v535
    %v652 = vunpack.c.l.b16 %v536
    %v653 = vunpack.c.h.b16 %v536
    %v654 = vunpack.c.l.b16 %v537
    %v655 = vunpack.c.h.b16 %v537
    %v656 = vunpack.c.l.b16 %v538
    %v657 = vunpack.c.h.b16 %v538
    %v658 = vunpack.c.l.b16 %v539
    %v659 = vunpack.c.h.b16 %v539
    %v660 = vunpack.c.l.b16 %v540
    %v661 = vunpack.c.h.b16 %v540
    %v662 = vunpack.c.l.b16 %v541
    %v663 = vunpack.c.h.b16 %v541
    %v664 = vunpack.c.l.b16 %v542
    %v665 = vunpack.c.h.b16 %v542
    %v666 = vunpack.c.l.b16 %v543
    %v667 = vunpack.c.h.b16 %v543
    %v668 = vunpack.c.l.b16 %v544
    %v669 = vunpack.c.h.b16 %v544
    %v670 = vunpack.c.l.b16 %v545
    %v671 = vunpack.c.h.b16 %v545
    %v672 = vunpack.c.l.b16 %v546
    %v673 = vunpack.c.h.b16 %v546
    %v674 = vunpack.c.l.b16 %v547
    %v675 = vunpack.c.h.b16 %v547
    %v676 = vunpack.c.l.b16 %v548
    %v677 = vunpack.c.h.b16 %v548
    %v678 = vunpack.c.l.b16 %v549
    %v679 = vunpack.c.h.b16 %v549
    %v680 = vunpack.c.l.b16 %v550
    %v681 = vunpack.c.h.b16 %v550
    %v682 = vunpack.c.l.b16 %v551
    %v683 = vunpack.c.h.b16 %v551
    %v684 = vunpack.c.l.b16 %v552
    %v685 = vunpack.c.h.b16 %v552
    %v686 = vunpack.c.l.b16 %v553
    %v687 = vunpack.c.h.b16 %v553
    %v688 = vunpack.c.l.b16 %v554
    %v689 = vunpack.c.h.b16 %v554
    %v690 = vunpack.c.l.b16 %v555
    %v691 = vunpack.c.h.b16 %v555
    %v692 = vunpack.c.l.b16 %v556
    %v693 = vunpack.c.h.b16 %v556
    %v694 = vunpack.c.l.b16 %v557
    %v695 = vunpack.c.h.b16 %v557
    %v696 = vpack.c.b16 %v640, %v632
    %v697 = vpack.c.b16 %v641, %v633
    %v698 = vpack.c.b16 %v642, %v634
    %v699 = vpack.c.b16 %v643, %v635
    %v700 = vpack.c.b16 %v644, %v636
    %v701 = vpack.c.b16 %v645, %v637
    %v702 = vpack.c.b16 %v646, %v638
    %v703 = vpack.c.b16 %v647, %v639
    %v704 = vpack.c.b16 %v656, %v648
    %v705 = vpack.c.b16 %v657, %v649
    %v706 = vpack.c.b16 %v658, %v650
    %v707 = vpack.c.b16 %v659, %v651
    %v708 = vpack.c.b16 %v660, %v652
    %v709 = vpack.c.b16 %v661, %v653
    %v710 = vpack.c.b16 %v662, %v654
    %v711 = vpack.c.b16 %v663, %v655
    %v712 = vpack.c.b16 %v672, %v664
    %v713 = vpack.c.b16 %v673, %v665
    %v714 = vpack.c.b16 %v674, %v666
    %v715 = vpack.c.b16 %v675, %v667
    %v716 = vpack.c.b16 %v676, %v668
    %v717 = vpack.c.b16 %v677, %v669
    %v718 = vpack.c.b16 %v678, %v670
    %v719 = vpack.c.b16 %v679, %v671
    %v720 = vpack.c.b16 %v688, %v680
    %v721 = vpack.c.b16 %v689, %v681
    %v722 = vpack.c.b16 %v690, %v682
    %v723 = vpack.c.b16 %v691, %v683
    %v724 = vpack.c.b16 %v692, %v684
    %v725 = vpack.c.b16 %v693, %v685
    %v726 = vpack.c.b16 %v694, %v686
    %v727 = vpack.c.b16 %v695, %v687
    %v761 = vsel %vm385, %v523, 0
    %v764 = vsel %vm385, %v524, 0
    %v767 = vsel %vm385, %v525, 0
    %769 = vmatprep.subr.bf16.mxu0 0
    %770 = vmatpush1.bf16.msra.mxu0 0
    %771 = vmatprep.subr.bf16.mxu0 0
    %772 = vmatpush1.bf16.msra.mxu0 0
    %773 = vmatprep.subr.bf16.mxu0 0
    %774 = vmatpush1.bf16.msra.mxu0 0
    %775 = vmatprep.subr.bf16.mxu0 0
    %776 = vmatpush1.bf16.msra.mxu0 0
    %777 = vmatprep.subr.bf16.mxu0 %v721
    %778 = vmatpush1.bf16.msra.mxu0 %v720
    %779 = vmatprep.subr.bf16.mxu0 %v713
    %780 = vmatpush1.bf16.msra.mxu0 %v712
    %781 = vmatprep.subr.bf16.mxu0 %v705
    %782 = vmatpush1.bf16.msra.mxu0 %v704
    %783 = vmatprep.subr.bf16.mxu0 %v697
    %784 = vmatpush1.bf16.msra.mxu0 %v696
    %785 = vmatprep.subr.bf16.mxu0 0
    %786 = vmatpush2.bf16.msra.mxu0 0
    %787 = vmatprep.subr.bf16.mxu0 0
    %788 = vmatpush2.bf16.msra.mxu0 0
    %789 = vmatprep.subr.bf16.mxu0 0
    %790 = vmatpush2.bf16.msra.mxu0 0
    %791 = vmatprep.subr.bf16.mxu0 0
    %792 = vmatpush2.bf16.msra.mxu0 0
    %793 = vmatprep.subr.bf16.mxu0 0
    %794 = vmatpush2.bf16.msra.mxu0 0
    %795 = vmatprep.subr.bf16.mxu0 0
    %796 = vmatpush2.bf16.msra.mxu0 0
    %797 = vmatprep.subr.bf16.mxu0 0
    %798 = vmatpush2.bf16.msra.mxu0 0
    %799 = vmatprep.subr.bf16.mxu0 0
    %800 = vmatpush2.bf16.msra.mxu0 0
    %801 = vmatprep.mubr.bf16.mxu0 0
    %802 = vmatmul.mubr.bf16.gmra.mxu0 %v761
    %v803 = vpop.f32.mrf.mxu0
    %v804 = vadd.f32 %v563, %v803
    %v805 = vpop.f32.mrf.mxu0
    %v806 = vadd.f32 %v567, %v805
    %v807 = vpop.f32.mrf.mxu0
    %v808 = vadd.f32 %v563, %v807
    %v809 = vpop.f32.mrf.mxu0
    %v810 = vadd.f32 %v567, %v809
    %811 = vmatprep.mubr.bf16.mxu0 0
    %812 = vmatmul.mubr.bf16.gmra.mxu0 %v764
    %v813 = vpop.f32.mrf.mxu0
    %v814 = vadd.f32 %v563, %v813
    %v815 = vpop.f32.mrf.mxu0
    %v816 = vadd.f32 %v567, %v815
    %v817 = vpop.f32.mrf.mxu0
    %v818 = vadd.f32 %v563, %v817
    %v819 = vpop.f32.mrf.mxu0
    %v820 = vadd.f32 %v567, %v819
    %821 = vmatprep.mubr.bf16.mxu0 0
    %822 = vmatmul.mubr.bf16.gmra.mxu0 %v767
    %v823 = vpop.f32.mrf.mxu0
    %v824 = vadd.f32 %v563, %v823
    %v825 = vpop.f32.mrf.mxu0
    %v826 = vadd.f32 %v567, %v825
    %v827 = vpop.f32.mrf.mxu0
    %v828 = vpop.f32.mrf.mxu0
    %829 = vdwg.mxu0
    %830 = vmatprep.subr.bf16.mxu0 0
    %831 = vmatpush1.bf16.msra.mxu0 0
    %832 = vmatprep.subr.bf16.mxu0 0
    %833 = vmatpush1.bf16.msra.mxu0 0
    %834 = vmatprep.subr.bf16.mxu0 0
    %835 = vmatpush1.bf16.msra.mxu0 0
    %836 = vmatprep.subr.bf16.mxu0 0
    %837 = vmatpush1.bf16.msra.mxu0 0
    %838 = vmatprep.subr.bf16.mxu0 %v723
    %839 = vmatpush1.bf16.msra.mxu0 %v722
    %840 = vmatprep.subr.bf16.mxu0 %v715
    %841 = vmatpush1.bf16.msra.mxu0 %v714
    %842 = vmatprep.subr.bf16.mxu0 %v707
    %843 = vmatpush1.bf16.msra.mxu0 %v706
    %844 = vmatprep.subr.bf16.mxu0 %v699
    %845 = vmatpush1.bf16.msra.mxu0 %v698
    %846 = vmatprep.subr.bf16.mxu0 0
    %847 = vmatpush2.bf16.msra.mxu0 0
    %848 = vmatprep.subr.bf16.mxu0 0
    %849 = vmatpush2.bf16.msra.mxu0 0
    %850 = vmatprep.subr.bf16.mxu0 0
    %851 = vmatpush2.bf16.msra.mxu0 0
    %852 = vmatprep.subr.bf16.mxu0 0
    %853 = vmatpush2.bf16.msra.mxu0 0
    %854 = vmatprep.subr.bf16.mxu0 0
    %855 = vmatpush2.bf16.msra.mxu0 0
    %856 = vmatprep.subr.bf16.mxu0 0
    %857 = vmatpush2.bf16.msra.mxu0 0
    %858 = vmatprep.subr.bf16.mxu0 0
    %859 = vmatpush2.bf16.msra.mxu0 0
    %860 = vmatprep.subr.bf16.mxu0 0
    %861 = vmatpush2.bf16.msra.mxu0 0
    %862 = vmatprep.mubr.bf16.mxu0 0
    %863 = vmatmul.mubr.bf16.gmra.mxu0 %v761
    %v864 = vpop.f32.mrf.mxu0
    %v865 = vpop.f32.mrf.mxu0
    %v866 = vpop.f32.mrf.mxu0
    %v867 = vadd.f32 %v571, %v866
    %v868 = vpop.f32.mrf.mxu0
    %v869 = vadd.f32 %v575, %v868
    %870 = vmatprep.mubr.bf16.mxu0 0
    %871 = vmatmul.mubr.bf16.gmra.mxu0 %v764
    %v872 = vpop.f32.mrf.mxu0
    %v873 = vadd.f32 %v571, %v872
    %v874 = vpop.f32.mrf.mxu0
    %v875 = vadd.f32 %v575, %v874
    %v876 = vpop.f32.mrf.mxu0
    %v877 = vadd.f32 %v571, %v876
    %v878 = vpop.f32.mrf.mxu0
    %v879 = vadd.f32 %v575, %v878
    %880 = vmatprep.mubr.bf16.mxu0 0
    %881 = vmatmul.mubr.bf16.gmra.mxu0 %v767
    %v882 = vpop.f32.mrf.mxu0
    %v883 = vadd.f32 %v571, %v882
    %v884 = vpop.f32.mrf.mxu0
    %v885 = vadd.f32 %v575, %v884
    %v886 = vpop.f32.mrf.mxu0
    %v887 = vpop.f32.mrf.mxu0
    %888 = vdwg.mxu0
    %889 = vmatprep.subr.bf16.mxu0 0
    %890 = vmatpush1.bf16.msra.mxu0 0
    %891 = vmatprep.subr.bf16.mxu0 0
    %892 = vmatpush1.bf16.msra.mxu0 0
    %893 = vmatprep.subr.bf16.mxu0 0
    %894 = vmatpush1.bf16.msra.mxu0 0
    %895 = vmatprep.subr.bf16.mxu0 0
    %896 = vmatpush1.bf16.msra.mxu0 0
    %897 = vmatprep.subr.bf16.mxu0 %v725
    %898 = vmatpush1.bf16.msra.mxu0 %v724
    %899 = vmatprep.subr.bf16.mxu0 %v717
    %900 = vmatpush1.bf16.msra.mxu0 %v716
    %901 = vmatprep.subr.bf16.mxu0 %v709
    %902 = vmatpush1.bf16.msra.mxu0 %v708
    %903 = vmatprep.subr.bf16.mxu0 %v701
    %904 = vmatpush1.bf16.msra.mxu0 %v700
    %905 = vmatprep.subr.bf16.mxu0 0
    %906 = vmatpush2.bf16.msra.mxu0 0
    %907 = vmatprep.subr.bf16.mxu0 0
    %908 = vmatpush2.bf16.msra.mxu0 0
    %909 = vmatprep.subr.bf16.mxu0 0
    %910 = vmatpush2.bf16.msra.mxu0 0
    %911 = vmatprep.subr.bf16.mxu0 0
    %912 = vmatpush2.bf16.msra.mxu0 0
    %913 = vmatprep.subr.bf16.mxu0 0
    %914 = vmatpush2.bf16.msra.mxu0 0
    %915 = vmatprep.subr.bf16.mxu0 0
    %916 = vmatpush2.bf16.msra.mxu0 0
    %917 = vmatprep.subr.bf16.mxu0 0
    %918 = vmatpush2.bf16.msra.mxu0 0
    %919 = vmatprep.subr.bf16.mxu0 0
    %920 = vmatpush2.bf16.msra.mxu0 0
    %921 = vmatprep.mubr.bf16.mxu0 0
    %922 = vmatmul.mubr.bf16.gmra.mxu0 %v761
    %v923 = vpop.f32.mrf.mxu0
    %v924 = vadd.f32 %v579, %v923
    %v925 = vpop.f32.mrf.mxu0
    %v926 = vadd.f32 %v583, %v925
    %v927 = vpop.f32.mrf.mxu0
    %v928 = vadd.f32 %v579, %v927
    %v929 = vpop.f32.mrf.mxu0
    %v930 = vadd.f32 %v583, %v929
    %931 = vmatprep.mubr.bf16.mxu0 0
    %932 = vmatmul.mubr.bf16.gmra.mxu0 %v764
    %v933 = vpop.f32.mrf.mxu0
    %v934 = vadd.f32 %v579, %v933
    %v935 = vpop.f32.mrf.mxu0
    %v936 = vadd.f32 %v583, %v935
    %v937 = vpop.f32.mrf.mxu0
    %v938 = vadd.f32 %v579, %v937
    %v939 = vpop.f32.mrf.mxu0
    %v940 = vadd.f32 %v583, %v939
    %941 = vmatprep.mubr.bf16.mxu0 0
    %942 = vmatmul.mubr.bf16.gmra.mxu0 %v767
    %v943 = vpop.f32.mrf.mxu0
    %v944 = vadd.f32 %v579, %v943
    %v945 = vpop.f32.mrf.mxu0
    %v946 = vadd.f32 %v583, %v945
    %v947 = vpop.f32.mrf.mxu0
    %v948 = vpop.f32.mrf.mxu0
    %949 = vdwg.mxu0
    %950 = vmatprep.subr.bf16.mxu0 0
    %951 = vmatpush1.bf16.msra.mxu0 0
    %952 = vmatprep.subr.bf16.mxu0 0
    %953 = vmatpush1.bf16.msra.mxu0 0
    %954 = vmatprep.subr.bf16.mxu0 0
    %955 = vmatpush1.bf16.msra.mxu0 0
    %956 = vmatprep.subr.bf16.mxu0 0
    %957 = vmatpush1.bf16.msra.mxu0 0
    %958 = vmatprep.subr.bf16.mxu0 %v727
    %959 = vmatpush1.bf16.msra.mxu0 %v726
    %960 = vmatprep.subr.bf16.mxu0 %v719
    %961 = vmatpush1.bf16.msra.mxu0 %v718
    %962 = vmatprep.subr.bf16.mxu0 %v711
    %963 = vmatpush1.bf16.msra.mxu0 %v710
    %964 = vmatprep.subr.bf16.mxu0 %v703
    %965 = vmatpush1.bf16.msra.mxu0 %v702
    %966 = vmatprep.subr.bf16.mxu0 0
    %967 = vmatpush2.bf16.msra.mxu0 0
    %968 = vmatprep.subr.bf16.mxu0 0
    %969 = vmatpush2.bf16.msra.mxu0 0
    %970 = vmatprep.subr.bf16.mxu0 0
    %971 = vmatpush2.bf16.msra.mxu0 0
    %972 = vmatprep.subr.bf16.mxu0 0
    %973 = vmatpush2.bf16.msra.mxu0 0
    %974 = vmatprep.subr.bf16.mxu0 0
    %975 = vmatpush2.bf16.msra.mxu0 0
    %976 = vmatprep.subr.bf16.mxu0 0
    %977 = vmatpush2.bf16.msra.mxu0 0
    %978 = vmatprep.subr.bf16.mxu0 0
    %979 = vmatpush2.bf16.msra.mxu0 0
    %980 = vmatprep.subr.bf16.mxu0 0
    %981 = vmatpush2.bf16.msra.mxu0 0
    %982 = vmatprep.mubr.bf16.mxu0 0
    %983 = vmatmul.mubr.bf16.gmra.mxu0 %v761
    %v984 = vpop.f32.mrf.mxu0
    %v985 = vadd.f32 %v587, %v984
    %v986 = vpop.f32.mrf.mxu0
    %v987 = vadd.f32 %v591, %v986
    %v988 = vpop.f32.mrf.mxu0
    %v989 = vadd.f32 %v587, %v988
    %v990 = vpop.f32.mrf.mxu0
    %v991 = vadd.f32 %v591, %v990
    %992 = vmatprep.mubr.bf16.mxu0 0
    %993 = vmatmul.mubr.bf16.gmra.mxu0 %v764
    %v994 = vpop.f32.mrf.mxu0
    %v995 = vadd.f32 %v587, %v994
    %v996 = vpop.f32.mrf.mxu0
    %v997 = vadd.f32 %v591, %v996
    %v998 = vpop.f32.mrf.mxu0
    %v999 = vadd.f32 %v587, %v998
    %v1000 = vpop.f32.mrf.mxu0
    %v1001 = vadd.f32 %v591, %v1000
    %1002 = vmatprep.mubr.bf16.mxu0 0
    %1003 = vmatmul.mubr.bf16.gmra.mxu0 %v767
    %v1004 = vpop.f32.mrf.mxu0
    %v1005 = vadd.f32 %v587, %v1004
    %v1006 = vpop.f32.mrf.mxu0
    %v1007 = vadd.f32 %v591, %v1006
    %v1008 = vpop.f32.mrf.mxu0
    %v1009 = vpop.f32.mrf.mxu0
    %1010 = vdwg.mxu0
    %v1011 = vld [vmem:[#allocation10] sm:$0xff]
    %v1012 = vld [vmem:[#allocation10 + $0x8] sm:$0xff]
    %v1013 = vld [vmem:[#allocation10 + $0x10] sm:$0xff]
    %v1014 = vld [vmem:[#allocation10 + $0x18] sm:$0xff]
    %v1015 = vld [vmem:[#allocation10 + $0x20] sm:$0xff]
    %v1016 = vld [vmem:[#allocation10 + $0x28] sm:$0xff]
    %v1017 = vld [vmem:[#allocation10 + $0x30] sm:$0xff]
    %v1018 = vld [vmem:[#allocation10 + $0x38] sm:$0xff]
    %v1019 = vld [vmem:[#allocation10 + $0x40] sm:$0xff]
    %v1020 = vld [vmem:[#allocation10 + $0x48] sm:$0xff]
    %v1021 = vld [vmem:[#allocation10 + $0x50] sm:$0xff]
    %v1022 = vld [vmem:[#allocation10 + $0x58] sm:$0xff]
    %v1023 = vld [vmem:[#allocation10 + $0x60] sm:$0xff]
    %v1024 = vld [vmem:[#allocation10 + $0x68] sm:$0xff]
    %v1025 = vld [vmem:[#allocation10 + $0x70] sm:$0xff]
    %v1026 = vld [vmem:[#allocation10 + $0x78] sm:$0xff]
    %v1027 = vld [vmem:[#allocation10 + $0x80] sm:$0xff]
    %v1028 = vld [vmem:[#allocation10 + $0x88] sm:$0xff]
    %v1029 = vld [vmem:[#allocation10 + $0x90] sm:$0xff]
    %v1030 = vld [vmem:[#allocation10 + $0x98] sm:$0xff]
    %v1031 = vld [vmem:[#allocation10 + $0xa0] sm:$0xff]
    %v1032 = vld [vmem:[#allocation10 + $0xa8] sm:$0xff]
    %v1033 = vld [vmem:[#allocation10 + $0xb0] sm:$0xff]
    %v1034 = vld [vmem:[#allocation10 + $0xb8] sm:$0xff]
    %v1035 = vld [vmem:[#allocation10 + $0xc0] sm:$0xff]
    %v1036 = vld [vmem:[#allocation10 + $0xc8] sm:$0xff]
    %v1037 = vld [vmem:[#allocation10 + $0xd0] sm:$0xff]
    %v1038 = vld [vmem:[#allocation10 + $0xd8] sm:$0xff]
    %v1039 = vld [vmem:[#allocation10 + $0xe0] sm:$0xff]
    %v1040 = vld [vmem:[#allocation10 + $0xe8] sm:$0xff]
    %v1041 = vld [vmem:[#allocation10 + $0xf0] sm:$0xff]
    %v1042 = vld [vmem:[#allocation10 + $0xf8] sm:$0xff]
    %v1043 = vld [vmem:[#allocation10 + $0x100] sm:$0xff]
    %v1044 = vld [vmem:[#allocation10 + $0x108] sm:$0xff]
    %v1045 = vld [vmem:[#allocation10 + $0x110] sm:$0xff]
    %v1046 = vld [vmem:[#allocation10 + $0x118] sm:$0xff]
    %v1047 = vld [vmem:[#allocation10 + $0x120] sm:$0xff]
    %v1048 = vld [vmem:[#allocation10 + $0x128] sm:$0xff]
    %v1049 = vld [vmem:[#allocation10 + $0x130] sm:$0xff]
    %v1050 = vld [vmem:[#allocation10 + $0x138] sm:$0xff]
    %v1051 = vld [vmem:[#allocation10 + $0x140] sm:$0xff]
    %v1052 = vld [vmem:[#allocation10 + $0x148] sm:$0xff]
    %v1053 = vld [vmem:[#allocation10 + $0x150] sm:$0xff]
    %v1054 = vld [vmem:[#allocation10 + $0x158] sm:$0xff]
    %v1055 = vld [vmem:[#allocation10 + $0x160] sm:$0xff]
    %v1056 = vld [vmem:[#allocation10 + $0x168] sm:$0xff]
    %v1057 = vld [vmem:[#allocation10 + $0x170] sm:$0xff]
    %v1058 = vld [vmem:[#allocation10 + $0x178] sm:$0xff]
    %v1059 = vld [vmem:[#allocation10 + $0x180] sm:$0xff]
    %v1060 = vld [vmem:[#allocation10 + $0x188] sm:$0xff]
    %v1061 = vld [vmem:[#allocation10 + $0x190] sm:$0xff]
    %v1062 = vld [vmem:[#allocation10 + $0x198] sm:$0xff]
    %v1063 = vld [vmem:[#allocation10 + $0x1a0] sm:$0xff]
    %v1064 = vld [vmem:[#allocation10 + $0x1a8] sm:$0xff]
    %v1065 = vld [vmem:[#allocation10 + $0x1b0] sm:$0xff]
    %v1066 = vld [vmem:[#allocation10 + $0x1b8] sm:$0xff]
    %v1067 = vld [vmem:[#allocation10 + $0x1c0] sm:$0xff]
    %v1068 = vld [vmem:[#allocation10 + $0x1c8] sm:$0xff]
    %v1069 = vld [vmem:[#allocation10 + $0x1d0] sm:$0xff]
    %v1070 = vld [vmem:[#allocation10 + $0x1d8] sm:$0xff]
    %v1071 = vld [vmem:[#allocation10 + $0x1e0] sm:$0xff]
    %v1072 = vld [vmem:[#allocation10 + $0x1e8] sm:$0xff]
    %v1073 = vld [vmem:[#allocation10 + $0x1f0] sm:$0xff]
    %v1074 = vld [vmem:[#allocation10 + $0x1f8] sm:$0xff]
    %v1075 = vld [vmem:[#allocation10 + $0x200] sm:$0xff]
    %v1076 = vld [vmem:[#allocation10 + $0x208] sm:$0xff]
    %v1077 = vld [vmem:[#allocation10 + $0x210] sm:$0xff]
    %v1078 = vld [vmem:[#allocation10 + $0x218] sm:$0xff]
    %v1079 = vld [vmem:[#allocation10 + $0x220] sm:$0xff]
    %v1080 = vld [vmem:[#allocation10 + $0x228] sm:$0xff]
    %v1081 = vld [vmem:[#allocation10 + $0x230] sm:$0xff]
    %v1082 = vld [vmem:[#allocation10 + $0x238] sm:$0xff]
    %v1083 = vld [vmem:[#allocation10 + $0x240] sm:$0xff]
    %v1084 = vld [vmem:[#allocation10 + $0x248] sm:$0xff]
    %v1085 = vld [vmem:[#allocation10 + $0x250] sm:$0xff]
    %v1086 = vld [vmem:[#allocation10 + $0x258] sm:$0xff]
    %v1087 = vld [vmem:[#allocation10 + $0x260] sm:$0xff]
    %v1088 = vld [vmem:[#allocation10 + $0x268] sm:$0xff]
    %v1089 = vld [vmem:[#allocation10 + $0x270] sm:$0xff]
    %v1090 = vld [vmem:[#allocation10 + $0x278] sm:$0xff]
    %v1091 = vld [vmem:[#allocation10 + $0x280] sm:$0xff]
    %v1092 = vld [vmem:[#allocation10 + $0x288] sm:$0xff]
    %v1093 = vld [vmem:[#allocation10 + $0x290] sm:$0xff]
    %v1094 = vld [vmem:[#allocation10 + $0x298] sm:$0xff]
    %v1095 = vld [vmem:[#allocation10 + $0x2a0] sm:$0xff]
    %v1096 = vld [vmem:[#allocation10 + $0x2a8] sm:$0xff]
    %v1097 = vld [vmem:[#allocation10 + $0x2b0] sm:$0xff]
    %v1098 = vld [vmem:[#allocation10 + $0x2b8] sm:$0xff]
    %v1099 = vld [vmem:[#allocation10 + $0x2c0] sm:$0xff]
    %v1100 = vld [vmem:[#allocation10 + $0x2c8] sm:$0xff]
    %v1101 = vld [vmem:[#allocation10 + $0x2d0] sm:$0xff]
    %v1102 = vld [vmem:[#allocation10 + $0x2d8] sm:$0xff]
    %v1103 = vld [vmem:[#allocation10 + $0x2e0] sm:$0xff]
    %v1104 = vld [vmem:[#allocation10 + $0x2e8] sm:$0xff]
    %v1105 = vld [vmem:[#allocation10 + $0x2f0] sm:$0xff]
    %v1106 = vld [vmem:[#allocation10 + $0x2f8] sm:$0xff]
    %v1107 = vld [vmem:[#allocation10 + $0x300] sm:$0xff]
    %v1108 = vld [vmem:[#allocation10 + $0x308] sm:$0xff]
    %v1109 = vld [vmem:[#allocation10 + $0x310] sm:$0xff]
    %v1110 = vld [vmem:[#allocation10 + $0x318] sm:$0xff]
    %v1111 = vld [vmem:[#allocation10 + $0x320] sm:$0xff]
    %v1112 = vld [vmem:[#allocation10 + $0x328] sm:$0xff]
    %v1113 = vld [vmem:[#allocation10 + $0x330] sm:$0xff]
    %v1114 = vld [vmem:[#allocation10 + $0x338] sm:$0xff]
    %v1115 = vld [vmem:[#allocation10 + $0x340] sm:$0xff]
    %v1116 = vld [vmem:[#allocation10 + $0x348] sm:$0xff]
    %v1117 = vld [vmem:[#allocation10 + $0x350] sm:$0xff]
    %v1118 = vld [vmem:[#allocation10 + $0x358] sm:$0xff]
    %v1119 = vld [vmem:[#allocation10 + $0x360] sm:$0xff]
    %v1120 = vld [vmem:[#allocation10 + $0x368] sm:$0xff]
    %v1121 = vld [vmem:[#allocation10 + $0x370] sm:$0xff]
    %v1122 = vld [vmem:[#allocation10 + $0x378] sm:$0xff]
    %v1123 = vld [vmem:[#allocation10 + $0x380] sm:$0xff]
    %v1124 = vld [vmem:[#allocation10 + $0x388] sm:$0xff]
    %v1125 = vld [vmem:[#allocation10 + $0x390] sm:$0xff]
    %v1126 = vld [vmem:[#allocation10 + $0x398] sm:$0xff]
    %v1127 = vld [vmem:[#allocation10 + $0x3a0] sm:$0xff]
    %v1128 = vld [vmem:[#allocation10 + $0x3a8] sm:$0xff]
    %v1129 = vld [vmem:[#allocation10 + $0x3b0] sm:$0xff]
    %v1130 = vld [vmem:[#allocation10 + $0x3b8] sm:$0xff]
    %v1131 = vld [vmem:[#allocation10 + $0x3c0] sm:$0xff]
    %v1132 = vld [vmem:[#allocation10 + $0x3c8] sm:$0xff]
    %v1133 = vld [vmem:[#allocation10 + $0x3d0] sm:$0xff]
    %v1134 = vld [vmem:[#allocation10 + $0x3d8] sm:$0xff]
    %v1135 = vld [vmem:[#allocation10 + $0x3e0] sm:$0xff]
    %v1136 = vld [vmem:[#allocation10 + $0x3e8] sm:$0xff]
    %v1137 = vld [vmem:[#allocation10 + $0x3f0] sm:$0xff]
    %v1138 = vld [vmem:[#allocation10 + $0x3f8] sm:$0xff]
    %v1139 = vld [vmem:[%s13] sm:$0xff]
    %v1140 = vld [vmem:[#allocation12] sm:$0xff]
    %v1141 = vtanh.pop %v804
    %v1142 = vtanh.pop %v806
    %v1143 = vtanh.pop %v924
    %v1144 = vtanh.pop %v926
    %v1145 = vtanh.pop %v985
    %v1146 = vtanh.pop %v987
    %v1148 = vlaneseq
    %v1149 = vshrl.u32 %v1148, 7
    %v1150 = vsub.s32 0, %v1149
    %v1151 = vrot.slane %v1139, %v1150
    %v1152 = vlaneseq
    %v1153 = vshrl.u32 %v1152, 7
    %v1154 = vsub.s32 1, %v1153
    %v1155 = vrot.slane %v1139, %v1154
    %v1156 = vlaneseq
    %v1157 = vshrl.u32 %v1156, 7
    %v1158 = vsub.s32 2, %v1157
    %v1159 = vrot.slane %v1139, %v1158
    %v1160 = vlaneseq
    %v1161 = vshrl.u32 %v1160, 7
    %v1162 = vsub.s32 3, %v1161
    %v1163 = vrot.slane %v1139, %v1162
    %v1164 = vlaneseq
    %v1165 = vshrl.u32 %v1164, 7
    %v1166 = vsub.s32 4, %v1165
    %v1167 = vrot.slane %v1139, %v1166
    %v1168 = vlaneseq
    %v1169 = vshrl.u32 %v1168, 7
    %v1170 = vsub.s32 5, %v1169
    %v1171 = vrot.slane %v1139, %v1170
    %v1172 = vlaneseq
    %v1173 = vshrl.u32 %v1172, 7
    %v1174 = vsub.s32 6, %v1173
    %v1175 = vrot.slane %v1139, %v1174
    %v1176 = vlaneseq
    %v1177 = vshrl.u32 %v1176, 7
    %v1178 = vsub.s32 7, %v1177
    %v1179 = vrot.slane %v1139, %v1178
    %v1188 = vmul.f32 %v1141, %v1151
    %v1189 = vmul.f32 %v1142, %v1155
    %v1190 = vmul.f32 %v1143, %v1167
    %v1191 = vmul.f32 %v1144, %v1171
    %v1192 = vmul.f32 %v1145, %v1175
    %v1193 = vmul.f32 %v1146, %v1179
    %v1195 = vlaneseq
    %v1196 = vshrl.u32 %v1195, 7
    %v1197 = vsub.s32 0, %v1196
    %v1198 = vrot.slane %v1140, %v1197
    %v1199 = vlaneseq
    %v1200 = vshrl.u32 %v1199, 7
    %v1201 = vsub.s32 1, %v1200
    %v1202 = vrot.slane %v1140, %v1201
    %v1203 = vlaneseq
    %v1204 = vshrl.u32 %v1203, 7
    %v1205 = vsub.s32 2, %v1204
    %v1206 = vrot.slane %v1140, %v1205
    %v1207 = vlaneseq
    %v1208 = vshrl.u32 %v1207, 7
    %v1209 = vsub.s32 3, %v1208
    %v1210 = vrot.slane %v1140, %v1209
    %v1211 = vlaneseq
    %v1212 = vshrl.u32 %v1211, 7
    %v1213 = vsub.s32 4, %v1212
    %v1214 = vrot.slane %v1140, %v1213
    %v1215 = vlaneseq
    %v1216 = vshrl.u32 %v1215, 7
    %v1217 = vsub.s32 5, %v1216
    %v1218 = vrot.slane %v1140, %v1217
    %v1219 = vlaneseq
    %v1220 = vshrl.u32 %v1219, 7
    %v1221 = vsub.s32 6, %v1220
    %v1222 = vrot.slane %v1140, %v1221
    %v1223 = vlaneseq
    %v1224 = vshrl.u32 %v1223, 7
    %v1225 = vsub.s32 7, %v1224
    %v1226 = vrot.slane %v1140, %v1225
    %v1235 = vadd.f32 %v1188, %v1198
    %v1236 = vadd.f32 %v1189, %v1202
    %v1237 = vadd.f32 %v1190, %v1214
    %v1238 = vadd.f32 %v1191, %v1218
    %v1239 = vadd.f32 %v1192, %v1222
    %v1240 = vadd.f32 %v1193, %v1226
    %v1241 = vmul.f32 %v1235, %v1237
    %v1242 = vmul.f32 %v1236, %v1238
    %v1243 = vtanh.pop %v1241
    %v1244 = vtanh.pop %v1242
    %v1245 = vmul.f32 %v1239, %v1243
    %v1246 = vmul.f32 %v1240, %v1244
    %v1247 = vpack.c.bf16 %v1245, %v1245
    %v1248 = vpack.c.bf16 %v1246, %v1246
    %v1377 = vunpack.c.l.b16 %v1011
    %v1378 = vunpack.c.h.b16 %v1011
    %v1379 = vunpack.c.l.b16 %v1012
    %v1380 = vunpack.c.h.b16 %v1012
    %v1381 = vunpack.c.l.b16 %v1013
    %v1382 = vunpack.c.h.b16 %v1013
    %v1383 = vunpack.c.l.b16 %v1014
    %v1384 = vunpack.c.h.b16 %v1014
    %v1385 = vunpack.c.l.b16 %v1015
    %v1386 = vunpack.c.h.b16 %v1015
    %v1387 = vunpack.c.l.b16 %v1016
    %v1388 = vunpack.c.h.b16 %v1016
    %v1389 = vunpack.c.l.b16 %v1017
    %v1390 = vunpack.c.h.b16 %v1017
    %v1391 = vunpack.c.l.b16 %v1018
    %v1392 = vunpack.c.h.b16 %v1018
    %v1393 = vunpack.c.l.b16 %v1019
    %v1394 = vunpack.c.h.b16 %v1019
    %v1395 = vunpack.c.l.b16 %v1020
    %v1396 = vunpack.c.h.b16 %v1020
    %v1397 = vunpack.c.l.b16 %v1021
    %v1398 = vunpack.c.h.b16 %v1021
    %v1399 = vunpack.c.l.b16 %v1022
    %v1400 = vunpack.c.h.b16 %v1022
    %v1401 = vunpack.c.l.b16 %v1023
    %v1402 = vunpack.c.h.b16 %v1023
    %v1403 = vunpack.c.l.b16 %v1024
    %v1404 = vunpack.c.h.b16 %v1024
    %v1405 = vunpack.c.l.b16 %v1025
    %v1406 = vunpack.c.h.b16 %v1025
    %v1407 = vunpack.c.l.b16 %v1026
    %v1408 = vunpack.c.h.b16 %v1026
    %v1409 = vunpack.c.l.b16 %v1027
    %v1410 = vunpack.c.h.b16 %v1027
    %v1411 = vunpack.c.l.b16 %v1028
    %v1412 = vunpack.c.h.b16 %v1028
    %v1413 = vunpack.c.l.b16 %v1029
    %v1414 = vunpack.c.h.b16 %v1029
    %v1415 = vunpack.c.l.b16 %v1030
    %v1416 = vunpack.c.h.b16 %v1030
    %v1417 = vunpack.c.l.b16 %v1031
    %v1418 = vunpack.c.h.b16 %v1031
    %v1419 = vunpack.c.l.b16 %v1032
    %v1420 = vunpack.c.h.b16 %v1032
    %v1421 = vunpack.c.l.b16 %v1033
    %v1422 = vunpack.c.h.b16 %v1033
    %v1423 = vunpack.c.l.b16 %v1034
    %v1424 = vunpack.c.h.b16 %v1034
    %v1425 = vunpack.c.l.b16 %v1035
    %v1426 = vunpack.c.h.b16 %v1035
    %v1427 = vunpack.c.l.b16 %v1036
    %v1428 = vunpack.c.h.b16 %v1036
    %v1429 = vunpack.c.l.b16 %v1037
    %v1430 = vunpack.c.h.b16 %v1037
    %v1431 = vunpack.c.l.b16 %v1038
    %v1432 = vunpack.c.h.b16 %v1038
    %v1433 = vunpack.c.l.b16 %v1039
    %v1434 = vunpack.c.h.b16 %v1039
    %v1435 = vunpack.c.l.b16 %v1040
    %v1436 = vunpack.c.h.b16 %v1040
    %v1437 = vunpack.c.l.b16 %v1041
    %v1438 = vunpack.c.h.b16 %v1041
    %v1439 = vunpack.c.l.b16 %v1042
    %v1440 = vunpack.c.h.b16 %v1042
    %v1441 = vunpack.c.l.b16 %v1043
    %v1442 = vunpack.c.h.b16 %v1043
    %v1443 = vunpack.c.l.b16 %v1044
    %v1444 = vunpack.c.h.b16 %v1044
    %v1445 = vunpack.c.l.b16 %v1045
    %v1446 = vunpack.c.h.b16 %v1045
    %v1447 = vunpack.c.l.b16 %v1046
    %v1448 = vunpack.c.h.b16 %v1046
    %v1449 = vunpack.c.l.b16 %v1047
    %v1450 = vunpack.c.h.b16 %v1047
    %v1451 = vunpack.c.l.b16 %v1048
    %v1452 = vunpack.c.h.b16 %v1048
    %v1453 = vunpack.c.l.b16 %v1049
    %v1454 = vunpack.c.h.b16 %v1049
    %v1455 = vunpack.c.l.b16 %v1050
    %v1456 = vunpack.c.h.b16 %v1050
    %v1457 = vunpack.c.l.b16 %v1051
    %v1458 = vunpack.c.h.b16 %v1051
    %v1459 = vunpack.c.l.b16 %v1052
    %v1460 = vunpack.c.h.b16 %v1052
    %v1461 = vunpack.c.l.b16 %v1053
    %v1462 = vunpack.c.h.b16 %v1053
    %v1463 = vunpack.c.l.b16 %v1054
    %v1464 = vunpack.c.h.b16 %v1054
    %v1465 = vunpack.c.l.b16 %v1055
    %v1466 = vunpack.c.h.b16 %v1055
    %v1467 = vunpack.c.l.b16 %v1056
    %v1468 = vunpack.c.h.b16 %v1056
    %v1469 = vunpack.c.l.b16 %v1057
    %v1470 = vunpack.c.h.b16 %v1057
    %v1471 = vunpack.c.l.b16 %v1058
    %v1472 = vunpack.c.h.b16 %v1058
    %v1473 = vunpack.c.l.b16 %v1059
    %v1474 = vunpack.c.h.b16 %v1059
    %v1475 = vunpack.c.l.b16 %v1060
    %v1476 = vunpack.c.h.b16 %v1060
    %v1477 = vunpack.c.l.b16 %v1061
    %v1478 = vunpack.c.h.b16 %v1061
    %v1479 = vunpack.c.l.b16 %v1062
    %v1480 = vunpack.c.h.b16 %v1062
    %v1481 = vunpack.c.l.b16 %v1063
    %v1482 = vunpack.c.h.b16 %v1063
    %v1483 = vunpack.c.l.b16 %v1064
    %v1484 = vunpack.c.h.b16 %v1064
    %v1485 = vunpack.c.l.b16 %v1065
    %v1486 = vunpack.c.h.b16 %v1065
    %v1487 = vunpack.c.l.b16 %v1066
    %v1488 = vunpack.c.h.b16 %v1066
    %v1489 = vunpack.c.l.b16 %v1067
    %v1490 = vunpack.c.h.b16 %v1067
    %v1491 = vunpack.c.l.b16 %v1068
    %v1492 = vunpack.c.h.b16 %v1068
    %v1493 = vunpack.c.l.b16 %v1069
    %v1494 = vunpack.c.h.b16 %v1069
    %v1495 = vunpack.c.l.b16 %v1070
    %v1496 = vunpack.c.h.b16 %v1070
    %v1497 = vunpack.c.l.b16 %v1071
    %v1498 = vunpack.c.h.b16 %v1071
    %v1499 = vunpack.c.l.b16 %v1072
    %v1500 = vunpack.c.h.b16 %v1072
    %v1501 = vunpack.c.l.b16 %v1073
    %v1502 = vunpack.c.h.b16 %v1073
    %v1503 = vunpack.c.l.b16 %v1074
    %v1504 = vunpack.c.h.b16 %v1074
    %v1505 = vunpack.c.l.b16 %v1075
    %v1506 = vunpack.c.h.b16 %v1075
    %v1507 = vunpack.c.l.b16 %v1076
    %v1508 = vunpack.c.h.b16 %v1076
    %v1509 = vunpack.c.l.b16 %v1077
    %v1510 = vunpack.c.h.b16 %v1077
    %v1511 = vunpack.c.l.b16 %v1078
    %v1512 = vunpack.c.h.b16 %v1078
    %v1513 = vunpack.c.l.b16 %v1079
    %v1514 = vunpack.c.h.b16 %v1079
    %v1515 = vunpack.c.l.b16 %v1080
    %v1516 = vunpack.c.h.b16 %v1080
    %v1517 = vunpack.c.l.b16 %v1081
    %v1518 = vunpack.c.h.b16 %v1081
    %v1519 = vunpack.c.l.b16 %v1082
    %v1520 = vunpack.c.h.b16 %v1082
    %v1521 = vunpack.c.l.b16 %v1083
    %v1522 = vunpack.c.h.b16 %v1083
    %v1523 = vunpack.c.l.b16 %v1084
    %v1524 = vunpack.c.h.b16 %v1084
    %v1525 = vunpack.c.l.b16 %v1085
    %v1526 = vunpack.c.h.b16 %v1085
    %v1527 = vunpack.c.l.b16 %v1086
    %v1528 = vunpack.c.h.b16 %v1086
    %v1529 = vunpack.c.l.b16 %v1087
    %v1530 = vunpack.c.h.b16 %v1087
    %v1531 = vunpack.c.l.b16 %v1088
    %v1532 = vunpack.c.h.b16 %v1088
    %v1533 = vunpack.c.l.b16 %v1089
    %v1534 = vunpack.c.h.b16 %v1089
    %v1535 = vunpack.c.l.b16 %v1090
    %v1536 = vunpack.c.h.b16 %v1090
    %v1537 = vunpack.c.l.b16 %v1091
    %v1538 = vunpack.c.h.b16 %v1091
    %v1539 = vunpack.c.l.b16 %v1092
    %v1540 = vunpack.c.h.b16 %v1092
    %v1541 = vunpack.c.l.b16 %v1093
    %v1542 = vunpack.c.h.b16 %v1093
    %v1543 = vunpack.c.l.b16 %v1094
    %v1544 = vunpack.c.h.b16 %v1094
    %v1545 = vunpack.c.l.b16 %v1095
    %v1546 = vunpack.c.h.b16 %v1095
    %v1547 = vunpack.c.l.b16 %v1096
    %v1548 = vunpack.c.h.b16 %v1096
    %v1549 = vunpack.c.l.b16 %v1097
    %v1550 = vunpack.c.h.b16 %v1097
    %v1551 = vunpack.c.l.b16 %v1098
    %v1552 = vunpack.c.h.b16 %v1098
    %v1553 = vunpack.c.l.b16 %v1099
    %v1554 = vunpack.c.h.b16 %v1099
    %v1555 = vunpack.c.l.b16 %v1100
    %v1556 = vunpack.c.h.b16 %v1100
    %v1557 = vunpack.c.l.b16 %v1101
    %v1558 = vunpack.c.h.b16 %v1101
    %v1559 = vunpack.c.l.b16 %v1102
    %v1560 = vunpack.c.h.b16 %v1102
    %v1561 = vunpack.c.l.b16 %v1103
    %v1562 = vunpack.c.h.b16 %v1103
    %v1563 = vunpack.c.l.b16 %v1104
    %v1564 = vunpack.c.h.b16 %v1104
    %v1565 = vunpack.c.l.b16 %v1105
    %v1566 = vunpack.c.h.b16 %v1105
    %v1567 = vunpack.c.l.b16 %v1106
    %v1568 = vunpack.c.h.b16 %v1106
    %v1569 = vunpack.c.l.b16 %v1107
    %v1570 = vunpack.c.h.b16 %v1107
    %v1571 = vunpack.c.l.b16 %v1108
    %v1572 = vunpack.c.h.b16 %v1108
    %v1573 = vunpack.c.l.b16 %v1109
    %v1574 = vunpack.c.h.b16 %v1109
    %v1575 = vunpack.c.l.b16 %v1110
    %v1576 = vunpack.c.h.b16 %v1110
    %v1577 = vunpack.c.l.b16 %v1111
    %v1578 = vunpack.c.h.b16 %v1111
    %v1579 = vunpack.c.l.b16 %v1112
    %v1580 = vunpack.c.h.b16 %v1112
    %v1581 = vunpack.c.l.b16 %v1113
    %v1582 = vunpack.c.h.b16 %v1113
    %v1583 = vunpack.c.l.b16 %v1114
    %v1584 = vunpack.c.h.b16 %v1114
    %v1585 = vunpack.c.l.b16 %v1115
    %v1586 = vunpack.c.h.b16 %v1115
    %v1587 = vunpack.c.l.b16 %v1116
    %v1588 = vunpack.c.h.b16 %v1116
    %v1589 = vunpack.c.l.b16 %v1117
    %v1590 = vunpack.c.h.b16 %v1117
    %v1591 = vunpack.c.l.b16 %v1118
    %v1592 = vunpack.c.h.b16 %v1118
    %v1593 = vunpack.c.l.b16 %v1119
    %v1594 = vunpack.c.h.b16 %v1119
    %v1595 = vunpack.c.l.b16 %v1120
    %v1596 = vunpack.c.h.b16 %v1120
    %v1597 = vunpack.c.l.b16 %v1121
    %v1598 = vunpack.c.h.b16 %v1121
    %v1599 = vunpack.c.l.b16 %v1122
    %v1600 = vunpack.c.h.b16 %v1122
    %v1601 = vunpack.c.l.b16 %v1123
    %v1602 = vunpack.c.h.b16 %v1123
    %v1603 = vunpack.c.l.b16 %v1124
    %v1604 = vunpack.c.h.b16 %v1124
    %v1605 = vunpack.c.l.b16 %v1125
    %v1606 = vunpack.c.h.b16 %v1125
    %v1607 = vunpack.c.l.b16 %v1126
    %v1608 = vunpack.c.h.b16 %v1126
    %v1609 = vunpack.c.l.b16 %v1127
    %v1610 = vunpack.c.h.b16 %v1127
    %v1611 = vunpack.c.l.b16 %v1128
    %v1612 = vunpack.c.h.b16 %v1128
    %v1613 = vunpack.c.l.b16 %v1129
    %v1614 = vunpack.c.h.b16 %v1129
    %v1615 = vunpack.c.l.b16 %v1130
    %v1616 = vunpack.c.h.b16 %v1130
    %v1617 = vunpack.c.l.b16 %v1131
    %v1618 = vunpack.c.h.b16 %v1131
    %v1619 = vunpack.c.l.b16 %v1132
    %v1620 = vunpack.c.h.b16 %v1132
    %v1621 = vunpack.c.l.b16 %v1133
    %v1622 = vunpack.c.h.b16 %v1133
    %v1623 = vunpack.c.l.b16 %v1134
    %v1624 = vunpack.c.h.b16 %v1134
    %v1625 = vunpack.c.l.b16 %v1135
    %v1626 = vunpack.c.h.b16 %v1135
    %v1627 = vunpack.c.l.b16 %v1136
    %v1628 = vunpack.c.h.b16 %v1136
    %v1629 = vunpack.c.l.b16 %v1137
    %v1630 = vunpack.c.h.b16 %v1137
    %v1631 = vunpack.c.l.b16 %v1138
    %v1632 = vunpack.c.h.b16 %v1138
    %v1633 = vpack.c.b16 %v1385, %v1377
    %v1634 = vpack.c.b16 %v1386, %v1378
    %v1635 = vpack.c.b16 %v1387, %v1379
    %v1636 = vpack.c.b16 %v1388, %v1380
    %v1637 = vpack.c.b16 %v1389, %v1381
    %v1638 = vpack.c.b16 %v1390, %v1382
    %v1639 = vpack.c.b16 %v1391, %v1383
    %v1640 = vpack.c.b16 %v1392, %v1384
    %v1641 = vpack.c.b16 %v1401, %v1393
    %v1642 = vpack.c.b16 %v1402, %v1394
    %v1643 = vpack.c.b16 %v1403, %v1395
    %v1644 = vpack.c.b16 %v1404, %v1396
    %v1645 = vpack.c.b16 %v1405, %v1397
    %v1646 = vpack.c.b16 %v1406, %v1398
    %v1647 = vpack.c.b16 %v1407, %v1399
    %v1648 = vpack.c.b16 %v1408, %v1400
    %v1649 = vpack.c.b16 %v1417, %v1409
    %v1650 = vpack.c.b16 %v1418, %v1410
    %v1651 = vpack.c.b16 %v1419, %v1411
    %v1652 = vpack.c.b16 %v1420, %v1412
    %v1653 = vpack.c.b16 %v1421, %v1413
    %v1654 = vpack.c.b16 %v1422, %v1414
    %v1655 = vpack.c.b16 %v1423, %v1415
    %v1656 = vpack.c.b16 %v1424, %v1416
    %v1657 = vpack.c.b16 %v1433, %v1425
    %v1658 = vpack.c.b16 %v1434, %v1426
    %v1659 = vpack.c.b16 %v1435, %v1427
    %v1660 = vpack.c.b16 %v1436, %v1428
    %v1661 = vpack.c.b16 %v1437, %v1429
    %v1662 = vpack.c.b16 %v1438, %v1430
    %v1663 = vpack.c.b16 %v1439, %v1431
    %v1664 = vpack.c.b16 %v1440, %v1432
    %v1665 = vpack.c.b16 %v1449, %v1441
    %v1666 = vpack.c.b16 %v1450, %v1442
    %v1667 = vpack.c.b16 %v1451, %v1443
    %v1668 = vpack.c.b16 %v1452, %v1444
    %v1669 = vpack.c.b16 %v1453, %v1445
    %v1670 = vpack.c.b16 %v1454, %v1446
    %v1671 = vpack.c.b16 %v1455, %v1447
    %v1672 = vpack.c.b16 %v1456, %v1448
    %v1673 = vpack.c.b16 %v1465, %v1457
    %v1674 = vpack.c.b16 %v1466, %v1458
    %v1675 = vpack.c.b16 %v1467, %v1459
    %v1676 = vpack.c.b16 %v1468, %v1460
    %v1677 = vpack.c.b16 %v1469, %v1461
    %v1678 = vpack.c.b16 %v1470, %v1462
    %v1679 = vpack.c.b16 %v1471, %v1463
    %v1680 = vpack.c.b16 %v1472, %v1464
    %v1681 = vpack.c.b16 %v1481, %v1473
    %v1682 = vpack.c.b16 %v1482, %v1474
    %v1683 = vpack.c.b16 %v1483, %v1475
    %v1684 = vpack.c.b16 %v1484, %v1476
    %v1685 = vpack.c.b16 %v1485, %v1477
    %v1686 = vpack.c.b16 %v1486, %v1478
    %v1687 = vpack.c.b16 %v1487, %v1479
    %v1688 = vpack.c.b16 %v1488, %v1480
    %v1689 = vpack.c.b16 %v1497, %v1489
    %v1690 = vpack.c.b16 %v1498, %v1490
    %v1691 = vpack.c.b16 %v1499, %v1491
    %v1692 = vpack.c.b16 %v1500, %v1492
    %v1693 = vpack.c.b16 %v1501, %v1493
    %v1694 = vpack.c.b16 %v1502, %v1494
    %v1695 = vpack.c.b16 %v1503, %v1495
    %v1696 = vpack.c.b16 %v1504, %v1496
    %v1697 = vpack.c.b16 %v1513, %v1505
    %v1698 = vpack.c.b16 %v1514, %v1506
    %v1699 = vpack.c.b16 %v1515, %v1507
    %v1700 = vpack.c.b16 %v1516, %v1508
    %v1701 = vpack.c.b16 %v1517, %v1509
    %v1702 = vpack.c.b16 %v1518, %v1510
    %v1703 = vpack.c.b16 %v1519, %v1511
    %v1704 = vpack.c.b16 %v1520, %v1512
    %v1705 = vpack.c.b16 %v1529, %v1521
    %v1706 = vpack.c.b16 %v1530, %v1522
    %v1707 = vpack.c.b16 %v1531, %v1523
    %v1708 = vpack.c.b16 %v1532, %v1524
    %v1709 = vpack.c.b16 %v1533, %v1525
    %v1710 = vpack.c.b16 %v1534, %v1526
    %v1711 = vpack.c.b16 %v1535, %v1527
    %v1712 = vpack.c.b16 %v1536, %v1528
    %v1713 = vpack.c.b16 %v1545, %v1537
    %v1714 = vpack.c.b16 %v1546, %v1538
    %v1715 = vpack.c.b16 %v1547, %v1539
    %v1716 = vpack.c.b16 %v1548, %v1540
    %v1717 = vpack.c.b16 %v1549, %v1541
    %v1718 = vpack.c.b16 %v1550, %v1542
    %v1719 = vpack.c.b16 %v1551, %v1543
    %v1720 = vpack.c.b16 %v1552, %v1544
    %v1721 = vpack.c.b16 %v1561, %v1553
    %v1722 = vpack.c.b16 %v1562, %v1554
    %v1723 = vpack.c.b16 %v1563, %v1555
    %v1724 = vpack.c.b16 %v1564, %v1556
    %v1725 = vpack.c.b16 %v1565, %v1557
    %v1726 = vpack.c.b16 %v1566, %v1558
    %v1727 = vpack.c.b16 %v1567, %v1559
    %v1728 = vpack.c.b16 %v1568, %v1560
    %v1729 = vpack.c.b16 %v1577, %v1569
    %v1730 = vpack.c.b16 %v1578, %v1570
    %v1731 = vpack.c.b16 %v1579, %v1571
    %v1732 = vpack.c.b16 %v1580, %v1572
    %v1733 = vpack.c.b16 %v1581, %v1573
    %v1734 = vpack.c.b16 %v1582, %v1574
    %v1735 = vpack.c.b16 %v1583, %v1575
    %v1736 = vpack.c.b16 %v1584, %v1576
    %v1737 = vpack.c.b16 %v1593, %v1585
    %v1738 = vpack.c.b16 %v1594, %v1586
    %v1739 = vpack.c.b16 %v1595, %v1587
    %v1740 = vpack.c.b16 %v1596, %v1588
    %v1741 = vpack.c.b16 %v1597, %v1589
    %v1742 = vpack.c.b16 %v1598, %v1590
    %v1743 = vpack.c.b16 %v1599, %v1591
    %v1744 = vpack.c.b16 %v1600, %v1592
    %v1745 = vpack.c.b16 %v1609, %v1601
    %v1746 = vpack.c.b16 %v1610, %v1602
    %v1747 = vpack.c.b16 %v1611, %v1603
    %v1748 = vpack.c.b16 %v1612, %v1604
    %v1749 = vpack.c.b16 %v1613, %v1605
    %v1750 = vpack.c.b16 %v1614, %v1606
    %v1751 = vpack.c.b16 %v1615, %v1607
    %v1752 = vpack.c.b16 %v1616, %v1608
    %v1753 = vpack.c.b16 %v1625, %v1617
    %v1754 = vpack.c.b16 %v1626, %v1618
    %v1755 = vpack.c.b16 %v1627, %v1619
    %v1756 = vpack.c.b16 %v1628, %v1620
    %v1757 = vpack.c.b16 %v1629, %v1621
    %v1758 = vpack.c.b16 %v1630, %v1622
    %v1759 = vpack.c.b16 %v1631, %v1623
    %v1760 = vpack.c.b16 %v1632, %v1624
    %1889 = vmatprep.subr.bf16.mxu0 %v1690
    %1890 = vmatpush1.bf16.msra.mxu0 %v1689
    %1891 = vmatprep.subr.bf16.mxu0 %v1682
    %1892 = vmatpush1.bf16.msra.mxu0 %v1681
    %1893 = vmatprep.subr.bf16.mxu0 %v1674
    %1894 = vmatpush1.bf16.msra.mxu0 %v1673
    %1895 = vmatprep.subr.bf16.mxu0 %v1666
    %1896 = vmatpush1.bf16.msra.mxu0 %v1665
    %1897 = vmatprep.subr.bf16.mxu0 %v1658
    %1898 = vmatpush1.bf16.msra.mxu0 %v1657
    %1899 = vmatprep.subr.bf16.mxu0 %v1650
    %1900 = vmatpush1.bf16.msra.mxu0 %v1649
    %1901 = vmatprep.subr.bf16.mxu0 %v1642
    %1902 = vmatpush1.bf16.msra.mxu0 %v1641
    %1903 = vmatprep.subr.bf16.mxu0 %v1634
    %1904 = vmatpush1.bf16.msra.mxu0 %v1633
    %1905 = vmatprep.subr.bf16.mxu0 %v1754
    %1906 = vmatpush2.bf16.msra.mxu0 %v1753
    %1907 = vmatprep.subr.bf16.mxu0 %v1746
    %1908 = vmatpush2.bf16.msra.mxu0 %v1745
    %1909 = vmatprep.subr.bf16.mxu0 %v1738
    %1910 = vmatpush2.bf16.msra.mxu0 %v1737
    %1911 = vmatprep.subr.bf16.mxu0 %v1730
    %1912 = vmatpush2.bf16.msra.mxu0 %v1729
    %1913 = vmatprep.subr.bf16.mxu0 %v1722
    %1914 = vmatpush2.bf16.msra.mxu0 %v1721
    %1915 = vmatprep.subr.bf16.mxu0 %v1714
    %1916 = vmatpush2.bf16.msra.mxu0 %v1713
    %1917 = vmatprep.subr.bf16.mxu0 %v1706
    %1918 = vmatpush2.bf16.msra.mxu0 %v1705
    %1919 = vmatprep.subr.bf16.mxu0 %v1698
    %1920 = vmatpush2.bf16.msra.mxu0 %v1697
    %1921 = vmatprep.mubr.bf16.mxu0 %v1248
    %1922 = vmatmul.mubr.bf16.gmra.mxu0 %v1247
    %v1923 = vpop.f32.mrf.mxu0
    %v1924 = vadd.f32 0.0, %v1923
    %v1925 = vpop.f32.mrf.mxu0
    %v1926 = vadd.f32 0.0, %v1925
    %v1927 = vpop.f32.mrf.mxu0
    %v1928 = vpop.f32.mrf.mxu0
    %1929 = vdwg.mxu0
    %1930 = vmatprep.subr.bf16.mxu0 %v1692
    %1931 = vmatpush1.bf16.msra.mxu0 %v1691
    %1932 = vmatprep.subr.bf16.mxu0 %v1684
    %1933 = vmatpush1.bf16.msra.mxu0 %v1683
    %1934 = vmatprep.subr.bf16.mxu0 %v1676
    %1935 = vmatpush1.bf16.msra.mxu0 %v1675
    %1936 = vmatprep.subr.bf16.mxu0 %v1668
    %1937 = vmatpush1.bf16.msra.mxu0 %v1667
    %1938 = vmatprep.subr.bf16.mxu0 %v1660
    %1939 = vmatpush1.bf16.msra.mxu0 %v1659
    %1940 = vmatprep.subr.bf16.mxu0 %v1652
    %1941 = vmatpush1.bf16.msra.mxu0 %v1651
    %1942 = vmatprep.subr.bf16.mxu0 %v1644
    %1943 = vmatpush1.bf16.msra.mxu0 %v1643
    %1944 = vmatprep.subr.bf16.mxu0 %v1636
    %1945 = vmatpush1.bf16.msra.mxu0 %v1635
    %1946 = vmatprep.subr.bf16.mxu0 %v1756
    %1947 = vmatpush2.bf16.msra.mxu0 %v1755
    %1948 = vmatprep.subr.bf16.mxu0 %v1748
    %1949 = vmatpush2.bf16.msra.mxu0 %v1747
    %1950 = vmatprep.subr.bf16.mxu0 %v1740
    %1951 = vmatpush2.bf16.msra.mxu0 %v1739
    %1952 = vmatprep.subr.bf16.mxu0 %v1732
    %1953 = vmatpush2.bf16.msra.mxu0 %v1731
    %1954 = vmatprep.subr.bf16.mxu0 %v1724
    %1955 = vmatpush2.bf16.msra.mxu0 %v1723
    %1956 = vmatprep.subr.bf16.mxu0 %v1716
    %1957 = vmatpush2.bf16.msra.mxu0 %v1715
    %1958 = vmatprep.subr.bf16.mxu0 %v1708
    %1959 = vmatpush2.bf16.msra.mxu0 %v1707
    %1960 = vmatprep.subr.bf16.mxu0 %v1700
    %1961 = vmatpush2.bf16.msra.mxu0 %v1699
    %1962 = vmatprep.mubr.bf16.mxu0 %v1248
    %1963 = vmatmul.mubr.bf16.gmra.mxu0 %v1247
    %v1964 = vpop.f32.mrf.mxu0
    %v1965 = vadd.f32 0.0, %v1964
    %v1966 = vpop.f32.mrf.mxu0
    %v1967 = vadd.f32 0.0, %v1966
    %v1968 = vpop.f32.mrf.mxu0
    %v1969 = vpop.f32.mrf.mxu0
    %1970 = vdwg.mxu0
    %1971 = vmatprep.subr.bf16.mxu0 %v1694
    %1972 = vmatpush1.bf16.msra.mxu0 %v1693
    %1973 = vmatprep.subr.bf16.mxu0 %v1686
    %1974 = vmatpush1.bf16.msra.mxu0 %v1685
    %1975 = vmatprep.subr.bf16.mxu0 %v1678
    %1976 = vmatpush1.bf16.msra.mxu0 %v1677
    %1977 = vmatprep.subr.bf16.mxu0 %v1670
    %1978 = vmatpush1.bf16.msra.mxu0 %v1669
    %1979 = vmatprep.subr.bf16.mxu0 %v1662
    %1980 = vmatpush1.bf16.msra.mxu0 %v1661
    %1981 = vmatprep.subr.bf16.mxu0 %v1654
    %1982 = vmatpush1.bf16.msra.mxu0 %v1653
    %1983 = vmatprep.subr.bf16.mxu0 %v1646
    %1984 = vmatpush1.bf16.msra.mxu0 %v1645
    %1985 = vmatprep.subr.bf16.mxu0 %v1638
    %1986 = vmatpush1.bf16.msra.mxu0 %v1637
    %1987 = vmatprep.subr.bf16.mxu0 %v1758
    %1988 = vmatpush2.bf16.msra.mxu0 %v1757
    %1989 = vmatprep.subr.bf16.mxu0 %v1750
    %1990 = vmatpush2.bf16.msra.mxu0 %v1749
    %1991 = vmatprep.subr.bf16.mxu0 %v1742
    %1992 = vmatpush2.bf16.msra.mxu0 %v1741
    %1993 = vmatprep.subr.bf16.mxu0 %v1734
    %1994 = vmatpush2.bf16.msra.mxu0 %v1733
    %1995 = vmatprep.subr.bf16.mxu0 %v1726
    %1996 = vmatpush2.bf16.msra.mxu0 %v1725
    %1997 = vmatprep.subr.bf16.mxu0 %v1718
    %1998 = vmatpush2.bf16.msra.mxu0 %v1717
    %1999 = vmatprep.subr.bf16.mxu0 %v1710
    %2000 = vmatpush2.bf16.msra.mxu0 %v1709
    %2001 = vmatprep.subr.bf16.mxu0 %v1702
    %2002 = vmatpush2.bf16.msra.mxu0 %v1701
    %2003 = vmatprep.mubr.bf16.mxu0 %v1248
    %2004 = vmatmul.mubr.bf16.gmra.mxu0 %v1247
    %v2005 = vpop.f32.mrf.mxu0
    %v2006 = vadd.f32 0.0, %v2005
    %v2007 = vpop.f32.mrf.mxu0
    %v2008 = vadd.f32 0.0, %v2007
    %v2009 = vpop.f32.mrf.mxu0
    %v2010 = vpop.f32.mrf.mxu0
    %2011 = vdwg.mxu0
    %2012 = vmatprep.subr.bf16.mxu0 %v1696
    %2013 = vmatpush1.bf16.msra.mxu0 %v1695
    %2014 = vmatprep.subr.bf16.mxu0 %v1688
    %2015 = vmatpush1.bf16.msra.mxu0 %v1687
    %2016 = vmatprep.subr.bf16.mxu0 %v1680
    %2017 = vmatpush1.bf16.msra.mxu0 %v1679
    %2018 = vmatprep.subr.bf16.mxu0 %v1672
    %2019 = vmatpush1.bf16.msra.mxu0 %v1671
    %2020 = vmatprep.subr.bf16.mxu0 %v1664
    %2021 = vmatpush1.bf16.msra.mxu0 %v1663
    %2022 = vmatprep.subr.bf16.mxu0 %v1656
    %2023 = vmatpush1.bf16.msra.mxu0 %v1655
    %2024 = vmatprep.subr.bf16.mxu0 %v1648
    %2025 = vmatpush1.bf16.msra.mxu0 %v1647
    %2026 = vmatprep.subr.bf16.mxu0 %v1640
    %2027 = vmatpush1.bf16.msra.mxu0 %v1639
    %2028 = vmatprep.subr.bf16.mxu0 %v1760
    %2029 = vmatpush2.bf16.msra.mxu0 %v1759
    %2030 = vmatprep.subr.bf16.mxu0 %v1752
    %2031 = vmatpush2.bf16.msra.mxu0 %v1751
    %2032 = vmatprep.subr.bf16.mxu0 %v1744
    %2033 = vmatpush2.bf16.msra.mxu0 %v1743
    %2034 = vmatprep.subr.bf16.mxu0 %v1736
    %2035 = vmatpush2.bf16.msra.mxu0 %v1735
    %2036 = vmatprep.subr.bf16.mxu0 %v1728
    %2037 = vmatpush2.bf16.msra.mxu0 %v1727
    %2038 = vmatprep.subr.bf16.mxu0 %v1720
    %2039 = vmatpush2.bf16.msra.mxu0 %v1719
    %2040 = vmatprep.subr.bf16.mxu0 %v1712
    %2041 = vmatpush2.bf16.msra.mxu0 %v1711
    %2042 = vmatprep.subr.bf16.mxu0 %v1704
    %2043 = vmatpush2.bf16.msra.mxu0 %v1703
    %2044 = vmatprep.mubr.bf16.mxu0 %v1248
    %2045 = vmatmul.mubr.bf16.gmra.mxu0 %v1247
    %v2046 = vpop.f32.mrf.mxu0
    %v2047 = vadd.f32 0.0, %v2046
    %v2048 = vpop.f32.mrf.mxu0
    %v2049 = vadd.f32 0.0, %v2048
    %v2050 = vpop.f32.mrf.mxu0
    %v2051 = vpop.f32.mrf.mxu0
    %2052 = vdwg.mxu0
    %v2053 = vadd.f32 %v808, %v1924
    %v2054 = vadd.f32 %v810, %v1926
    %v2055 = vadd.f32 %v867, %v1965
    %v2056 = vadd.f32 %v869, %v1967
    %v2057 = vadd.f32 %v928, %v2006
    %v2058 = vadd.f32 %v930, %v2008
    %v2059 = vadd.f32 %v989, %v2047
    %v2060 = vadd.f32 %v991, %v2049
    %v2061 = vtanh.pop %v2053
    %v2062 = vtanh.pop %v2054
    %v2063 = vtanh.pop %v2055
    %v2064 = vtanh.pop %v2056
    %v2065 = vtanh.pop %v2057
    %v2066 = vtanh.pop %v2058
    %v2067 = vtanh.pop %v2059
    %v2068 = vtanh.pop %v2060
    %v2069 = vmul.f32 %v2061, %v1151
    %v2070 = vmul.f32 %v2062, %v1155
    %v2071 = vmul.f32 %v2063, %v1159
    %v2072 = vmul.f32 %v2064, %v1163
    %v2073 = vmul.f32 %v2065, %v1167
    %v2074 = vmul.f32 %v2066, %v1171
    %v2075 = vmul.f32 %v2067, %v1175
    %v2076 = vmul.f32 %v2068, %v1179
    %v2077 = vadd.f32 %v2069, %v1198
    %v2078 = vadd.f32 %v2070, %v1202
    %v2079 = vadd.f32 %v2071, %v1206
    %v2080 = vadd.f32 %v2072, %v1210
    %v2081 = vadd.f32 %v2073, %v1214
    %v2082 = vadd.f32 %v2074, %v1218
    %v2083 = vadd.f32 %v2075, %v1222
    %v2084 = vadd.f32 %v2076, %v1226
    %v2085 = vmul.f32 %v2079, %v1241
    %v2086 = vmul.f32 %v2080, %v1242
    %v2087 = vmul.f32 %v2077, %v2081
    %v2088 = vmul.f32 %v2078, %v2082
    %v2089 = vadd.f32 %v2085, %v2087
    %v2090 = vadd.f32 %v2086, %v2088
    %v2091 = vtanh.pop %v2089
    %v2092 = vtanh.pop %v2090
    %v2093 = vmul.f32 %v2083, %v2091
    %v2094 = vmul.f32 %v2084, %v2092
    %v2095 = vpack.c.bf16 %v2093, %v2093
    %v2096 = vpack.c.bf16 %v2094, %v2094
    %2097 = vmatprep.subr.bf16.mxu0 %v1690
    %2098 = vmatpush1.bf16.msra.mxu0 %v1689
    %2099 = vmatprep.subr.bf16.mxu0 %v1682
    %2100 = vmatpush1.bf16.msra.mxu0 %v1681
    %2101 = vmatprep.subr.bf16.mxu0 %v1674
    %2102 = vmatpush1.bf16.msra.mxu0 %v1673
    %2103 = vmatprep.subr.bf16.mxu0 %v1666
    %2104 = vmatpush1.bf16.msra.mxu0 %v1665
    %2105 = vmatprep.subr.bf16.mxu0 %v1658
    %2106 = vmatpush1.bf16.msra.mxu0 %v1657
    %2107 = vmatprep.subr.bf16.mxu0 %v1650
    %2108 = vmatpush1.bf16.msra.mxu0 %v1649
    %2109 = vmatprep.subr.bf16.mxu0 %v1642
    %2110 = vmatpush1.bf16.msra.mxu0 %v1641
    %2111 = vmatprep.subr.bf16.mxu0 %v1634
    %2112 = vmatpush1.bf16.msra.mxu0 %v1633
    %2113 = vmatprep.subr.bf16.mxu0 %v1754
    %2114 = vmatpush2.bf16.msra.mxu0 %v1753
    %2115 = vmatprep.subr.bf16.mxu0 %v1746
    %2116 = vmatpush2.bf16.msra.mxu0 %v1745
    %2117 = vmatprep.subr.bf16.mxu0 %v1738
    %2118 = vmatpush2.bf16.msra.mxu0 %v1737
    %2119 = vmatprep.subr.bf16.mxu0 %v1730
    %2120 = vmatpush2.bf16.msra.mxu0 %v1729
    %2121 = vmatprep.subr.bf16.mxu0 %v1722
    %2122 = vmatpush2.bf16.msra.mxu0 %v1721
    %2123 = vmatprep.subr.bf16.mxu0 %v1714
    %2124 = vmatpush2.bf16.msra.mxu0 %v1713
    %2125 = vmatprep.subr.bf16.mxu0 %v1706
    %2126 = vmatpush2.bf16.msra.mxu0 %v1705
    %2127 = vmatprep.subr.bf16.mxu0 %v1698
    %2128 = vmatpush2.bf16.msra.mxu0 %v1697
    %2129 = vmatprep.mubr.bf16.mxu0 %v2096
    %2130 = vmatmul.mubr.bf16.gmra.mxu0 %v2095
    %v2131 = vpop.f32.mrf.mxu0
    %v2132 = vadd.f32 0.0, %v2131
    %v2133 = vpop.f32.mrf.mxu0
    %v2134 = vadd.f32 0.0, %v2133
    %v2135 = vpop.f32.mrf.mxu0
    %v2136 = vpop.f32.mrf.mxu0
    %2137 = vdwg.mxu0
    %2138 = vmatprep.subr.bf16.mxu0 %v1692
    %2139 = vmatpush1.bf16.msra.mxu0 %v1691
    %2140 = vmatprep.subr.bf16.mxu0 %v1684
    %2141 = vmatpush1.bf16.msra.mxu0 %v1683
    %2142 = vmatprep.subr.bf16.mxu0 %v1676
    %2143 = vmatpush1.bf16.msra.mxu0 %v1675
    %2144 = vmatprep.subr.bf16.mxu0 %v1668
    %2145 = vmatpush1.bf16.msra.mxu0 %v1667
    %2146 = vmatprep.subr.bf16.mxu0 %v1660
    %2147 = vmatpush1.bf16.msra.mxu0 %v1659
    %2148 = vmatprep.subr.bf16.mxu0 %v1652
    %2149 = vmatpush1.bf16.msra.mxu0 %v1651
    %2150 = vmatprep.subr.bf16.mxu0 %v1644
    %2151 = vmatpush1.bf16.msra.mxu0 %v1643
    %2152 = vmatprep.subr.bf16.mxu0 %v1636
    %2153 = vmatpush1.bf16.msra.mxu0 %v1635
    %2154 = vmatprep.subr.bf16.mxu0 %v1756
    %2155 = vmatpush2.bf16.msra.mxu0 %v1755
    %2156 = vmatprep.subr.bf16.mxu0 %v1748
    %2157 = vmatpush2.bf16.msra.mxu0 %v1747
    %2158 = vmatprep.subr.bf16.mxu0 %v1740
    %2159 = vmatpush2.bf16.msra.mxu0 %v1739
    %2160 = vmatprep.subr.bf16.mxu0 %v1732
    %2161 = vmatpush2.bf16.msra.mxu0 %v1731
    %2162 = vmatprep.subr.bf16.mxu0 %v1724
    %2163 = vmatpush2.bf16.msra.mxu0 %v1723
    %2164 = vmatprep.subr.bf16.mxu0 %v1716
    %2165 = vmatpush2.bf16.msra.mxu0 %v1715
    %2166 = vmatprep.subr.bf16.mxu0 %v1708
    %2167 = vmatpush2.bf16.msra.mxu0 %v1707
    %2168 = vmatprep.subr.bf16.mxu0 %v1700
    %2169 = vmatpush2.bf16.msra.mxu0 %v1699
    %2170 = vmatprep.mubr.bf16.mxu0 %v2096
    %2171 = vmatmul.mubr.bf16.gmra.mxu0 %v2095
    %v2172 = vpop.f32.mrf.mxu0
    %v2173 = vadd.f32 0.0, %v2172
    %v2174 = vpop.f32.mrf.mxu0
    %v2175 = vadd.f32 0.0, %v2174
    %v2176 = vpop.f32.mrf.mxu0
    %v2177 = vpop.f32.mrf.mxu0
    %2178 = vdwg.mxu0
    %2179 = vmatprep.subr.bf16.mxu0 %v1694
    %2180 = vmatpush1.bf16.msra.mxu0 %v1693
    %2181 = vmatprep.subr.bf16.mxu0 %v1686
    %2182 = vmatpush1.bf16.msra.mxu0 %v1685
    %2183 = vmatprep.subr.bf16.mxu0 %v1678
    %2184 = vmatpush1.bf16.msra.mxu0 %v1677
    %2185 = vmatprep.subr.bf16.mxu0 %v1670
    %2186 = vmatpush1.bf16.msra.mxu0 %v1669
    %2187 = vmatprep.subr.bf16.mxu0 %v1662
    %2188 = vmatpush1.bf16.msra.mxu0 %v1661
    %2189 = vmatprep.subr.bf16.mxu0 %v1654
    %2190 = vmatpush1.bf16.msra.mxu0 %v1653
    %2191 = vmatprep.subr.bf16.mxu0 %v1646
    %2192 = vmatpush1.bf16.msra.mxu0 %v1645
    %2193 = vmatprep.subr.bf16.mxu0 %v1638
    %2194 = vmatpush1.bf16.msra.mxu0 %v1637
    %2195 = vmatprep.subr.bf16.mxu0 %v1758
    %2196 = vmatpush2.bf16.msra.mxu0 %v1757
    %2197 = vmatprep.subr.bf16.mxu0 %v1750
    %2198 = vmatpush2.bf16.msra.mxu0 %v1749
    %2199 = vmatprep.subr.bf16.mxu0 %v1742
    %2200 = vmatpush2.bf16.msra.mxu0 %v1741
    %2201 = vmatprep.subr.bf16.mxu0 %v1734
    %2202 = vmatpush2.bf16.msra.mxu0 %v1733
    %2203 = vmatprep.subr.bf16.mxu0 %v1726
    %2204 = vmatpush2.bf16.msra.mxu0 %v1725
    %2205 = vmatprep.subr.bf16.mxu0 %v1718
    %2206 = vmatpush2.bf16.msra.mxu0 %v1717
    %2207 = vmatprep.subr.bf16.mxu0 %v1710
    %2208 = vmatpush2.bf16.msra.mxu0 %v1709
    %2209 = vmatprep.subr.bf16.mxu0 %v1702
    %2210 = vmatpush2.bf16.msra.mxu0 %v1701
    %2211 = vmatprep.mubr.bf16.mxu0 %v2096
    %2212 = vmatmul.mubr.bf16.gmra.mxu0 %v2095
    %v2213 = vpop.f32.mrf.mxu0
    %v2214 = vadd.f32 0.0, %v2213
    %v2215 = vpop.f32.mrf.mxu0
    %v2216 = vadd.f32 0.0, %v2215
    %v2217 = vpop.f32.mrf.mxu0
    %v2218 = vpop.f32.mrf.mxu0
    %2219 = vdwg.mxu0
    %2220 = vmatprep.subr.bf16.mxu0 %v1696
    %2221 = vmatpush1.bf16.msra.mxu0 %v1695
    %2222 = vmatprep.subr.bf16.mxu0 %v1688
    %2223 = vmatpush1.bf16.msra.mxu0 %v1687
    %2224 = vmatprep.subr.bf16.mxu0 %v1680
    %2225 = vmatpush1.bf16.msra.mxu0 %v1679
    %2226 = vmatprep.subr.bf16.mxu0 %v1672
    %2227 = vmatpush1.bf16.msra.mxu0 %v1671
    %2228 = vmatprep.subr.bf16.mxu0 %v1664
    %2229 = vmatpush1.bf16.msra.mxu0 %v1663
    %2230 = vmatprep.subr.bf16.mxu0 %v1656
    %2231 = vmatpush1.bf16.msra.mxu0 %v1655
    %2232 = vmatprep.subr.bf16.mxu0 %v1648
    %2233 = vmatpush1.bf16.msra.mxu0 %v1647
    %2234 = vmatprep.subr.bf16.mxu0 %v1640
    %2235 = vmatpush1.bf16.msra.mxu0 %v1639
    %2236 = vmatprep.subr.bf16.mxu0 %v1760
    %2237 = vmatpush2.bf16.msra.mxu0 %v1759
    %2238 = vmatprep.subr.bf16.mxu0 %v1752
    %2239 = vmatpush2.bf16.msra.mxu0 %v1751
    %2240 = vmatprep.subr.bf16.mxu0 %v1744
    %2241 = vmatpush2.bf16.msra.mxu0 %v1743
    %2242 = vmatprep.subr.bf16.mxu0 %v1736
    %2243 = vmatpush2.bf16.msra.mxu0 %v1735
    %2244 = vmatprep.subr.bf16.mxu0 %v1728
    %2245 = vmatpush2.bf16.msra.mxu0 %v1727
    %2246 = vmatprep.subr.bf16.mxu0 %v1720
    %2247 = vmatpush2.bf16.msra.mxu0 %v1719
    %2248 = vmatprep.subr.bf16.mxu0 %v1712
    %2249 = vmatpush2.bf16.msra.mxu0 %v1711
    %2250 = vmatprep.subr.bf16.mxu0 %v1704
    %2251 = vmatpush2.bf16.msra.mxu0 %v1703
    %2252 = vmatprep.mubr.bf16.mxu0 %v2096
    %2253 = vmatmul.mubr.bf16.gmra.mxu0 %v2095
    %v2254 = vpop.f32.mrf.mxu0
    %v2255 = vadd.f32 0.0, %v2254
    %v2256 = vpop.f32.mrf.mxu0
    %v2257 = vadd.f32 0.0, %v2256
    %v2258 = vpop.f32.mrf.mxu0
    %v2259 = vpop.f32.mrf.mxu0
    %2260 = vdwg.mxu0
    %v2261 = vadd.f32 %v814, %v2132
    %v2262 = vadd.f32 %v816, %v2134
    %v2263 = vadd.f32 %v873, %v2173
    %v2264 = vadd.f32 %v875, %v2175
    %v2265 = vadd.f32 %v934, %v2214
    %v2266 = vadd.f32 %v936, %v2216
    %v2267 = vadd.f32 %v995, %v2255
    %v2268 = vadd.f32 %v997, %v2257
    %v2269 = vtanh.pop %v2261
    %v2270 = vtanh.pop %v2262
    %v2271 = vtanh.pop %v2263
    %v2272 = vtanh.pop %v2264
    %v2273 = vtanh.pop %v2265
    %v2274 = vtanh.pop %v2266
    %v2275 = vtanh.pop %v2267
    %v2276 = vtanh.pop %v2268
    %v2277 = vmul.f32 %v2269, %v1151
    %v2278 = vmul.f32 %v2270, %v1155
    %v2279 = vmul.f32 %v2271, %v1159
    %v2280 = vmul.f32 %v2272, %v1163
    %v2281 = vmul.f32 %v2273, %v1167
    %v2282 = vmul.f32 %v2274, %v1171
    %v2283 = vmul.f32 %v2275, %v1175
    %v2284 = vmul.f32 %v2276, %v1179
    %v2285 = vadd.f32 %v2277, %v1198
    %v2286 = vadd.f32 %v2278, %v1202
    %v2287 = vadd.f32 %v2279, %v1206
    %v2288 = vadd.f32 %v2280, %v1210
    %v2289 = vadd.f32 %v2281, %v1214
    %v2290 = vadd.f32 %v2282, %v1218
    %v2291 = vadd.f32 %v2283, %v1222
    %v2292 = vadd.f32 %v2284, %v1226
    %v2293 = vmul.f32 %v2287, %v2089
    %v2294 = vmul.f32 %v2288, %v2090
    %v2295 = vmul.f32 %v2285, %v2289
    %v2296 = vmul.f32 %v2286, %v2290
    %v2297 = vadd.f32 %v2293, %v2295
    %v2298 = vadd.f32 %v2294, %v2296
    %v2299 = vtanh.pop %v2297
    %v2300 = vtanh.pop %v2298
    %v2301 = vmul.f32 %v2291, %v2299
    %v2302 = vmul.f32 %v2292, %v2300
    %v2303 = vpack.c.bf16 %v2301, %v2301
    %v2304 = vpack.c.bf16 %v2302, %v2302
    %2305 = vmatprep.subr.bf16.mxu0 %v1690
    %2306 = vmatpush1.bf16.msra.mxu0 %v1689
    %2307 = vmatprep.subr.bf16.mxu0 %v1682
    %2308 = vmatpush1.bf16.msra.mxu0 %v1681
    %2309 = vmatprep.subr.bf16.mxu0 %v1674
    %2310 = vmatpush1.bf16.msra.mxu0 %v1673
    %2311 = vmatprep.subr.bf16.mxu0 %v1666
    %2312 = vmatpush1.bf16.msra.mxu0 %v1665
    %2313 = vmatprep.subr.bf16.mxu0 %v1658
    %2314 = vmatpush1.bf16.msra.mxu0 %v1657
    %2315 = vmatprep.subr.bf16.mxu0 %v1650
    %2316 = vmatpush1.bf16.msra.mxu0 %v1649
    %2317 = vmatprep.subr.bf16.mxu0 %v1642
    %2318 = vmatpush1.bf16.msra.mxu0 %v1641
    %2319 = vmatprep.subr.bf16.mxu0 %v1634
    %2320 = vmatpush1.bf16.msra.mxu0 %v1633
    %2321 = vmatprep.subr.bf16.mxu0 %v1754
    %2322 = vmatpush2.bf16.msra.mxu0 %v1753
    %2323 = vmatprep.subr.bf16.mxu0 %v1746
    %2324 = vmatpush2.bf16.msra.mxu0 %v1745
    %2325 = vmatprep.subr.bf16.mxu0 %v1738
    %2326 = vmatpush2.bf16.msra.mxu0 %v1737
    %2327 = vmatprep.subr.bf16.mxu0 %v1730
    %2328 = vmatpush2.bf16.msra.mxu0 %v1729
    %2329 = vmatprep.subr.bf16.mxu0 %v1722
    %2330 = vmatpush2.bf16.msra.mxu0 %v1721
    %2331 = vmatprep.subr.bf16.mxu0 %v1714
    %2332 = vmatpush2.bf16.msra.mxu0 %v1713
    %2333 = vmatprep.subr.bf16.mxu0 %v1706
    %2334 = vmatpush2.bf16.msra.mxu0 %v1705
    %2335 = vmatprep.subr.bf16.mxu0 %v1698
    %2336 = vmatpush2.bf16.msra.mxu0 %v1697
    %2337 = vmatprep.mubr.bf16.mxu0 %v2304
    %2338 = vmatmul.mubr.bf16.gmra.mxu0 %v2303
    %v2339 = vpop.f32.mrf.mxu0
    %v2340 = vadd.f32 0.0, %v2339
    %v2341 = vpop.f32.mrf.mxu0
    %v2342 = vadd.f32 0.0, %v2341
    %v2343 = vpop.f32.mrf.mxu0
    %v2344 = vpop.f32.mrf.mxu0
    %2345 = vdwg.mxu0
    %2346 = vmatprep.subr.bf16.mxu0 %v1692
    %2347 = vmatpush1.bf16.msra.mxu0 %v1691
    %2348 = vmatprep.subr.bf16.mxu0 %v1684
    %2349 = vmatpush1.bf16.msra.mxu0 %v1683
    %2350 = vmatprep.subr.bf16.mxu0 %v1676
    %2351 = vmatpush1.bf16.msra.mxu0 %v1675
    %2352 = vmatprep.subr.bf16.mxu0 %v1668
    %2353 = vmatpush1.bf16.msra.mxu0 %v1667
    %2354 = vmatprep.subr.bf16.mxu0 %v1660
    %2355 = vmatpush1.bf16.msra.mxu0 %v1659
    %2356 = vmatprep.subr.bf16.mxu0 %v1652
    %2357 = vmatpush1.bf16.msra.mxu0 %v1651
    %2358 = vmatprep.subr.bf16.mxu0 %v1644
    %2359 = vmatpush1.bf16.msra.mxu0 %v1643
    %2360 = vmatprep.subr.bf16.mxu0 %v1636
    %2361 = vmatpush1.bf16.msra.mxu0 %v1635
    %2362 = vmatprep.subr.bf16.mxu0 %v1756
    %2363 = vmatpush2.bf16.msra.mxu0 %v1755
    %2364 = vmatprep.subr.bf16.mxu0 %v1748
    %2365 = vmatpush2.bf16.msra.mxu0 %v1747
    %2366 = vmatprep.subr.bf16.mxu0 %v1740
    %2367 = vmatpush2.bf16.msra.mxu0 %v1739
    %2368 = vmatprep.subr.bf16.mxu0 %v1732
    %2369 = vmatpush2.bf16.msra.mxu0 %v1731
    %2370 = vmatprep.subr.bf16.mxu0 %v1724
    %2371 = vmatpush2.bf16.msra.mxu0 %v1723
    %2372 = vmatprep.subr.bf16.mxu0 %v1716
    %2373 = vmatpush2.bf16.msra.mxu0 %v1715
    %2374 = vmatprep.subr.bf16.mxu0 %v1708
    %2375 = vmatpush2.bf16.msra.mxu0 %v1707
    %2376 = vmatprep.subr.bf16.mxu0 %v1700
    %2377 = vmatpush2.bf16.msra.mxu0 %v1699
    %2378 = vmatprep.mubr.bf16.mxu0 %v2304
    %2379 = vmatmul.mubr.bf16.gmra.mxu0 %v2303
    %v2380 = vpop.f32.mrf.mxu0
    %v2381 = vadd.f32 0.0, %v2380
    %v2382 = vpop.f32.mrf.mxu0
    %v2383 = vadd.f32 0.0, %v2382
    %v2384 = vpop.f32.mrf.mxu0
    %v2385 = vpop.f32.mrf.mxu0
    %2386 = vdwg.mxu0
    %2387 = vmatprep.subr.bf16.mxu0 %v1694
    %2388 = vmatpush1.bf16.msra.mxu0 %v1693
    %2389 = vmatprep.subr.bf16.mxu0 %v1686
    %2390 = vmatpush1.bf16.msra.mxu0 %v1685
    %2391 = vmatprep.subr.bf16.mxu0 %v1678
    %2392 = vmatpush1.bf16.msra.mxu0 %v1677
    %2393 = vmatprep.subr.bf16.mxu0 %v1670
    %2394 = vmatpush1.bf16.msra.mxu0 %v1669
    %2395 = vmatprep.subr.bf16.mxu0 %v1662
    %2396 = vmatpush1.bf16.msra.mxu0 %v1661
    %2397 = vmatprep.subr.bf16.mxu0 %v1654
    %2398 = vmatpush1.bf16.msra.mxu0 %v1653
    %2399 = vmatprep.subr.bf16.mxu0 %v1646
    %2400 = vmatpush1.bf16.msra.mxu0 %v1645
    %2401 = vmatprep.subr.bf16.mxu0 %v1638
    %2402 = vmatpush1.bf16.msra.mxu0 %v1637
    %2403 = vmatprep.subr.bf16.mxu0 %v1758
    %2404 = vmatpush2.bf16.msra.mxu0 %v1757
    %2405 = vmatprep.subr.bf16.mxu0 %v1750
    %2406 = vmatpush2.bf16.msra.mxu0 %v1749
    %2407 = vmatprep.subr.bf16.mxu0 %v1742
    %2408 = vmatpush2.bf16.msra.mxu0 %v1741
    %2409 = vmatprep.subr.bf16.mxu0 %v1734
    %2410 = vmatpush2.bf16.msra.mxu0 %v1733
    %2411 = vmatprep.subr.bf16.mxu0 %v1726
    %2412 = vmatpush2.bf16.msra.mxu0 %v1725
    %2413 = vmatprep.subr.bf16.mxu0 %v1718
    %2414 = vmatpush2.bf16.msra.mxu0 %v1717
    %2415 = vmatprep.subr.bf16.mxu0 %v1710
    %2416 = vmatpush2.bf16.msra.mxu0 %v1709
    %2417 = vmatprep.subr.bf16.mxu0 %v1702
    %2418 = vmatpush2.bf16.msra.mxu0 %v1701
    %2419 = vmatprep.mubr.bf16.mxu0 %v2304
    %2420 = vmatmul.mubr.bf16.gmra.mxu0 %v2303
    %v2421 = vpop.f32.mrf.mxu0
    %v2422 = vadd.f32 0.0, %v2421
    %v2423 = vpop.f32.mrf.mxu0
    %v2424 = vadd.f32 0.0, %v2423
    %v2425 = vpop.f32.mrf.mxu0
    %v2426 = vpop.f32.mrf.mxu0
    %2427 = vdwg.mxu0
    %2428 = vmatprep.subr.bf16.mxu0 %v1696
    %2429 = vmatpush1.bf16.msra.mxu0 %v1695
    %2430 = vmatprep.subr.bf16.mxu0 %v1688
    %2431 = vmatpush1.bf16.msra.mxu0 %v1687
    %2432 = vmatprep.subr.bf16.mxu0 %v1680
    %2433 = vmatpush1.bf16.msra.mxu0 %v1679
    %2434 = vmatprep.subr.bf16.mxu0 %v1672
    %2435 = vmatpush1.bf16.msra.mxu0 %v1671
    %2436 = vmatprep.subr.bf16.mxu0 %v1664
    %2437 = vmatpush1.bf16.msra.mxu0 %v1663
    %2438 = vmatprep.subr.bf16.mxu0 %v1656
    %2439 = vmatpush1.bf16.msra.mxu0 %v1655
    %2440 = vmatprep.subr.bf16.mxu0 %v1648
    %2441 = vmatpush1.bf16.msra.mxu0 %v1647
    %2442 = vmatprep.subr.bf16.mxu0 %v1640
    %2443 = vmatpush1.bf16.msra.mxu0 %v1639
    %2444 = vmatprep.subr.bf16.mxu0 %v1760
    %2445 = vmatpush2.bf16.msra.mxu0 %v1759
    %2446 = vmatprep.subr.bf16.mxu0 %v1752
    %2447 = vmatpush2.bf16.msra.mxu0 %v1751
    %2448 = vmatprep.subr.bf16.mxu0 %v1744
    %2449 = vmatpush2.bf16.msra.mxu0 %v1743
    %2450 = vmatprep.subr.bf16.mxu0 %v1736
    %2451 = vmatpush2.bf16.msra.mxu0 %v1735
    %2452 = vmatprep.subr.bf16.mxu0 %v1728
    %2453 = vmatpush2.bf16.msra.mxu0 %v1727
    %2454 = vmatprep.subr.bf16.mxu0 %v1720
    %2455 = vmatpush2.bf16.msra.mxu0 %v1719
    %2456 = vmatprep.subr.bf16.mxu0 %v1712
    %2457 = vmatpush2.bf16.msra.mxu0 %v1711
    %2458 = vmatprep.subr.bf16.mxu0 %v1704
    %2459 = vmatpush2.bf16.msra.mxu0 %v1703
    %2460 = vmatprep.mubr.bf16.mxu0 %v2304
    %2461 = vmatmul.mubr.bf16.gmra.mxu0 %v2303
    %v2462 = vpop.f32.mrf.mxu0
    %v2463 = vadd.f32 0.0, %v2462
    %v2464 = vpop.f32.mrf.mxu0
    %v2465 = vadd.f32 0.0, %v2464
    %v2466 = vpop.f32.mrf.mxu0
    %v2467 = vpop.f32.mrf.mxu0
    %2468 = vdwg.mxu0
    %v2469 = vadd.f32 %v818, %v2340
    %v2470 = vadd.f32 %v820, %v2342
    %v2471 = vadd.f32 %v877, %v2381
    %v2472 = vadd.f32 %v879, %v2383
    %v2473 = vadd.f32 %v938, %v2422
    %v2474 = vadd.f32 %v940, %v2424
    %v2475 = vadd.f32 %v999, %v2463
    %v2476 = vadd.f32 %v1001, %v2465
    %v2477 = vtanh.pop %v2469
    %v2478 = vtanh.pop %v2470
    %v2479 = vtanh.pop %v2471
    %v2480 = vtanh.pop %v2472
    %v2481 = vtanh.pop %v2473
    %v2482 = vtanh.pop %v2474
    %v2483 = vtanh.pop %v2475
    %v2484 = vtanh.pop %v2476
    %v2485 = vmul.f32 %v2477, %v1151
    %v2486 = vmul.f32 %v2478, %v1155
    %v2487 = vmul.f32 %v2479, %v1159
    %v2488 = vmul.f32 %v2480, %v1163
    %v2489 = vmul.f32 %v2481, %v1167
    %v2490 = vmul.f32 %v2482, %v1171
    %v2491 = vmul.f32 %v2483, %v1175
    %v2492 = vmul.f32 %v2484, %v1179
    %v2493 = vadd.f32 %v2485, %v1198
    %v2494 = vadd.f32 %v2486, %v1202
    %v2495 = vadd.f32 %v2487, %v1206
    %v2496 = vadd.f32 %v2488, %v1210
    %v2497 = vadd.f32 %v2489, %v1214
    %v2498 = vadd.f32 %v2490, %v1218
    %v2499 = vadd.f32 %v2491, %v1222
    %v2500 = vadd.f32 %v2492, %v1226
    %v2501 = vmul.f32 %v2495, %v2297
    %v2502 = vmul.f32 %v2496, %v2298
    %v2503 = vmul.f32 %v2493, %v2497
    %v2504 = vmul.f32 %v2494, %v2498
    %v2505 = vadd.f32 %v2501, %v2503
    %v2506 = vadd.f32 %v2502, %v2504
    %v2507 = vtanh.pop %v2505
    %v2508 = vtanh.pop %v2506
    %v2509 = vmul.f32 %v2499, %v2507
    %v2510 = vmul.f32 %v2500, %v2508
    %v2511 = vpack.c.bf16 %v2509, %v2509
    %v2512 = vpack.c.bf16 %v2510, %v2510
    %2513 = vmatprep.subr.bf16.mxu0 %v1690
    %2514 = vmatpush1.bf16.msra.mxu0 %v1689
    %2515 = vmatprep.subr.bf16.mxu0 %v1682
    %2516 = vmatpush1.bf16.msra.mxu0 %v1681
    %2517 = vmatprep.subr.bf16.mxu0 %v1674
    %2518 = vmatpush1.bf16.msra.mxu0 %v1673
    %2519 = vmatprep.subr.bf16.mxu0 %v1666
    %2520 = vmatpush1.bf16.msra.mxu0 %v1665
    %2521 = vmatprep.subr.bf16.mxu0 %v1658
    %2522 = vmatpush1.bf16.msra.mxu0 %v1657
    %2523 = vmatprep.subr.bf16.mxu0 %v1650
    %2524 = vmatpush1.bf16.msra.mxu0 %v1649
    %2525 = vmatprep.subr.bf16.mxu0 %v1642
    %2526 = vmatpush1.bf16.msra.mxu0 %v1641
    %2527 = vmatprep.subr.bf16.mxu0 %v1634
    %2528 = vmatpush1.bf16.msra.mxu0 %v1633
    %2529 = vmatprep.subr.bf16.mxu0 %v1754
    %2530 = vmatpush2.bf16.msra.mxu0 %v1753
    %2531 = vmatprep.subr.bf16.mxu0 %v1746
    %2532 = vmatpush2.bf16.msra.mxu0 %v1745
    %2533 = vmatprep.subr.bf16.mxu0 %v1738
    %2534 = vmatpush2.bf16.msra.mxu0 %v1737
    %2535 = vmatprep.subr.bf16.mxu0 %v1730
    %2536 = vmatpush2.bf16.msra.mxu0 %v1729
    %2537 = vmatprep.subr.bf16.mxu0 %v1722
    %2538 = vmatpush2.bf16.msra.mxu0 %v1721
    %2539 = vmatprep.subr.bf16.mxu0 %v1714
    %2540 = vmatpush2.bf16.msra.mxu0 %v1713
    %2541 = vmatprep.subr.bf16.mxu0 %v1706
    %2542 = vmatpush2.bf16.msra.mxu0 %v1705
    %2543 = vmatprep.subr.bf16.mxu0 %v1698
    %2544 = vmatpush2.bf16.msra.mxu0 %v1697
    %2545 = vmatprep.mubr.bf16.mxu0 %v2512
    %2546 = vmatmul.mubr.bf16.gmra.mxu0 %v2511
    %v2547 = vpop.f32.mrf.mxu0
    %v2548 = vadd.f32 0.0, %v2547
    %v2549 = vpop.f32.mrf.mxu0
    %v2550 = vadd.f32 0.0, %v2549
    %v2551 = vpop.f32.mrf.mxu0
    %v2552 = vpop.f32.mrf.mxu0
    %2553 = vdwg.mxu0
    %2554 = vmatprep.subr.bf16.mxu0 %v1692
    %2555 = vmatpush1.bf16.msra.mxu0 %v1691
    %2556 = vmatprep.subr.bf16.mxu0 %v1684
    %2557 = vmatpush1.bf16.msra.mxu0 %v1683
    %2558 = vmatprep.subr.bf16.mxu0 %v1676
    %2559 = vmatpush1.bf16.msra.mxu0 %v1675
    %2560 = vmatprep.subr.bf16.mxu0 %v1668
    %2561 = vmatpush1.bf16.msra.mxu0 %v1667
    %2562 = vmatprep.subr.bf16.mxu0 %v1660
    %2563 = vmatpush1.bf16.msra.mxu0 %v1659
    %2564 = vmatprep.subr.bf16.mxu0 %v1652
    %2565 = vmatpush1.bf16.msra.mxu0 %v1651
    %2566 = vmatprep.subr.bf16.mxu0 %v1644
    %2567 = vmatpush1.bf16.msra.mxu0 %v1643
    %2568 = vmatprep.subr.bf16.mxu0 %v1636
    %2569 = vmatpush1.bf16.msra.mxu0 %v1635
    %2570 = vmatprep.subr.bf16.mxu0 %v1756
    %2571 = vmatpush2.bf16.msra.mxu0 %v1755
    %2572 = vmatprep.subr.bf16.mxu0 %v1748
    %2573 = vmatpush2.bf16.msra.mxu0 %v1747
    %2574 = vmatprep.subr.bf16.mxu0 %v1740
    %2575 = vmatpush2.bf16.msra.mxu0 %v1739
    %2576 = vmatprep.subr.bf16.mxu0 %v1732
    %2577 = vmatpush2.bf16.msra.mxu0 %v1731
    %2578 = vmatprep.subr.bf16.mxu0 %v1724
    %2579 = vmatpush2.bf16.msra.mxu0 %v1723
    %2580 = vmatprep.subr.bf16.mxu0 %v1716
    %2581 = vmatpush2.bf16.msra.mxu0 %v1715
    %2582 = vmatprep.subr.bf16.mxu0 %v1708
    %2583 = vmatpush2.bf16.msra.mxu0 %v1707
    %2584 = vmatprep.subr.bf16.mxu0 %v1700
    %2585 = vmatpush2.bf16.msra.mxu0 %v1699
    %2586 = vmatprep.mubr.bf16.mxu0 %v2512
    %2587 = vmatmul.mubr.bf16.gmra.mxu0 %v2511
    %v2588 = vpop.f32.mrf.mxu0
    %v2589 = vadd.f32 0.0, %v2588
    %v2590 = vpop.f32.mrf.mxu0
    %v2591 = vadd.f32 0.0, %v2590
    %v2592 = vpop.f32.mrf.mxu0
    %v2593 = vpop.f32.mrf.mxu0
    %2594 = vdwg.mxu0
    %2595 = vmatprep.subr.bf16.mxu0 %v1694
    %2596 = vmatpush1.bf16.msra.mxu0 %v1693
    %2597 = vmatprep.subr.bf16.mxu0 %v1686
    %2598 = vmatpush1.bf16.msra.mxu0 %v1685
    %2599 = vmatprep.subr.bf16.mxu0 %v1678
    %2600 = vmatpush1.bf16.msra.mxu0 %v1677
    %2601 = vmatprep.subr.bf16.mxu0 %v1670
    %2602 = vmatpush1.bf16.msra.mxu0 %v1669
    %2603 = vmatprep.subr.bf16.mxu0 %v1662
    %2604 = vmatpush1.bf16.msra.mxu0 %v1661
    %2605 = vmatprep.subr.bf16.mxu0 %v1654
    %2606 = vmatpush1.bf16.msra.mxu0 %v1653
    %2607 = vmatprep.subr.bf16.mxu0 %v1646
    %2608 = vmatpush1.bf16.msra.mxu0 %v1645
    %2609 = vmatprep.subr.bf16.mxu0 %v1638
    %2610 = vmatpush1.bf16.msra.mxu0 %v1637
    %2611 = vmatprep.subr.bf16.mxu0 %v1758
    %2612 = vmatpush2.bf16.msra.mxu0 %v1757
    %2613 = vmatprep.subr.bf16.mxu0 %v1750
    %2614 = vmatpush2.bf16.msra.mxu0 %v1749
    %2615 = vmatprep.subr.bf16.mxu0 %v1742
    %2616 = vmatpush2.bf16.msra.mxu0 %v1741
    %2617 = vmatprep.subr.bf16.mxu0 %v1734
    %2618 = vmatpush2.bf16.msra.mxu0 %v1733
    %2619 = vmatprep.subr.bf16.mxu0 %v1726
    %2620 = vmatpush2.bf16.msra.mxu0 %v1725
    %2621 = vmatprep.subr.bf16.mxu0 %v1718
    %2622 = vmatpush2.bf16.msra.mxu0 %v1717
    %2623 = vmatprep.subr.bf16.mxu0 %v1710
    %2624 = vmatpush2.bf16.msra.mxu0 %v1709
    %2625 = vmatprep.subr.bf16.mxu0 %v1702
    %2626 = vmatpush2.bf16.msra.mxu0 %v1701
    %2627 = vmatprep.mubr.bf16.mxu0 %v2512
    %2628 = vmatmul.mubr.bf16.gmra.mxu0 %v2511
    %v2629 = vpop.f32.mrf.mxu0
    %v2630 = vadd.f32 0.0, %v2629
    %v2631 = vpop.f32.mrf.mxu0
    %v2632 = vadd.f32 0.0, %v2631
    %v2633 = vpop.f32.mrf.mxu0
    %v2634 = vpop.f32.mrf.mxu0
    %2635 = vdwg.mxu0
    %2636 = vmatprep.subr.bf16.mxu0 %v1696
    %2637 = vmatpush1.bf16.msra.mxu0 %v1695
    %2638 = vmatprep.subr.bf16.mxu0 %v1688
    %2639 = vmatpush1.bf16.msra.mxu0 %v1687
    %2640 = vmatprep.subr.bf16.mxu0 %v1680
    %2641 = vmatpush1.bf16.msra.mxu0 %v1679
    %2642 = vmatprep.subr.bf16.mxu0 %v1672
    %2643 = vmatpush1.bf16.msra.mxu0 %v1671
    %2644 = vmatprep.subr.bf16.mxu0 %v1664
    %2645 = vmatpush1.bf16.msra.mxu0 %v1663
    %2646 = vmatprep.subr.bf16.mxu0 %v1656
    %2647 = vmatpush1.bf16.msra.mxu0 %v1655
    %2648 = vmatprep.subr.bf16.mxu0 %v1648
    %2649 = vmatpush1.bf16.msra.mxu0 %v1647
    %2650 = vmatprep.subr.bf16.mxu0 %v1640
    %2651 = vmatpush1.bf16.msra.mxu0 %v1639
    %2652 = vmatprep.subr.bf16.mxu0 %v1760
    %2653 = vmatpush2.bf16.msra.mxu0 %v1759
    %2654 = vmatprep.subr.bf16.mxu0 %v1752
    %2655 = vmatpush2.bf16.msra.mxu0 %v1751
    %2656 = vmatprep.subr.bf16.mxu0 %v1744
    %2657 = vmatpush2.bf16.msra.mxu0 %v1743
    %2658 = vmatprep.subr.bf16.mxu0 %v1736
    %2659 = vmatpush2.bf16.msra.mxu0 %v1735
    %2660 = vmatprep.subr.bf16.mxu0 %v1728
    %2661 = vmatpush2.bf16.msra.mxu0 %v1727
    %2662 = vmatprep.subr.bf16.mxu0 %v1720
    %2663 = vmatpush2.bf16.msra.mxu0 %v1719
    %2664 = vmatprep.subr.bf16.mxu0 %v1712
    %2665 = vmatpush2.bf16.msra.mxu0 %v1711
    %2666 = vmatprep.subr.bf16.mxu0 %v1704
    %2667 = vmatpush2.bf16.msra.mxu0 %v1703
    %2668 = vmatprep.mubr.bf16.mxu0 %v2512
    %2669 = vmatmul.mubr.bf16.gmra.mxu0 %v2511
    %v2670 = vpop.f32.mrf.mxu0
    %v2671 = vadd.f32 0.0, %v2670
    %v2672 = vpop.f32.mrf.mxu0
    %v2673 = vadd.f32 0.0, %v2672
    %v2674 = vpop.f32.mrf.mxu0
    %v2675 = vpop.f32.mrf.mxu0
    %2676 = vdwg.mxu0
    %v2677 = vadd.f32 %v824, %v2548
    %v2678 = vadd.f32 %v826, %v2550
    %v2679 = vadd.f32 %v883, %v2589
    %v2680 = vadd.f32 %v885, %v2591
    %v2681 = vadd.f32 %v944, %v2630
    %v2682 = vadd.f32 %v946, %v2632
    %v2683 = vadd.f32 %v1005, %v2671
    %v2684 = vadd.f32 %v1007, %v2673
    %v2685 = vtanh.pop %v2677
    %v2686 = vtanh.pop %v2678
    %v2687 = vtanh.pop %v2679
    %v2688 = vtanh.pop %v2680
    %v2689 = vtanh.pop %v2681
    %v2690 = vtanh.pop %v2682
    %v2691 = vtanh.pop %v2683
    %v2692 = vtanh.pop %v2684
    %v2693 = vmul.f32 %v2685, %v1151
    %v2694 = vmul.f32 %v2686, %v1155
    %v2695 = vmul.f32 %v2687, %v1159
    %v2696 = vmul.f32 %v2688, %v1163
    %v2697 = vmul.f32 %v2689, %v1167
    %v2698 = vmul.f32 %v2690, %v1171
    %v2699 = vmul.f32 %v2691, %v1175
    %v2700 = vmul.f32 %v2692, %v1179
    %v2701 = vadd.f32 %v2693, %v1198
    %v2702 = vadd.f32 %v2694, %v1202
    %v2703 = vadd.f32 %v2695, %v1206
    %v2704 = vadd.f32 %v2696, %v1210
    %v2705 = vadd.f32 %v2697, %v1214
    %v2706 = vadd.f32 %v2698, %v1218
    %v2707 = vadd.f32 %v2699, %v1222
    %v2708 = vadd.f32 %v2700, %v1226
    %v2709 = vmul.f32 %v2703, %v2505
    %v2710 = vmul.f32 %v2704, %v2506
    %v2711 = vmul.f32 %v2701, %v2705
    %v2712 = vmul.f32 %v2702, %v2706
    %v2713 = vadd.f32 %v2709, %v2711
    %v2714 = vadd.f32 %v2710, %v2712
    %v2715 = vtanh.pop %v2713
    %v2716 = vtanh.pop %v2714
    %v2717 = vmul.f32 %v2707, %v2715
    %v2718 = vmul.f32 %v2708, %v2716
    %v2719 = vpack.c.bf16 %v2717, %v2717
    %v2720 = vpack.c.bf16 %v2718, %v2718
    %v2721 = vld [vmem:[%s15] sm:$0xf]
    %v2722 = vld [vmem:[%s15 + $0x4] sm:$0xf]
    %v2723 = vld [vmem:[%s15 + $0x8] sm:$0xf]
    %v2724 = vld [vmem:[%s15 + $0xc] sm:$0xf]
    %v2725 = vld [vmem:[%s15 + $0x10] sm:$0xf]
    %v2726 = vld [vmem:[%s15 + $0x14] sm:$0xf]
    %v2727 = vld [vmem:[%s15 + $0x18] sm:$0xf]
    %v2728 = vld [vmem:[%s15 + $0x1c] sm:$0xf]
    %v2729 = vld [vmem:[%s15 + $0x20] sm:$0xf]
    %v2730 = vld [vmem:[%s15 + $0x24] sm:$0xf]
    %v2731 = vld [vmem:[%s15 + $0x28] sm:$0xf]
    %v2732 = vld [vmem:[%s15 + $0x2c] sm:$0xf]
    %v2733 = vld [vmem:[%s15 + $0x30] sm:$0xf]
    %v2734 = vld [vmem:[%s15 + $0x34] sm:$0xf]
    %v2735 = vld [vmem:[%s15 + $0x38] sm:$0xf]
    %v2736 = vld [vmem:[%s15 + $0x3c] sm:$0xf]
    %v2737 = vld [vmem:[%s15 + $0x40] sm:$0xf]
    %v2738 = vld [vmem:[%s15 + $0x44] sm:$0xf]
    %v2739 = vld [vmem:[%s15 + $0x48] sm:$0xf]
    %v2740 = vld [vmem:[%s15 + $0x4c] sm:$0xf]
    %v2741 = vld [vmem:[%s15 + $0x50] sm:$0xf]
    %v2742 = vld [vmem:[%s15 + $0x54] sm:$0xf]
    %v2743 = vld [vmem:[%s15 + $0x58] sm:$0xf]
    %v2744 = vld [vmem:[%s15 + $0x5c] sm:$0xf]
    %v2745 = vld [vmem:[%s15 + $0x60] sm:$0xf]
    %v2746 = vld [vmem:[%s15 + $0x64] sm:$0xf]
    %v2747 = vld [vmem:[%s15 + $0x68] sm:$0xf]
    %v2748 = vld [vmem:[%s15 + $0x6c] sm:$0xf]
    %v2749 = vld [vmem:[%s15 + $0x70] sm:$0xf]
    %v2750 = vld [vmem:[%s15 + $0x74] sm:$0xf]
    %v2751 = vld [vmem:[%s15 + $0x78] sm:$0xf]
    %v2752 = vld [vmem:[%s15 + $0x7c] sm:$0xf]
    %v2753 = vld [vmem:[#allocation13] sm:$0x1]
    %v2755 = vlaneseq
    %v2756 = vshrl.u32 %v2755, 7
    %v2757 = vsub.s32 0, %v2756
    %v2758 = vrot.slane %v2753, %v2757
    %v2792 = vunpack.c.l.b16 %v2721
    %v2793 = vunpack.c.l.b16 %v2722
    %v2794 = vunpack.c.l.b16 %v2723
    %v2795 = vunpack.c.l.b16 %v2724
    %v2796 = vunpack.c.l.b16 %v2725
    %v2797 = vunpack.c.l.b16 %v2726
    %v2798 = vunpack.c.l.b16 %v2727
    %v2799 = vunpack.c.l.b16 %v2728
    %v2800 = vunpack.c.l.b16 %v2729
    %v2801 = vunpack.c.l.b16 %v2730
    %v2802 = vunpack.c.l.b16 %v2731
    %v2803 = vunpack.c.l.b16 %v2732
    %v2804 = vunpack.c.l.b16 %v2733
    %v2805 = vunpack.c.l.b16 %v2734
    %v2806 = vunpack.c.l.b16 %v2735
    %v2807 = vunpack.c.l.b16 %v2736
    %v2808 = vunpack.c.l.b16 %v2737
    %v2809 = vunpack.c.l.b16 %v2738
    %v2810 = vunpack.c.l.b16 %v2739
    %v2811 = vunpack.c.l.b16 %v2740
    %v2812 = vunpack.c.l.b16 %v2741
    %v2813 = vunpack.c.l.b16 %v2742
    %v2814 = vunpack.c.l.b16 %v2743
    %v2815 = vunpack.c.l.b16 %v2744
    %v2816 = vunpack.c.l.b16 %v2745
    %v2817 = vunpack.c.l.b16 %v2746
    %v2818 = vunpack.c.l.b16 %v2747
    %v2819 = vunpack.c.l.b16 %v2748
    %v2820 = vunpack.c.l.b16 %v2749
    %v2821 = vunpack.c.l.b16 %v2750
    %v2822 = vunpack.c.l.b16 %v2751
    %v2823 = vunpack.c.l.b16 %v2752
    %v2824 = vpack.c.b16 %v2793, %v2792
    %v2825 = vpack.c.b16 %v2795, %v2794
    %v2826 = vpack.c.b16 %v2797, %v2796
    %v2827 = vpack.c.b16 %v2799, %v2798
    %v2828 = vpack.c.b16 %v2801, %v2800
    %v2829 = vpack.c.b16 %v2803, %v2802
    %v2830 = vpack.c.b16 %v2805, %v2804
    %v2831 = vpack.c.b16 %v2807, %v2806
    %v2832 = vpack.c.b16 %v2809, %v2808
    %v2833 = vpack.c.b16 %v2811, %v2810
    %v2834 = vpack.c.b16 %v2813, %v2812
    %v2835 = vpack.c.b16 %v2815, %v2814
    %v2836 = vpack.c.b16 %v2817, %v2816
    %v2837 = vpack.c.b16 %v2819, %v2818
    %v2838 = vpack.c.b16 %v2821, %v2820
    %v2839 = vpack.c.b16 %v2823, %v2822
    %2856 = vmatprep.subr.bf16.mxu0 0
    %2857 = vmatpush1.bf16.msra.mxu0 %v2831
    %2858 = vmatprep.subr.bf16.mxu0 0
    %2859 = vmatpush1.bf16.msra.mxu0 %v2830
    %2860 = vmatprep.subr.bf16.mxu0 0
    %2861 = vmatpush1.bf16.msra.mxu0 %v2829
    %2862 = vmatprep.subr.bf16.mxu0 0
    %2863 = vmatpush1.bf16.msra.mxu0 %v2828
    %2864 = vmatprep.subr.bf16.mxu0 0
    %2865 = vmatpush1.bf16.msra.mxu0 %v2827
    %2866 = vmatprep.subr.bf16.mxu0 0
    %2867 = vmatpush1.bf16.msra.mxu0 %v2826
    %2868 = vmatprep.subr.bf16.mxu0 0
    %2869 = vmatpush1.bf16.msra.mxu0 %v2825
    %2870 = vmatprep.subr.bf16.mxu0 0
    %2871 = vmatpush1.bf16.msra.mxu0 %v2824
    %2872 = vmatprep.subr.bf16.mxu0 0
    %2873 = vmatpush2.bf16.msra.mxu0 %v2839
    %2874 = vmatprep.subr.bf16.mxu0 0
    %2875 = vmatpush2.bf16.msra.mxu0 %v2838
    %2876 = vmatprep.subr.bf16.mxu0 0
    %2877 = vmatpush2.bf16.msra.mxu0 %v2837
    %2878 = vmatprep.subr.bf16.mxu0 0
    %2879 = vmatpush2.bf16.msra.mxu0 %v2836
    %2880 = vmatprep.subr.bf16.mxu0 0
    %2881 = vmatpush2.bf16.msra.mxu0 %v2835
    %2882 = vmatprep.subr.bf16.mxu0 0
    %2883 = vmatpush2.bf16.msra.mxu0 %v2834
    %2884 = vmatprep.subr.bf16.mxu0 0
    %2885 = vmatpush2.bf16.msra.mxu0 %v2833
    %2886 = vmatprep.subr.bf16.mxu0 0
    %2887 = vmatpush2.bf16.msra.mxu0 %v2832
    %2888 = vmatprep.mubr.bf16.mxu0 %v2720
    %2889 = vmatmul.mubr.bf16.gmra.mxu0 %v2719
    %v2890 = vpop.f32.mrf.mxu0
    %v2891 = vadd.f32 %v2758, %v2890
    %v2892 = vpop.f32.mrf.mxu0
    %v2893 = vpop.f32.mrf.mxu0
    %v2894 = vpop.f32.mrf.mxu0
    %2895 = vdwg.mxu0
    %v2896 = vmax.f32 %v2891, 0.0
    %v2897 = vld [vmem:[%s17] sm:$0xff]
    %v2898 = vld [vmem:[%s17 + $0x8] sm:$0xff]
    %v2899 = vld [vmem:[%s17 + $0x10] sm:$0xff]
    %v2900 = vld [vmem:[%s17 + $0x18] sm:$0xff]
    %v2901 = vld [vmem:[%s17 + $0x20] sm:$0xff]
    %v2902 = vld [vmem:[%s17 + $0x28] sm:$0xff]
    %v2903 = vld [vmem:[%s17 + $0x30] sm:$0xff]
    %v2904 = vld [vmem:[%s17 + $0x38] sm:$0xff]
    %v2905 = vld [vmem:[%s17 + $0x40] sm:$0xff]
    %v2906 = vld [vmem:[%s17 + $0x48] sm:$0xff]
    %v2907 = vld [vmem:[%s17 + $0x50] sm:$0xff]
    %v2908 = vld [vmem:[%s17 + $0x58] sm:$0xff]
    %v2909 = vld [vmem:[%s17 + $0x60] sm:$0xff]
    %v2910 = vld [vmem:[%s17 + $0x68] sm:$0xff]
    %v2911 = vld [vmem:[%s17 + $0x70] sm:$0xff]
    %v2912 = vld [vmem:[%s17 + $0x78] sm:$0xff]
    %v2913 = vld [vmem:[%s18] sm:$0x1]
    %v2915 = vlaneseq
    %v2916 = vshrl.u32 %v2915, 7
    %v2917 = vsub.s32 0, %v2916
    %v2918 = vrot.slane %v2913, %v2917
    %2920 = vmatprep.subr.mxu0 0.0
    %2921 = vmatpush1.msra.mxu0 %v2912
    %2922 = vmatprep.subr.mxu0 0.0
    %2923 = vmatpush1.msra.mxu0 %v2911
    %2924 = vmatprep.subr.mxu0 0.0
    %2925 = vmatpush1.msra.mxu0 %v2910
    %2926 = vmatprep.subr.mxu0 0.0
    %2927 = vmatpush1.msra.mxu0 %v2909
    %2928 = vmatprep.subr.mxu0 0.0
    %2929 = vmatpush1.msra.mxu0 %v2908
    %2930 = vmatprep.subr.mxu0 0.0
    %2931 = vmatpush1.msra.mxu0 %v2907
    %2932 = vmatprep.subr.mxu0 0.0
    %2933 = vmatpush1.msra.mxu0 %v2906
    %2934 = vmatprep.subr.mxu0 0.0
    %2935 = vmatpush1.msra.mxu0 %v2905
    %2936 = vmatprep.subr.mxu0 0.0
    %2937 = vmatpush1.msra.mxu0 %v2904
    %2938 = vmatprep.subr.mxu0 0.0
    %2939 = vmatpush1.msra.mxu0 %v2903
    %2940 = vmatprep.subr.mxu0 0.0
    %2941 = vmatpush1.msra.mxu0 %v2902
    %2942 = vmatprep.subr.mxu0 0.0
    %2943 = vmatpush1.msra.mxu0 %v2901
    %2944 = vmatprep.subr.mxu0 0.0
    %2945 = vmatpush1.msra.mxu0 %v2900
    %2946 = vmatprep.subr.mxu0 0.0
    %2947 = vmatpush1.msra.mxu0 %v2899
    %2948 = vmatprep.subr.mxu0 0.0
    %2949 = vmatpush1.msra.mxu0 %v2898
    %2950 = vmatprep.subr.mxu0 0.0
    %2951 = vmatpush1.msra.mxu0 %v2897
    %2952 = vmatprep.subr.mxu0 0.0
    %2953 = vmatpush2.msra.mxu0 0.0
    %2954 = vmatprep.subr.mxu0 0.0
    %2955 = vmatpush2.msra.mxu0 0.0
    %2956 = vmatprep.subr.mxu0 0.0
    %2957 = vmatpush2.msra.mxu0 0.0
    %2958 = vmatprep.subr.mxu0 0.0
    %2959 = vmatpush2.msra.mxu0 0.0
    %2960 = vmatprep.subr.mxu0 0.0
    %2961 = vmatpush2.msra.mxu0 0.0
    %2962 = vmatprep.subr.mxu0 0.0
    %2963 = vmatpush2.msra.mxu0 0.0
    %2964 = vmatprep.subr.mxu0 0.0
    %2965 = vmatpush2.msra.mxu0 0.0
    %2966 = vmatprep.subr.mxu0 0.0
    %2967 = vmatpush2.msra.mxu0 0.0
    %2968 = vmatprep.subr.mxu0 0.0
    %2969 = vmatpush2.msra.mxu0 0.0
    %2970 = vmatprep.subr.mxu0 0.0
    %2971 = vmatpush2.msra.mxu0 0.0
    %2972 = vmatprep.subr.mxu0 0.0
    %2973 = vmatpush2.msra.mxu0 0.0
    %2974 = vmatprep.subr.mxu0 0.0
    %2975 = vmatpush2.msra.mxu0 0.0
    %2976 = vmatprep.subr.mxu0 0.0
    %2977 = vmatpush2.msra.mxu0 0.0
    %2978 = vmatprep.subr.mxu0 0.0
    %2979 = vmatpush2.msra.mxu0 0.0
    %2980 = vmatprep.subr.mxu0 0.0
    %2981 = vmatpush2.msra.mxu0 0.0
    %2982 = vmatprep.subr.mxu0 0.0
    %2983 = vmatpush2.msra.mxu0 0.0
    %2984 = vmatprep.mubr.f32.mxu0 0.0
    %2985 = vmatmul.mubr.f32.gmra.mxu0 %v2896
    %v2986 = vpop.f32.mrf.mxu0
    %v2987 = vadd.f32 %v2918, %v2986
    %v2988 = vpop.f32.mrf.mxu0
    %2989 = vdwg.mxu0
    %vm2990 = vcmask 23552
    %v2991 = vsel %vm2990, %v2987, -inf
    %2992 = vmax.xlane.f32.xlu0 %v2991
    %v2993 = vpop.xlane.xlu0 %2992
    %v2994 = vsub.f32 %v2987, %v2993
    %v2995 = vmul.f32 %v2994, 1.442695
    %v2996 = vpow.pop %v2995
    %v2997 = vsel %vm2990, %v2996, 0.0
    %2998 = vadd.xlane.f32.xlu0 %v2997
    %v2999 = vpop.xlane.xlu0 %2998
    %v3000 = vrcp.pop %v2999
    %v3001 = vmul.f32 %v2996, %v3000
    %3002 = vst.msk [vmem:[%s19] sm:$0xff] %vm2990, %v3001
    // Predicated region
    $region110: #{tpu_custom_call.1} parent=1 // pred_check
      _
    $region111: #{tpu_custom_call.1} parent=1 // pred_check_branch
      %3004 = sbr.rel (0) target = $region113
    $region112: #{tpu_custom_call.1} parent=1 // pred_region
      _
    $region113: #{tpu_custom_call.1} parent=1 // pred_fallthru
      _
    // Predicated region
    $region114: #{tpu_custom_call.1} parent=1 // pred_check
      _
    $region115: #{tpu_custom_call.1} parent=1 // pred_check_branch
      %3006 = sbr.rel (0) target = $region117
    $region116: #{tpu_custom_call.1} parent=1 // pred_region
      _
    $region117: #{tpu_custom_call.1} parent=1 // pred_fallthru
      _
    %3007 = vsyncpa [#allocation3], 1
    %3008 = vsyncpa [#allocation5], 1
    %3009 = vsyncpa [#allocation8], 1
    %3010 = vsyncpa [#allocation11], 1
    %3011 = vsyncpa [#allocation14], 1

</llo_original>
